<compile_context>
chip_gen: v5e
topology: v5e:2x2
jax: 0.10.0
libtpu: 0.0.40
codegen_flags: <defaults>
</compile_context>

<pallas_src>
import functools

import jax
import jax.numpy as jnp
import numpy as np
from jax import lax
from jax.experimental import pallas as pl
from jax.experimental.pallas import tpu as pltpu

_LANE = 128
_SUBLANE = 8


def _round_up(x, m):
    return (x + m - 1) // m * m


def _pad_gate_rows(w, H, Hp):
    """PyTorch LSTM weight (4H, D) -> (4*Hp, D), zero-padding each gate block to Hp rows."""
    if Hp == H:
        return w
    D = w.shape[1]
    w4 = w.reshape(4, H, D)
    w4 = jnp.pad(w4, ((0, 0), (0, Hp - H), (0, 0)))
    return w4.reshape(4 * Hp, D)


def _pad_gate_vec(b, H, Hp):
    """(4H,) bias -> (4*Hp,), zero-padding each gate block."""
    if Hp == H:
        return b
    b4 = b.reshape(4, H)
    b4 = jnp.pad(b4, ((0, 0), (0, Hp - H)))
    return b4.reshape(4 * Hp)


def _vmem_budget():
    """Generation-aware VMEM limit + tile budget (v5e/v6e: 128 MiB, v7x: 64 MiB per TC)."""
    try:
        cap = int(pltpu.get_tpu_info().vmem_capacity_bytes)
    except Exception:
        cap = 64 * 1024 * 1024                      # conservative fallback (v7x-sized)
    vmem_limit = max(32 * 1024 * 1024, min(int(cap * 0.9), 112 * 1024 * 1024))
    budget = int(vmem_limit * 0.75)                 # headroom for compiler internals / temps
    return vmem_limit, budget


def _batch_tile(Bp, upper):
    """Largest multiple of 8 that is <= upper and divides Bp."""
    tb = max(_SUBLANE, min(Bp, max(upper, _SUBLANE)) // _SUBLANE * _SUBLANE)
    while Bp % tb:
        tb -= _SUBLANE
    return tb


def _pick_tt(T, tt_cap):
    """Timesteps per grid step: prefer a divisor of T; otherwise pad T up to tt_cap blocks."""
    tt_cap = max(1, min(T, tt_cap))
    best = 1
    for tt in range(tt_cap, 0, -1):
        if T % tt == 0:
            best = tt
            break
    if best * 2 > tt_cap:           # good divisor (>= half the cap): no time padding needed
        return best, T
    return tt_cap, _round_up(T, tt_cap)


def _choose_tiles(T, Bp, Dp, Hp, x_sz, out_sz, w_sz, budget):
    """VMEM-aware (tb, tt, Tp) selection for the fused recurrent kernel."""
    G4 = 4 * Hp

    def fixed_bytes(tb):
        return ((Dp + Hp) * G4 * w_sz            # single-buffered weight scratch
                + 2 * G4 * 4                      # bias block (double-buffered, tiny)
                + 4 * 2 * tb * Hp * 4             # h0 / c0 / h_n / c_n blocks
                + 2 * tb * Hp * 4                 # h / c state scratch
                + 4 * tb * G4)                    # headroom for in-kernel gate temporaries

    def stream_bytes(tb, tt):
        return 2 * tt * tb * (Dp * x_sz + Hp * out_sz)   # double-buffered x + out blocks

    tb = _batch_tile(Bp, 256)
    # v7x megacore: prefer >= 2 batch tiles on the "parallel" axis when batch allows it.
    if Bp >= 16 and Bp // tb < 2:
        tb = _batch_tile(Bp, tb // 2)
    # Shrink the batch tile until the fixed + minimal streaming footprint fits the budget.
    while tb > _SUBLANE and fixed_bytes(tb) + stream_bytes(tb, 1) > budget:
        nxt = _batch_tile(Bp, tb // 2)
        if nxt == tb:
            break
        tb = nxt

    tt_cap = 8                                    # bound live ranges of the unrolled loop
    avail = budget - fixed_bytes(tb)
    per_t = stream_bytes(tb, 1)
    tt_max = int(max(1, min(tt_cap, avail // max(per_t, 1))))
    tt, Tp = _pick_tt(T, tt_max)
    return tb, tt, Tp


# ---------------------------------------------------------------------------
# Fused recurrent kernel: x-projection + recurrence for TT timesteps per grid step.
# ---------------------------------------------------------------------------
def _lstm_fused_kernel(x_ref, b_ref, h0_ref, c0_ref, wih_hbm, whh_hbm,
                       out_ref, hn_ref, cn_ref,
                       wih_scr, whh_scr, h_scr, c_scr, w_sem,
                       *, tt, hidden, t_valid, n_sub):
    tblk = pl.program_id(1)

    @pl.when(tblk == 0)
    def _():
        # New batch tile: bring the (single-buffered) weights into VMEM and load the state.
        cp_ih = pltpu.make_async_copy(wih_hbm, wih_scr, w_sem.at[0])
        cp_hh = pltpu.make_async_copy(whh_hbm, whh_scr, w_sem.at[1])
        cp_ih.start()
        cp_hh.start()
        h_scr[...] = h0_ref[...]
        c_scr[...] = c0_ref[...]
        cp_ih.wait()
        cp_hh.wait()

    w_ih = wih_scr[...]                 # (Dp, 4*Hp), compute dtype
    w_hh = whh_scr[...]                 # (Hp, 4*Hp), compute dtype
    bias = b_ref[...]                   # (1, 4*Hp), f32 (bias added in f32 in-kernel)
    H = hidden
    tb = h_scr.shape[0]
    sb = tb // n_sub

    # Two independent batch sub-tiles (when tb allows it) so the h@W_hh matmul of one half
    # can overlap the EUP/VPU cell update of the other half on the serial critical path.
    hs = [h_scr[j * sb:(j + 1) * sb, :] for j in range(n_sub)]
    cs = [c_scr[j * sb:(j + 1) * sb, :] for j in range(n_sub)]

    for s in range(tt):
        if t_valid is not None:
            valid = (tblk * tt + s) < t_valid
        for j in range(n_sub):
            x_t = x_ref[s, j * sb:(j + 1) * sb, :]           # (sb, Dp) compute dtype
            gates = (jnp.dot(x_t, w_ih, preferred_element_type=jnp.float32)
                     + jnp.dot(hs[j].astype(w_hh.dtype), w_hh,
                               preferred_element_type=jnp.float32)
                     + bias)
            # PyTorch gate order: i, f, g, o ; slices are 128-lane aligned (Hp % 128 == 0).
            i_g = jax.nn.sigmoid(gates[:, 0 * H:1 * H])
            f_g = jax.nn.sigmoid(gates[:, 1 * H:2 * H])
            g_g = jnp.tanh(gates[:, 2 * H:3 * H])
            o_g = jax.nn.sigmoid(gates[:, 3 * H:4 * H])
            c_new = f_g * cs[j] + i_g * g_g
            h_new = o_g * jnp.tanh(c_new)
            if t_valid is not None:
                # Padded tail timesteps must not advance the state (h_n / c_n correctness).
                c_new = jnp.where(valid, c_new, cs[j])
                h_new = jnp.where(valid, h_new, hs[j])
            cs[j] = c_new
            hs[j] = h_new
            out_ref[s, j * sb:(j + 1) * sb, :] = h_new.astype(out_ref.dtype)

    for j in range(n_sub):
        h_scr[j * sb:(j + 1) * sb, :] = hs[j]
        c_scr[j * sb:(j + 1) * sb, :] = cs[j]

    @pl.when(tblk == pl.num_programs(1) - 1)
    def _():
        # Resident output blocks: written once, on the last time block of this batch tile.
        hn_ref[...] = h_scr[...]
        cn_ref[...] = c_scr[...]


def lstm_layer_pallas(x, w_ih_t, w_hh_t, bias, h0, c0, *, out_dtype, vmem_limit, budget):
    """One fused LSTM layer over the full sequence.

    x:       (T, Bp, Dp)  compute dtype (bf16 or f32), lane/sublane padded
    w_ih_t:  (Dp, 4*Hp)   compute dtype
    w_hh_t:  (Hp, 4*Hp)   compute dtype
    bias:    (1, 4*Hp)    f32
    h0, c0:  (Bp, Hp)     f32
    returns: out (T, Bp, Hp) out_dtype, h_n (Bp, Hp) f32, c_n (Bp, Hp) f32
    """
    T, Bp, Dp = x.shape
    Hp = h0.shape[-1]
    G4 = 4 * Hp
    assert Bp % _SUBLANE == 0 and Hp % _LANE == 0 and Dp % _LANE == 0

    x_sz = jnp.dtype(x.dtype).itemsize
    o_sz = jnp.dtype(out_dtype).itemsize
    w_sz = jnp.dtype(w_ih_t.dtype).itemsize
    tb, tt, Tp = _choose_tiles(T, Bp, Dp, Hp, x_sz, o_sz, w_sz, budget)

    if Tp != T:
        x = jnp.pad(x, ((0, Tp - T), (0, 0), (0, 0)))
    t_valid = T if Tp != T else None
    n_btile = Bp // tb
    n_tblk = Tp // tt
    n_sub = 2 if (tb >= 16 and tb % 16 == 0) else 1

    kernel = functools.partial(_lstm_fused_kernel, tt=tt, hidden=Hp,
                               t_valid=t_valid, n_sub=n_sub)

    grid_spec = pltpu.PrefetchScalarGridSpec(
        num_scalar_prefetch=0,
        grid=(n_btile, n_tblk),
        in_specs=[
            pl.BlockSpec((tt, tb, Dp), lambda b, t: (t, b, 0)),   # x (streamed in T)
            pl.BlockSpec((1, G4), lambda b, t: (0, 0)),           # bias (f32, tiny)
            pl.BlockSpec((tb, Hp), lambda b, t: (b, 0)),          # h0
            pl.BlockSpec((tb, Hp), lambda b, t: (b, 0)),          # c0
            pl.BlockSpec(memory_space=pl.ANY),                    # W_ih (manual single-buffer)
            pl.BlockSpec(memory_space=pl.ANY),                    # W_hh (manual single-buffer)
        ],
        out_specs=[
            pl.BlockSpec((tt, tb, Hp), lambda b, t: (t, b, 0)),   # out (streamed in T)
            pl.BlockSpec((tb, Hp), lambda b, t: (b, 0)),          # h_n (resident)
            pl.BlockSpec((tb, Hp), lambda b, t: (b, 0)),          # c_n (resident)
        ],
        scratch_shapes=[
            pltpu.VMEM((Dp, G4), w_ih_t.dtype),                   # W_ih (single-buffered)
            pltpu.VMEM((Hp, G4), w_hh_t.dtype),                   # W_hh (single-buffered)
            pltpu.VMEM((tb, Hp), jnp.float32),                    # h state
            pltpu.VMEM((tb, Hp), jnp.float32),                    # c state
            pltpu.SemaphoreType.DMA((2,)),                        # weight-copy semaphores
        ],
    )

    out_shapes = (
        jax.ShapeDtypeStruct((Tp, Bp, Hp), out_dtype),
        jax.ShapeDtypeStruct((Bp, Hp), jnp.float32),
        jax.ShapeDtypeStruct((Bp, Hp), jnp.float32),
    )

    out, h_n, c_n = pl.pallas_call(
        kernel,
        out_shape=out_shapes,
        grid_spec=grid_spec,
        compiler_params=pltpu.CompilerParams(
            # batch tiles are independent (feeds v7x's 2nd TC); time is a true recurrence.
            dimension_semantics=("parallel", "arbitrary"),
            vmem_limit_bytes=int(vmem_limit),
        ),
    )(x, bias, h0, c0, w_ih_t, w_hh_t)

    if Tp != T:
        out = out[:T]
    return out, h_n, c_n


# ---------------------------------------------------------------------------
# One-time parameter preprocessing (hoisted out of the per-call forward).
# ---------------------------------------------------------------------------
def prepare_params(params, *, compute_dtype=jnp.bfloat16):
    """params[layer] = (w_ih (4H,D), w_hh (4H,H), b_ih (4H,), b_hh (4H,))  [PyTorch layout]."""
    prepared = []
    for w_ih, w_hh, b_ih, b_hh in params:
        H = w_hh.shape[1]
        Hp = _round_up(H, _LANE)
        d_in = w_ih.shape[1]
        Dp = _round_up(d_in, _LANE)

        # Gate-block-aware zero padding keeps padded hidden units exactly 0 and makes the
        # in-kernel gate slices / output stores 128-lane aligned.
        w_ih_p = _pad_gate_rows(w_ih, H, Hp)                       # (4Hp, d_in)
        if Dp != d_in:
            w_ih_p = jnp.pad(w_ih_p, ((0, 0), (0, Dp - d_in)))     # (4Hp, Dp)
        w_hh_p = _pad_gate_rows(w_hh, H, Hp)                       # (4Hp, H)
        if Hp != H:
            w_hh_p = jnp.pad(w_hh_p, ((0, 0), (0, Hp - H)))        # (4Hp, Hp)
        b_p = _pad_gate_vec(b_ih + b_hh, H, Hp).reshape(1, 4 * Hp).astype(jnp.float32)

        prepared.append((w_ih_p.T.astype(compute_dtype),           # (Dp, 4Hp)
                         w_hh_p.T.astype(compute_dtype),           # (Hp, 4Hp)
                         b_p))
    return prepared


# ---------------------------------------------------------------------------
# Full Base.forward equivalent.
# ---------------------------------------------------------------------------
def base_forward(emb, hidden, params, *, compute_dtype=jnp.bfloat16, prepared=None):
    """Base.forward(emb, hidden) for rnn_type='LSTM'.

    self.rnn.flatten_parameters() is a CUDA memory-layout hint (no-op on TPU) and self.drop
    is never applied in forward (and nn.LSTM is built with dropout=0) -> no dropout here.
    """
    h0_all, c0_all = hidden
    nlayers, B, H = h0_all.shape
    T = emb.shape[0]

    Hp = _round_up(H, _LANE)
    Bp = _round_up(B, _SUBLANE)

    if prepared is None:
        prepared = prepare_params(params, compute_dtype=compute_dtype)
    vmem_limit, budget = _vmem_budget()

    Dp0 = prepared[0][0].shape[0]
    x = jnp.pad(emb, ((0, 0), (0, Bp - B), (0, Dp0 - emb.shape[-1]))).astype(compute_dtype)

    h_n, c_n = [], []
    for layer in range(nlayers):
        w_ih_t, w_hh_t, bias = prepared[layer]
        h0 = jnp.pad(h0_all[layer], ((0, Bp - B), (0, Hp - H))).astype(jnp.float32)
        c0 = jnp.pad(c0_all[layer], ((0, Bp - B), (0, Hp - H))).astype(jnp.float32)

        # Intermediate layers stream their output in compute_dtype (halves HBM traffic in the
        # bf16 path); the final layer output stays f32.
        out_dtype = jnp.float32 if layer == nlayers - 1 else compute_dtype

        x, h_l, c_l = lstm_layer_pallas(x, w_ih_t, w_hh_t, bias, h0, c0,
                                        out_dtype=out_dtype,
                                        vmem_limit=vmem_limit, budget=budget)
        h_n.append(h_l[:B, :H])
        c_n.append(c_l[:B, :H])

    output = x[:, :B, :H]
    return output, (jnp.stack(h_n, 0), jnp.stack(c_n, 0))


# ---------------------------------------------------------------------------
# Deterministic params + pure-JAX reference for correctness checking.
# ---------------------------------------------------------------------------
def make_params(key, ninp, nhid, nlayers):
    """Mimics PyTorch LSTM init: U(-1/sqrt(H), 1/sqrt(H)), PyTorch weight layout."""
    params = []
    bound = 1.0 / np.sqrt(nhid)
    for layer in range(nlayers):
        d_in = ninp if layer == 0 else nhid
        key, k1, k2, k3, k4 = jax.random.split(key, 5)
        w_ih = jax.random.uniform(k1, (4 * nhid, d_in), jnp.float32, -bound, bound)
        w_hh = jax.random.uniform(k2, (4 * nhid, nhid), jnp.float32, -bound, bound)
        b_ih = jax.random.uniform(k3, (4 * nhid,), jnp.float32, -bound, bound)
        b_hh = jax.random.uniform(k4, (4 * nhid,), jnp.float32, -bound, bound)
        params.append((w_ih, w_hh, b_ih, b_hh))
    return params


def lstm_reference(emb, hidden, params):
    """Pure-JAX (lax.scan) reference."""
    h0, c0 = hidden
    x = emb
    h_out, c_out = [], []
    for layer in range(h0.shape[0]):
        w_ih, w_hh, b_ih, b_hh = params[layer]
        w_ih_t, w_hh_t, b = w_ih.T, w_hh.T, b_ih + b_hh

        def step(carry, x_t, w_ih_t=w_ih_t, w_hh_t=w_hh_t, b=b):
            h, c = carry
            gates = (jnp.dot(x_t, w_ih_t, precision=jax.lax.Precision.HIGHEST)
                     + jnp.dot(h, w_hh_t, precision=jax.lax.Precision.HIGHEST) + b)
            H = h.shape[-1]
            i = jax.nn.sigmoid(gates[:, 0 * H:1 * H])
            f = jax.nn.sigmoid(gates[:, 1 * H:2 * H])
            g = jnp.tanh(gates[:, 2 * H:3 * H])
            o = jax.nn.sigmoid(gates[:, 3 * H:4 * H])
            c_new = f * c + i * g
            h_new = o * jnp.tanh(c_new)
            return (h_new, c_new), h_new

        (h_f, c_f), x = lax.scan(step, (h0[layer], c0[layer]), x)
        h_out.append(h_f)
        c_out.append(c_f)
    return x, (jnp.stack(h_out, 0), jnp.stack(c_out, 0))


if __name__ == "__main__":
    # Small shapes consistent with the module: emb (T, B, ninp), hidden (nlayers, B, nhid).
    # T=11 / B=10 deliberately exercise the time-padding (mask) and batch-padding paths.
    T, B, ninp, nhid, nlayers = 11, 10, 20, 32, 2

    key = jax.random.PRNGKey(0)
    k_emb, k_h, k_c, k_p = jax.random.split(key, 4)
    emb = jax.random.normal(k_emb, (T, B, ninp), jnp.float32)
    h0 = jax.random.normal(k_h, (nlayers, B, nhid), jnp.float32)
    c0 = jax.random.normal(k_c, (nlayers, B, nhid), jnp.float32)
    params = make_params(k_p, ninp, nhid, nlayers)

    ref_out, (ref_h, ref_c) = lstm_reference(emb, (h0, c0), params)

    # f32 compute path: must closely match the pure-JAX reference.
    prep32 = prepare_params(params, compute_dtype=jnp.float32)
    out32, (h32, c32) = base_forward(emb, (h0, c0), params,
                                     compute_dtype=jnp.float32, prepared=prep32)
    out32 = jax.block_until_ready(out32)
    h32 = jax.block_until_ready(h32)
    c32 = jax.block_until_ready(c32)
    np.testing.assert_allclose(np.asarray(out32), np.asarray(ref_out), atol=5e-3, rtol=5e-3)
    np.testing.assert_allclose(np.asarray(h32), np.asarray(ref_h), atol=5e-3, rtol=5e-3)
    np.testing.assert_allclose(np.asarray(c32), np.asarray(ref_c), atol=5e-3, rtol=5e-3)

    # bf16 fast path (MXU-native on v6e/v7x): loose tolerance (h recast to bf16 each step).
    prep16 = prepare_params(params, compute_dtype=jnp.bfloat16)
    out16, (h16, c16) = base_forward(emb, (h0, c0), params,
                                     compute_dtype=jnp.bfloat16, prepared=prep16)
    out16 = jax.block_until_ready(out16)
    h16 = jax.block_until_ready(h16)
    c16 = jax.block_until_ready(c16)
    np.testing.assert_allclose(np.asarray(out16), np.asarray(ref_out), atol=1e-1, rtol=1e-1)
    np.testing.assert_allclose(np.asarray(h16), np.asarray(ref_h), atol=1e-1, rtol=1e-1)
    np.testing.assert_allclose(np.asarray(c16), np.asarray(ref_c), atol=1e-1, rtol=1e-1)

    print("KERNEL_OK")
</pallas_src>

<mosaic_0001>
module attributes {stable_mosaic.version = 11 : i64} {
  func.func @_lstm_fused_kernel(%arg0: i32, %arg1: i32, %arg2: memref<8x8x128xf32, #tpu.memory_space<vmem>>, %arg3: memref<1x512xf32, #tpu.memory_space<vmem>>, %arg4: memref<8x128xf32, #tpu.memory_space<vmem>>, %arg5: memref<8x128xf32, #tpu.memory_space<vmem>>, %arg6: memref<128x512xf32, #tpu.memory_space<any>>, %arg7: memref<128x512xf32, #tpu.memory_space<any>>, %arg8: memref<8x8x128xf32, #tpu.memory_space<vmem>>, %arg9: memref<8x128xf32, #tpu.memory_space<vmem>>, %arg10: memref<8x128xf32, #tpu.memory_space<vmem>>, %arg11: memref<128x512xf32, #tpu.memory_space<vmem>>, %arg12: memref<128x512xf32, #tpu.memory_space<vmem>>, %arg13: memref<8x128xf32, #tpu.memory_space<vmem>>, %arg14: memref<8x128xf32, #tpu.memory_space<vmem>>, %arg15: memref<2x!tpu.dma_semaphore, #tpu.memory_space<semaphore_mem>>) attributes {dimension_semantics = [#tpu.dimension_semantics<parallel>, #tpu.dimension_semantics<arbitrary>], iteration_bounds = array<i64: 2, 2>, scalar_prefetch = 0 : i64, scratch_operands = 5 : i64, tpu.core_type = #tpu.core_type<tc>, window_params = [{transform_indices = @transform_0, window_bounds = array<i64: 8, 8, 128>}, {pipeline_mode = #tpu.pipeline_mode<synchronous>, transform_indices = @transform_1, window_bounds = array<i64: 1, 512>}, {transform_indices = @transform_2, window_bounds = array<i64: 8, 128>}, {transform_indices = @transform_3, window_bounds = array<i64: 8, 128>}, {}, {}, {transform_indices = @transform_6, window_bounds = array<i64: 8, 8, 128>}, {transform_indices = @transform_7, window_bounds = array<i64: 8, 128>}, {transform_indices = @transform_8, window_bounds = array<i64: 8, 128>}]} {
    %c0_i32 = arith.constant 0 : i32
    %0 = arith.cmpi eq, %arg1, %c0_i32 : i32
    %1 = arith.extui %0 : i1 to i32
    %c0_i32_0 = arith.constant 0 : i32
    %2 = arith.cmpi ne, %1, %c0_i32_0 : i32
    scf.if %2 {
      %c0_i32_111 = arith.constant 0 : i32
      %333 = tpu.memref_slice %arg15[%c0_i32_111] : memref<2x!tpu.dma_semaphore, #tpu.memory_space<semaphore_mem>> -> memref<1x!tpu.dma_semaphore, #tpu.memory_space<semaphore_mem>>
      %334 = tpu.memref_squeeze %333 : memref<1x!tpu.dma_semaphore, #tpu.memory_space<semaphore_mem>> -> memref<!tpu.dma_semaphore, #tpu.memory_space<semaphore_mem>>
      tpu.enqueue_dma source(%arg6 : memref<128x512xf32, #tpu.memory_space<any>>) target(%arg11 : memref<128x512xf32, #tpu.memory_space<vmem>>) target_semaphore(%334 : memref<!tpu.dma_semaphore, #tpu.memory_space<semaphore_mem>>)
      %c1_i32_112 = arith.constant 1 : i32
      %335 = tpu.memref_slice %arg15[%c1_i32_112] : memref<2x!tpu.dma_semaphore, #tpu.memory_space<semaphore_mem>> -> memref<1x!tpu.dma_semaphore, #tpu.memory_space<semaphore_mem>>
      %336 = tpu.memref_squeeze %335 : memref<1x!tpu.dma_semaphore, #tpu.memory_space<semaphore_mem>> -> memref<!tpu.dma_semaphore, #tpu.memory_space<semaphore_mem>>
      tpu.enqueue_dma source(%arg7 : memref<128x512xf32, #tpu.memory_space<any>>) target(%arg12 : memref<128x512xf32, #tpu.memory_space<vmem>>) target_semaphore(%336 : memref<!tpu.dma_semaphore, #tpu.memory_space<semaphore_mem>>)
      %c0_113 = arith.constant 0 : index
      %c0_114 = arith.constant 0 : index
      %337 = vector.load %arg4[%c0_113, %c0_114] : memref<8x128xf32, #tpu.memory_space<vmem>>, vector<8x128xf32>
      %c0_115 = arith.constant 0 : index
      %c0_116 = arith.constant 0 : index
      %338 = vector.load %arg13[%c0_115, %c0_116] : memref<8x128xf32, #tpu.memory_space<vmem>>, vector<8x128xf32>
      tpu.vector_store %arg13[%c0_115, %c0_116], %337 {strides = array<i32>} : memref<8x128xf32, #tpu.memory_space<vmem>>, vector<8x128xf32>,
      %c0_117 = arith.constant 0 : index
      %c0_118 = arith.constant 0 : index
      %339 = vector.load %arg5[%c0_117, %c0_118] : memref<8x128xf32, #tpu.memory_space<vmem>>, vector<8x128xf32>
      %c0_119 = arith.constant 0 : index
      %c0_120 = arith.constant 0 : index
      %340 = vector.load %arg14[%c0_119, %c0_120] : memref<8x128xf32, #tpu.memory_space<vmem>>, vector<8x128xf32>
      tpu.vector_store %arg14[%c0_119, %c0_120], %339 {strides = array<i32>} : memref<8x128xf32, #tpu.memory_space<vmem>>, vector<8x128xf32>,
      %c0_i32_121 = arith.constant 0 : i32
      %341 = tpu.memref_slice %arg15[%c0_i32_121] : memref<2x!tpu.dma_semaphore, #tpu.memory_space<semaphore_mem>> -> memref<1x!tpu.dma_semaphore, #tpu.memory_space<semaphore_mem>>
      %342 = tpu.memref_squeeze %341 : memref<1x!tpu.dma_semaphore, #tpu.memory_space<semaphore_mem>> -> memref<!tpu.dma_semaphore, #tpu.memory_space<semaphore_mem>>
      tpu.wait_dma2 semaphore(%342 : memref<!tpu.dma_semaphore, #tpu.memory_space<semaphore_mem>>) src(%arg6 : memref<128x512xf32, #tpu.memory_space<any>>) dst(%arg11 : memref<128x512xf32, #tpu.memory_space<vmem>>)
      %c1_i32_122 = arith.constant 1 : i32
      %343 = tpu.memref_slice %arg15[%c1_i32_122] : memref<2x!tpu.dma_semaphore, #tpu.memory_space<semaphore_mem>> -> memref<1x!tpu.dma_semaphore, #tpu.memory_space<semaphore_mem>>
      %344 = tpu.memref_squeeze %343 : memref<1x!tpu.dma_semaphore, #tpu.memory_space<semaphore_mem>> -> memref<!tpu.dma_semaphore, #tpu.memory_space<semaphore_mem>>
      tpu.wait_dma2 semaphore(%344 : memref<!tpu.dma_semaphore, #tpu.memory_space<semaphore_mem>>) src(%arg7 : memref<128x512xf32, #tpu.memory_space<any>>) dst(%arg12 : memref<128x512xf32, #tpu.memory_space<vmem>>)
    } else {
    }
    %c0 = arith.constant 0 : index
    %c0_1 = arith.constant 0 : index
    %3 = vector.load %arg11[%c0, %c0_1] : memref<128x512xf32, #tpu.memory_space<vmem>>, vector<128x512xf32>
    %c0_2 = arith.constant 0 : index
    %c0_3 = arith.constant 0 : index
    %4 = vector.load %arg12[%c0_2, %c0_3] : memref<128x512xf32, #tpu.memory_space<vmem>>, vector<128x512xf32>
    %c0_4 = arith.constant 0 : index
    %c0_5 = arith.constant 0 : index
    %5 = vector.load %arg3[%c0_4, %c0_5] : memref<1x512xf32, #tpu.memory_space<vmem>>, vector<1x512xf32>
    %c0_6 = arith.constant 0 : index
    %c0_7 = arith.constant 0 : index
    %6 = vector.load %arg13[%c0_6, %c0_7] : memref<8x128xf32, #tpu.memory_space<vmem>>, vector<8x128xf32>
    %c0_8 = arith.constant 0 : index
    %c0_9 = arith.constant 0 : index
    %7 = vector.load %arg14[%c0_8, %c0_9] : memref<8x128xf32, #tpu.memory_space<vmem>>, vector<8x128xf32>
    %c8_i32 = arith.constant 8 : i32
    %8 = arith.muli %arg1, %c8_i32 : i32
    %c0_i32_10 = arith.constant 0 : i32
    %9 = arith.addi %8, %c0_i32_10 : i32
    %c11_i32 = arith.constant 11 : i32
    %10 = arith.cmpi slt, %9, %c11_i32 : i32
    %c0_11 = arith.constant 0 : index
    %c0_12 = arith.constant 0 : index
    %c0_13 = arith.constant 0 : index
    %11 = vector.load %arg2[%c0_11, %c0_12, %c0_13] : memref<8x8x128xf32, #tpu.memory_space<vmem>>, vector<1x8x128xf32>
    %12 = vector.shape_cast %11 : vector<1x8x128xf32> to vector<8x128xf32>
    %cst = arith.constant dense<0.000000e+00> : vector<8x512xf32>
    %13 = tpu.matmul %12, %3, %cst {dimension_numbers = #tpu.dot_dimension_numbers<[1], [0], [0], [1], [0, 0, 1, 1], [], []>} : vector<8x128xf32>, vector<128x512xf32>, vector<8x512xf32> -> vector<8x512xf32>
    %cst_14 = arith.constant dense<0.000000e+00> : vector<8x512xf32>
    %14 = tpu.matmul %6, %4, %cst_14 {dimension_numbers = #tpu.dot_dimension_numbers<[1], [0], [0], [1], [0, 0, 1, 1], [], []>} : vector<8x128xf32>, vector<128x512xf32>, vector<8x512xf32> -> vector<8x512xf32>
    %15 = arith.addf %13, %14 : vector<8x512xf32>
    %16 = vector.broadcast %5 : vector<1x512xf32> to vector<8x512xf32>
    %17 = arith.addf %15, %16 : vector<8x512xf32>
    %18 = vector.extract_strided_slice %17 {offsets = [0, 0], sizes = [8, 128], strides = [1, 1]} : vector<8x512xf32> to vector<8x128xf32>
    %19 = arith.negf %18 : vector<8x128xf32>
    %20 = math.exp %19 : vector<8x128xf32>
    %cst_15 = arith.constant 1.000000e+00 : f32
    %21 = vector.broadcast %cst_15 : f32 to vector<8x128xf32>
    %22 = arith.addf %21, %20 : vector<8x128xf32>
    %23 = arith.divf %21, %22 : vector<8x128xf32>
    %24 = vector.extract_strided_slice %17 {offsets = [0, 128], sizes = [8, 128], strides = [1, 1]} : vector<8x512xf32> to vector<8x128xf32>
    %25 = arith.negf %24 : vector<8x128xf32>
    %26 = math.exp %25 : vector<8x128xf32>
    %cst_16 = arith.constant 1.000000e+00 : f32
    %27 = vector.broadcast %cst_16 : f32 to vector<8x128xf32>
    %28 = arith.addf %27, %26 : vector<8x128xf32>
    %29 = arith.divf %27, %28 : vector<8x128xf32>
    %30 = vector.extract_strided_slice %17 {offsets = [0, 256], sizes = [8, 128], strides = [1, 1]} : vector<8x512xf32> to vector<8x128xf32>
    %31 = math.tanh %30 : vector<8x128xf32>
    %32 = vector.extract_strided_slice %17 {offsets = [0, 384], sizes = [8, 128], strides = [1, 1]} : vector<8x512xf32> to vector<8x128xf32>
    %33 = arith.negf %32 : vector<8x128xf32>
    %34 = math.exp %33 : vector<8x128xf32>
    %cst_17 = arith.constant 1.000000e+00 : f32
    %35 = vector.broadcast %cst_17 : f32 to vector<8x128xf32>
    %36 = arith.addf %35, %34 : vector<8x128xf32>
    %37 = arith.divf %35, %36 : vector<8x128xf32>
    %38 = arith.mulf %29, %7 : vector<8x128xf32>
    %39 = arith.mulf %23, %31 : vector<8x128xf32>
    %40 = arith.addf %38, %39 : vector<8x128xf32>
    %41 = math.tanh %40 : vector<8x128xf32>
    %42 = arith.mulf %37, %41 : vector<8x128xf32>
    %43 = arith.select %10, %40, %7 : vector<8x128xf32>
    %44 = arith.select %10, %42, %6 : vector<8x128xf32>
    %c0_18 = arith.constant 0 : index
    %c0_19 = arith.constant 0 : index
    %c0_20 = arith.constant 0 : index
    %45 = vector.load %arg8[%c0_18, %c0_19, %c0_20] : memref<8x8x128xf32, #tpu.memory_space<vmem>>, vector<1x8x128xf32>
    %46 = vector.shape_cast %45 : vector<1x8x128xf32> to vector<8x128xf32>
    %47 = vector.shape_cast %44 : vector<8x128xf32> to vector<1x8x128xf32>
    tpu.vector_store %arg8[%c0_18, %c0_19, %c0_20], %47 {strides = array<i32>} : memref<8x8x128xf32, #tpu.memory_space<vmem>>, vector<1x8x128xf32>,
    %c8_i32_21 = arith.constant 8 : i32
    %48 = arith.muli %arg1, %c8_i32_21 : i32
    %c1_i32 = arith.constant 1 : i32
    %49 = arith.addi %48, %c1_i32 : i32
    %c11_i32_22 = arith.constant 11 : i32
    %50 = arith.cmpi slt, %49, %c11_i32_22 : i32
    %c1 = arith.constant 1 : index
    %c0_23 = arith.constant 0 : index
    %c0_24 = arith.constant 0 : index
    %51 = vector.load %arg2[%c1, %c0_23, %c0_24] : memref<8x8x128xf32, #tpu.memory_space<vmem>>, vector<1x8x128xf32>
    %52 = vector.shape_cast %51 : vector<1x8x128xf32> to vector<8x128xf32>
    %cst_25 = arith.constant dense<0.000000e+00> : vector<8x512xf32>
    %53 = tpu.matmul %52, %3, %cst_25 {dimension_numbers = #tpu.dot_dimension_numbers<[1], [0], [0], [1], [0, 0, 1, 1], [], []>} : vector<8x128xf32>, vector<128x512xf32>, vector<8x512xf32> -> vector<8x512xf32>
    %cst_26 = arith.constant dense<0.000000e+00> : vector<8x512xf32>
    %54 = tpu.matmul %44, %4, %cst_26 {dimension_numbers = #tpu.dot_dimension_numbers<[1], [0], [0], [1], [0, 0, 1, 1], [], []>} : vector<8x128xf32>, vector<128x512xf32>, vector<8x512xf32> -> vector<8x512xf32>
    %55 = arith.addf %53, %54 : vector<8x512xf32>
    %56 = vector.broadcast %5 : vector<1x512xf32> to vector<8x512xf32>
    %57 = arith.addf %55, %56 : vector<8x512xf32>
    %58 = vector.extract_strided_slice %57 {offsets = [0, 0], sizes = [8, 128], strides = [1, 1]} : vector<8x512xf32> to vector<8x128xf32>
    %59 = arith.negf %58 : vector<8x128xf32>
    %60 = math.exp %59 : vector<8x128xf32>
    %cst_27 = arith.constant 1.000000e+00 : f32
    %61 = vector.broadcast %cst_27 : f32 to vector<8x128xf32>
    %62 = arith.addf %61, %60 : vector<8x128xf32>
    %63 = arith.divf %61, %62 : vector<8x128xf32>
    %64 = vector.extract_strided_slice %57 {offsets = [0, 128], sizes = [8, 128], strides = [1, 1]} : vector<8x512xf32> to vector<8x128xf32>
    %65 = arith.negf %64 : vector<8x128xf32>
    %66 = math.exp %65 : vector<8x128xf32>
    %cst_28 = arith.constant 1.000000e+00 : f32
    %67 = vector.broadcast %cst_28 : f32 to vector<8x128xf32>
    %68 = arith.addf %67, %66 : vector<8x128xf32>
    %69 = arith.divf %67, %68 : vector<8x128xf32>
    %70 = vector.extract_strided_slice %57 {offsets = [0, 256], sizes = [8, 128], strides = [1, 1]} : vector<8x512xf32> to vector<8x128xf32>
    %71 = math.tanh %70 : vector<8x128xf32>
    %72 = vector.extract_strided_slice %57 {offsets = [0, 384], sizes = [8, 128], strides = [1, 1]} : vector<8x512xf32> to vector<8x128xf32>
    %73 = arith.negf %72 : vector<8x128xf32>
    %74 = math.exp %73 : vector<8x128xf32>
    %cst_29 = arith.constant 1.000000e+00 : f32
    %75 = vector.broadcast %cst_29 : f32 to vector<8x128xf32>
    %76 = arith.addf %75, %74 : vector<8x128xf32>
    %77 = arith.divf %75, %76 : vector<8x128xf32>
    %78 = arith.mulf %69, %43 : vector<8x128xf32>
    %79 = arith.mulf %63, %71 : vector<8x128xf32>
    %80 = arith.addf %78, %79 : vector<8x128xf32>
    %81 = math.tanh %80 : vector<8x128xf32>
    %82 = arith.mulf %77, %81 : vector<8x128xf32>
    %83 = arith.select %50, %80, %43 : vector<8x128xf32>
    %84 = arith.select %50, %82, %44 : vector<8x128xf32>
    %c1_30 = arith.constant 1 : index
    %c0_31 = arith.constant 0 : index
    %c0_32 = arith.constant 0 : index
    %85 = vector.load %arg8[%c1_30, %c0_31, %c0_32] : memref<8x8x128xf32, #tpu.memory_space<vmem>>, vector<1x8x128xf32>
    %86 = vector.shape_cast %85 : vector<1x8x128xf32> to vector<8x128xf32>
    %87 = vector.shape_cast %84 : vector<8x128xf32> to vector<1x8x128xf32>
    tpu.vector_store %arg8[%c1_30, %c0_31, %c0_32], %87 {strides = array<i32>} : memref<8x8x128xf32, #tpu.memory_space<vmem>>, vector<1x8x128xf32>,
    %c8_i32_33 = arith.constant 8 : i32
    %88 = arith.muli %arg1, %c8_i32_33 : i32
    %c2_i32 = arith.constant 2 : i32
    %89 = arith.addi %88, %c2_i32 : i32
    %c11_i32_34 = arith.constant 11 : i32
    %90 = arith.cmpi slt, %89, %c11_i32_34 : i32
    %c2 = arith.constant 2 : index
    %c0_35 = arith.constant 0 : index
    %c0_36 = arith.constant 0 : index
    %91 = vector.load %arg2[%c2, %c0_35, %c0_36] : memref<8x8x128xf32, #tpu.memory_space<vmem>>, vector<1x8x128xf32>
    %92 = vector.shape_cast %91 : vector<1x8x128xf32> to vector<8x128xf32>
    %cst_37 = arith.constant dense<0.000000e+00> : vector<8x512xf32>
    %93 = tpu.matmul %92, %3, %cst_37 {dimension_numbers = #tpu.dot_dimension_numbers<[1], [0], [0], [1], [0, 0, 1, 1], [], []>} : vector<8x128xf32>, vector<128x512xf32>, vector<8x512xf32> -> vector<8x512xf32>
    %cst_38 = arith.constant dense<0.000000e+00> : vector<8x512xf32>
    %94 = tpu.matmul %84, %4, %cst_38 {dimension_numbers = #tpu.dot_dimension_numbers<[1], [0], [0], [1], [0, 0, 1, 1], [], []>} : vector<8x128xf32>, vector<128x512xf32>, vector<8x512xf32> -> vector<8x512xf32>
    %95 = arith.addf %93, %94 : vector<8x512xf32>
    %96 = vector.broadcast %5 : vector<1x512xf32> to vector<8x512xf32>
    %97 = arith.addf %95, %96 : vector<8x512xf32>
    %98 = vector.extract_strided_slice %97 {offsets = [0, 0], sizes = [8, 128], strides = [1, 1]} : vector<8x512xf32> to vector<8x128xf32>
    %99 = arith.negf %98 : vector<8x128xf32>
    %100 = math.exp %99 : vector<8x128xf32>
    %cst_39 = arith.constant 1.000000e+00 : f32
    %101 = vector.broadcast %cst_39 : f32 to vector<8x128xf32>
    %102 = arith.addf %101, %100 : vector<8x128xf32>
    %103 = arith.divf %101, %102 : vector<8x128xf32>
    %104 = vector.extract_strided_slice %97 {offsets = [0, 128], sizes = [8, 128], strides = [1, 1]} : vector<8x512xf32> to vector<8x128xf32>
    %105 = arith.negf %104 : vector<8x128xf32>
    %106 = math.exp %105 : vector<8x128xf32>
    %cst_40 = arith.constant 1.000000e+00 : f32
    %107 = vector.broadcast %cst_40 : f32 to vector<8x128xf32>
    %108 = arith.addf %107, %106 : vector<8x128xf32>
    %109 = arith.divf %107, %108 : vector<8x128xf32>
    %110 = vector.extract_strided_slice %97 {offsets = [0, 256], sizes = [8, 128], strides = [1, 1]} : vector<8x512xf32> to vector<8x128xf32>
    %111 = math.tanh %110 : vector<8x128xf32>
    %112 = vector.extract_strided_slice %97 {offsets = [0, 384], sizes = [8, 128], strides = [1, 1]} : vector<8x512xf32> to vector<8x128xf32>
    %113 = arith.negf %112 : vector<8x128xf32>
    %114 = math.exp %113 : vector<8x128xf32>
    %cst_41 = arith.constant 1.000000e+00 : f32
    %115 = vector.broadcast %cst_41 : f32 to vector<8x128xf32>
    %116 = arith.addf %115, %114 : vector<8x128xf32>
    %117 = arith.divf %115, %116 : vector<8x128xf32>
    %118 = arith.mulf %109, %83 : vector<8x128xf32>
    %119 = arith.mulf %103, %111 : vector<8x128xf32>
    %120 = arith.addf %118, %119 : vector<8x128xf32>
    %121 = math.tanh %120 : vector<8x128xf32>
    %122 = arith.mulf %117, %121 : vector<8x128xf32>
    %123 = arith.select %90, %120, %83 : vector<8x128xf32>
    %124 = arith.select %90, %122, %84 : vector<8x128xf32>
    %c2_42 = arith.constant 2 : index
    %c0_43 = arith.constant 0 : index
    %c0_44 = arith.constant 0 : index
    %125 = vector.load %arg8[%c2_42, %c0_43, %c0_44] : memref<8x8x128xf32, #tpu.memory_space<vmem>>, vector<1x8x128xf32>
    %126 = vector.shape_cast %125 : vector<1x8x128xf32> to vector<8x128xf32>
    %127 = vector.shape_cast %124 : vector<8x128xf32> to vector<1x8x128xf32>
    tpu.vector_store %arg8[%c2_42, %c0_43, %c0_44], %127 {strides = array<i32>} : memref<8x8x128xf32, #tpu.memory_space<vmem>>, vector<1x8x128xf32>,
    %c8_i32_45 = arith.constant 8 : i32
    %128 = arith.muli %arg1, %c8_i32_45 : i32
    %c3_i32 = arith.constant 3 : i32
    %129 = arith.addi %128, %c3_i32 : i32
    %c11_i32_46 = arith.constant 11 : i32
    %130 = arith.cmpi slt, %129, %c11_i32_46 : i32
    %c3 = arith.constant 3 : index
    %c0_47 = arith.constant 0 : index
    %c0_48 = arith.constant 0 : index
    %131 = vector.load %arg2[%c3, %c0_47, %c0_48] : memref<8x8x128xf32, #tpu.memory_space<vmem>>, vector<1x8x128xf32>
    %132 = vector.shape_cast %131 : vector<1x8x128xf32> to vector<8x128xf32>
    %cst_49 = arith.constant dense<0.000000e+00> : vector<8x512xf32>
    %133 = tpu.matmul %132, %3, %cst_49 {dimension_numbers = #tpu.dot_dimension_numbers<[1], [0], [0], [1], [0, 0, 1, 1], [], []>} : vector<8x128xf32>, vector<128x512xf32>, vector<8x512xf32> -> vector<8x512xf32>
    %cst_50 = arith.constant dense<0.000000e+00> : vector<8x512xf32>
    %134 = tpu.matmul %124, %4, %cst_50 {dimension_numbers = #tpu.dot_dimension_numbers<[1], [0], [0], [1], [0, 0, 1, 1], [], []>} : vector<8x128xf32>, vector<128x512xf32>, vector<8x512xf32> -> vector<8x512xf32>
    %135 = arith.addf %133, %134 : vector<8x512xf32>
    %136 = vector.broadcast %5 : vector<1x512xf32> to vector<8x512xf32>
    %137 = arith.addf %135, %136 : vector<8x512xf32>
    %138 = vector.extract_strided_slice %137 {offsets = [0, 0], sizes = [8, 128], strides = [1, 1]} : vector<8x512xf32> to vector<8x128xf32>
    %139 = arith.negf %138 : vector<8x128xf32>
    %140 = math.exp %139 : vector<8x128xf32>
    %cst_51 = arith.constant 1.000000e+00 : f32
    %141 = vector.broadcast %cst_51 : f32 to vector<8x128xf32>
    %142 = arith.addf %141, %140 : vector<8x128xf32>
    %143 = arith.divf %141, %142 : vector<8x128xf32>
    %144 = vector.extract_strided_slice %137 {offsets = [0, 128], sizes = [8, 128], strides = [1, 1]} : vector<8x512xf32> to vector<8x128xf32>
    %145 = arith.negf %144 : vector<8x128xf32>
    %146 = math.exp %145 : vector<8x128xf32>
    %cst_52 = arith.constant 1.000000e+00 : f32
    %147 = vector.broadcast %cst_52 : f32 to vector<8x128xf32>
    %148 = arith.addf %147, %146 : vector<8x128xf32>
    %149 = arith.divf %147, %148 : vector<8x128xf32>
    %150 = vector.extract_strided_slice %137 {offsets = [0, 256], sizes = [8, 128], strides = [1, 1]} : vector<8x512xf32> to vector<8x128xf32>
    %151 = math.tanh %150 : vector<8x128xf32>
    %152 = vector.extract_strided_slice %137 {offsets = [0, 384], sizes = [8, 128], strides = [1, 1]} : vector<8x512xf32> to vector<8x128xf32>
    %153 = arith.negf %152 : vector<8x128xf32>
    %154 = math.exp %153 : vector<8x128xf32>
    %cst_53 = arith.constant 1.000000e+00 : f32
    %155 = vector.broadcast %cst_53 : f32 to vector<8x128xf32>
    %156 = arith.addf %155, %154 : vector<8x128xf32>
    %157 = arith.divf %155, %156 : vector<8x128xf32>
    %158 = arith.mulf %149, %123 : vector<8x128xf32>
    %159 = arith.mulf %143, %151 : vector<8x128xf32>
    %160 = arith.addf %158, %159 : vector<8x128xf32>
    %161 = math.tanh %160 : vector<8x128xf32>
    %162 = arith.mulf %157, %161 : vector<8x128xf32>
    %163 = arith.select %130, %160, %123 : vector<8x128xf32>
    %164 = arith.select %130, %162, %124 : vector<8x128xf32>
    %c3_54 = arith.constant 3 : index
    %c0_55 = arith.constant 0 : index
    %c0_56 = arith.constant 0 : index
    %165 = vector.load %arg8[%c3_54, %c0_55, %c0_56] : memref<8x8x128xf32, #tpu.memory_space<vmem>>, vector<1x8x128xf32>
    %166 = vector.shape_cast %165 : vector<1x8x128xf32> to vector<8x128xf32>
    %167 = vector.shape_cast %164 : vector<8x128xf32> to vector<1x8x128xf32>
    tpu.vector_store %arg8[%c3_54, %c0_55, %c0_56], %167 {strides = array<i32>} : memref<8x8x128xf32, #tpu.memory_space<vmem>>, vector<1x8x128xf32>,
    %c8_i32_57 = arith.constant 8 : i32
    %168 = arith.muli %arg1, %c8_i32_57 : i32
    %c4_i32 = arith.constant 4 : i32
    %169 = arith.addi %168, %c4_i32 : i32
    %c11_i32_58 = arith.constant 11 : i32
    %170 = arith.cmpi slt, %169, %c11_i32_58 : i32
    %c4 = arith.constant 4 : index
    %c0_59 = arith.constant 0 : index
    %c0_60 = arith.constant 0 : index
    %171 = vector.load %arg2[%c4, %c0_59, %c0_60] : memref<8x8x128xf32, #tpu.memory_space<vmem>>, vector<1x8x128xf32>
    %172 = vector.shape_cast %171 : vector<1x8x128xf32> to vector<8x128xf32>
    %cst_61 = arith.constant dense<0.000000e+00> : vector<8x512xf32>
    %173 = tpu.matmul %172, %3, %cst_61 {dimension_numbers = #tpu.dot_dimension_numbers<[1], [0], [0], [1], [0, 0, 1, 1], [], []>} : vector<8x128xf32>, vector<128x512xf32>, vector<8x512xf32> -> vector<8x512xf32>
    %cst_62 = arith.constant dense<0.000000e+00> : vector<8x512xf32>
    %174 = tpu.matmul %164, %4, %cst_62 {dimension_numbers = #tpu.dot_dimension_numbers<[1], [0], [0], [1], [0, 0, 1, 1], [], []>} : vector<8x128xf32>, vector<128x512xf32>, vector<8x512xf32> -> vector<8x512xf32>
    %175 = arith.addf %173, %174 : vector<8x512xf32>
    %176 = vector.broadcast %5 : vector<1x512xf32> to vector<8x512xf32>
    %177 = arith.addf %175, %176 : vector<8x512xf32>
    %178 = vector.extract_strided_slice %177 {offsets = [0, 0], sizes = [8, 128], strides = [1, 1]} : vector<8x512xf32> to vector<8x128xf32>
    %179 = arith.negf %178 : vector<8x128xf32>
    %180 = math.exp %179 : vector<8x128xf32>
    %cst_63 = arith.constant 1.000000e+00 : f32
    %181 = vector.broadcast %cst_63 : f32 to vector<8x128xf32>
    %182 = arith.addf %181, %180 : vector<8x128xf32>
    %183 = arith.divf %181, %182 : vector<8x128xf32>
    %184 = vector.extract_strided_slice %177 {offsets = [0, 128], sizes = [8, 128], strides = [1, 1]} : vector<8x512xf32> to vector<8x128xf32>
    %185 = arith.negf %184 : vector<8x128xf32>
    %186 = math.exp %185 : vector<8x128xf32>
    %cst_64 = arith.constant 1.000000e+00 : f32
    %187 = vector.broadcast %cst_64 : f32 to vector<8x128xf32>
    %188 = arith.addf %187, %186 : vector<8x128xf32>
    %189 = arith.divf %187, %188 : vector<8x128xf32>
    %190 = vector.extract_strided_slice %177 {offsets = [0, 256], sizes = [8, 128], strides = [1, 1]} : vector<8x512xf32> to vector<8x128xf32>
    %191 = math.tanh %190 : vector<8x128xf32>
    %192 = vector.extract_strided_slice %177 {offsets = [0, 384], sizes = [8, 128], strides = [1, 1]} : vector<8x512xf32> to vector<8x128xf32>
    %193 = arith.negf %192 : vector<8x128xf32>
    %194 = math.exp %193 : vector<8x128xf32>
    %cst_65 = arith.constant 1.000000e+00 : f32
    %195 = vector.broadcast %cst_65 : f32 to vector<8x128xf32>
    %196 = arith.addf %195, %194 : vector<8x128xf32>
    %197 = arith.divf %195, %196 : vector<8x128xf32>
    %198 = arith.mulf %189, %163 : vector<8x128xf32>
    %199 = arith.mulf %183, %191 : vector<8x128xf32>
    %200 = arith.addf %198, %199 : vector<8x128xf32>
    %201 = math.tanh %200 : vector<8x128xf32>
    %202 = arith.mulf %197, %201 : vector<8x128xf32>
    %203 = arith.select %170, %200, %163 : vector<8x128xf32>
    %204 = arith.select %170, %202, %164 : vector<8x128xf32>
    %c4_66 = arith.constant 4 : index
    %c0_67 = arith.constant 0 : index
    %c0_68 = arith.constant 0 : index
    %205 = vector.load %arg8[%c4_66, %c0_67, %c0_68] : memref<8x8x128xf32, #tpu.memory_space<vmem>>, vector<1x8x128xf32>
    %206 = vector.shape_cast %205 : vector<1x8x128xf32> to vector<8x128xf32>
    %207 = vector.shape_cast %204 : vector<8x128xf32> to vector<1x8x128xf32>
    tpu.vector_store %arg8[%c4_66, %c0_67, %c0_68], %207 {strides = array<i32>} : memref<8x8x128xf32, #tpu.memory_space<vmem>>, vector<1x8x128xf32>,
    %c8_i32_69 = arith.constant 8 : i32
    %208 = arith.muli %arg1, %c8_i32_69 : i32
    %c5_i32 = arith.constant 5 : i32
    %209 = arith.addi %208, %c5_i32 : i32
    %c11_i32_70 = arith.constant 11 : i32
    %210 = arith.cmpi slt, %209, %c11_i32_70 : i32
    %c5 = arith.constant 5 : index
    %c0_71 = arith.constant 0 : index
    %c0_72 = arith.constant 0 : index
    %211 = vector.load %arg2[%c5, %c0_71, %c0_72] : memref<8x8x128xf32, #tpu.memory_space<vmem>>, vector<1x8x128xf32>
    %212 = vector.shape_cast %211 : vector<1x8x128xf32> to vector<8x128xf32>
    %cst_73 = arith.constant dense<0.000000e+00> : vector<8x512xf32>
    %213 = tpu.matmul %212, %3, %cst_73 {dimension_numbers = #tpu.dot_dimension_numbers<[1], [0], [0], [1], [0, 0, 1, 1], [], []>} : vector<8x128xf32>, vector<128x512xf32>, vector<8x512xf32> -> vector<8x512xf32>
    %cst_74 = arith.constant dense<0.000000e+00> : vector<8x512xf32>
    %214 = tpu.matmul %204, %4, %cst_74 {dimension_numbers = #tpu.dot_dimension_numbers<[1], [0], [0], [1], [0, 0, 1, 1], [], []>} : vector<8x128xf32>, vector<128x512xf32>, vector<8x512xf32> -> vector<8x512xf32>
    %215 = arith.addf %213, %214 : vector<8x512xf32>
    %216 = vector.broadcast %5 : vector<1x512xf32> to vector<8x512xf32>
    %217 = arith.addf %215, %216 : vector<8x512xf32>
    %218 = vector.extract_strided_slice %217 {offsets = [0, 0], sizes = [8, 128], strides = [1, 1]} : vector<8x512xf32> to vector<8x128xf32>
    %219 = arith.negf %218 : vector<8x128xf32>
    %220 = math.exp %219 : vector<8x128xf32>
    %cst_75 = arith.constant 1.000000e+00 : f32
    %221 = vector.broadcast %cst_75 : f32 to vector<8x128xf32>
    %222 = arith.addf %221, %220 : vector<8x128xf32>
    %223 = arith.divf %221, %222 : vector<8x128xf32>
    %224 = vector.extract_strided_slice %217 {offsets = [0, 128], sizes = [8, 128], strides = [1, 1]} : vector<8x512xf32> to vector<8x128xf32>
    %225 = arith.negf %224 : vector<8x128xf32>
    %226 = math.exp %225 : vector<8x128xf32>
    %cst_76 = arith.constant 1.000000e+00 : f32
    %227 = vector.broadcast %cst_76 : f32 to vector<8x128xf32>
    %228 = arith.addf %227, %226 : vector<8x128xf32>
    %229 = arith.divf %227, %228 : vector<8x128xf32>
    %230 = vector.extract_strided_slice %217 {offsets = [0, 256], sizes = [8, 128], strides = [1, 1]} : vector<8x512xf32> to vector<8x128xf32>
    %231 = math.tanh %230 : vector<8x128xf32>
    %232 = vector.extract_strided_slice %217 {offsets = [0, 384], sizes = [8, 128], strides = [1, 1]} : vector<8x512xf32> to vector<8x128xf32>
    %233 = arith.negf %232 : vector<8x128xf32>
    %234 = math.exp %233 : vector<8x128xf32>
    %cst_77 = arith.constant 1.000000e+00 : f32
    %235 = vector.broadcast %cst_77 : f32 to vector<8x128xf32>
    %236 = arith.addf %235, %234 : vector<8x128xf32>
    %237 = arith.divf %235, %236 : vector<8x128xf32>
    %238 = arith.mulf %229, %203 : vector<8x128xf32>
    %239 = arith.mulf %223, %231 : vector<8x128xf32>
    %240 = arith.addf %238, %239 : vector<8x128xf32>
    %241 = math.tanh %240 : vector<8x128xf32>
    %242 = arith.mulf %237, %241 : vector<8x128xf32>
    %243 = arith.select %210, %240, %203 : vector<8x128xf32>
    %244 = arith.select %210, %242, %204 : vector<8x128xf32>
    %c5_78 = arith.constant 5 : index
    %c0_79 = arith.constant 0 : index
    %c0_80 = arith.constant 0 : index
    %245 = vector.load %arg8[%c5_78, %c0_79, %c0_80] : memref<8x8x128xf32, #tpu.memory_space<vmem>>, vector<1x8x128xf32>
    %246 = vector.shape_cast %245 : vector<1x8x128xf32> to vector<8x128xf32>
    %247 = vector.shape_cast %244 : vector<8x128xf32> to vector<1x8x128xf32>
    tpu.vector_store %arg8[%c5_78, %c0_79, %c0_80], %247 {strides = array<i32>} : memref<8x8x128xf32, #tpu.memory_space<vmem>>, vector<1x8x128xf32>,
    %c8_i32_81 = arith.constant 8 : i32
    %248 = arith.muli %arg1, %c8_i32_81 : i32
    %c6_i32 = arith.constant 6 : i32
    %249 = arith.addi %248, %c6_i32 : i32
    %c11_i32_82 = arith.constant 11 : i32
    %250 = arith.cmpi slt, %249, %c11_i32_82 : i32
    %c6 = arith.constant 6 : index
    %c0_83 = arith.constant 0 : index
    %c0_84 = arith.constant 0 : index
    %251 = vector.load %arg2[%c6, %c0_83, %c0_84] : memref<8x8x128xf32, #tpu.memory_space<vmem>>, vector<1x8x128xf32>
    %252 = vector.shape_cast %251 : vector<1x8x128xf32> to vector<8x128xf32>
    %cst_85 = arith.constant dense<0.000000e+00> : vector<8x512xf32>
    %253 = tpu.matmul %252, %3, %cst_85 {dimension_numbers = #tpu.dot_dimension_numbers<[1], [0], [0], [1], [0, 0, 1, 1], [], []>} : vector<8x128xf32>, vector<128x512xf32>, vector<8x512xf32> -> vector<8x512xf32>
    %cst_86 = arith.constant dense<0.000000e+00> : vector<8x512xf32>
    %254 = tpu.matmul %244, %4, %cst_86 {dimension_numbers = #tpu.dot_dimension_numbers<[1], [0], [0], [1], [0, 0, 1, 1], [], []>} : vector<8x128xf32>, vector<128x512xf32>, vector<8x512xf32> -> vector<8x512xf32>
    %255 = arith.addf %253, %254 : vector<8x512xf32>
    %256 = vector.broadcast %5 : vector<1x512xf32> to vector<8x512xf32>
    %257 = arith.addf %255, %256 : vector<8x512xf32>
    %258 = vector.extract_strided_slice %257 {offsets = [0, 0], sizes = [8, 128], strides = [1, 1]} : vector<8x512xf32> to vector<8x128xf32>
    %259 = arith.negf %258 : vector<8x128xf32>
    %260 = math.exp %259 : vector<8x128xf32>
    %cst_87 = arith.constant 1.000000e+00 : f32
    %261 = vector.broadcast %cst_87 : f32 to vector<8x128xf32>
    %262 = arith.addf %261, %260 : vector<8x128xf32>
    %263 = arith.divf %261, %262 : vector<8x128xf32>
    %264 = vector.extract_strided_slice %257 {offsets = [0, 128], sizes = [8, 128], strides = [1, 1]} : vector<8x512xf32> to vector<8x128xf32>
    %265 = arith.negf %264 : vector<8x128xf32>
    %266 = math.exp %265 : vector<8x128xf32>
    %cst_88 = arith.constant 1.000000e+00 : f32
    %267 = vector.broadcast %cst_88 : f32 to vector<8x128xf32>
    %268 = arith.addf %267, %266 : vector<8x128xf32>
    %269 = arith.divf %267, %268 : vector<8x128xf32>
    %270 = vector.extract_strided_slice %257 {offsets = [0, 256], sizes = [8, 128], strides = [1, 1]} : vector<8x512xf32> to vector<8x128xf32>
    %271 = math.tanh %270 : vector<8x128xf32>
    %272 = vector.extract_strided_slice %257 {offsets = [0, 384], sizes = [8, 128], strides = [1, 1]} : vector<8x512xf32> to vector<8x128xf32>
    %273 = arith.negf %272 : vector<8x128xf32>
    %274 = math.exp %273 : vector<8x128xf32>
    %cst_89 = arith.constant 1.000000e+00 : f32
    %275 = vector.broadcast %cst_89 : f32 to vector<8x128xf32>
    %276 = arith.addf %275, %274 : vector<8x128xf32>
    %277 = arith.divf %275, %276 : vector<8x128xf32>
    %278 = arith.mulf %269, %243 : vector<8x128xf32>
    %279 = arith.mulf %263, %271 : vector<8x128xf32>
    %280 = arith.addf %278, %279 : vector<8x128xf32>
    %281 = math.tanh %280 : vector<8x128xf32>
    %282 = arith.mulf %277, %281 : vector<8x128xf32>
    %283 = arith.select %250, %280, %243 : vector<8x128xf32>
    %284 = arith.select %250, %282, %244 : vector<8x128xf32>
    %c6_90 = arith.constant 6 : index
    %c0_91 = arith.constant 0 : index
    %c0_92 = arith.constant 0 : index
    %285 = vector.load %arg8[%c6_90, %c0_91, %c0_92] : memref<8x8x128xf32, #tpu.memory_space<vmem>>, vector<1x8x128xf32>
    %286 = vector.shape_cast %285 : vector<1x8x128xf32> to vector<8x128xf32>
    %287 = vector.shape_cast %284 : vector<8x128xf32> to vector<1x8x128xf32>
    tpu.vector_store %arg8[%c6_90, %c0_91, %c0_92], %287 {strides = array<i32>} : memref<8x8x128xf32, #tpu.memory_space<vmem>>, vector<1x8x128xf32>,
    %c8_i32_93 = arith.constant 8 : i32
    %288 = arith.muli %arg1, %c8_i32_93 : i32
    %c7_i32 = arith.constant 7 : i32
    %289 = arith.addi %288, %c7_i32 : i32
    %c11_i32_94 = arith.constant 11 : i32
    %290 = arith.cmpi slt, %289, %c11_i32_94 : i32
    %c7 = arith.constant 7 : index
    %c0_95 = arith.constant 0 : index
    %c0_96 = arith.constant 0 : index
    %291 = vector.load %arg2[%c7, %c0_95, %c0_96] : memref<8x8x128xf32, #tpu.memory_space<vmem>>, vector<1x8x128xf32>
    %292 = vector.shape_cast %291 : vector<1x8x128xf32> to vector<8x128xf32>
    %cst_97 = arith.constant dense<0.000000e+00> : vector<8x512xf32>
    %293 = tpu.matmul %292, %3, %cst_97 {dimension_numbers = #tpu.dot_dimension_numbers<[1], [0], [0], [1], [0, 0, 1, 1], [], []>} : vector<8x128xf32>, vector<128x512xf32>, vector<8x512xf32> -> vector<8x512xf32>
    %cst_98 = arith.constant dense<0.000000e+00> : vector<8x512xf32>
    %294 = tpu.matmul %284, %4, %cst_98 {dimension_numbers = #tpu.dot_dimension_numbers<[1], [0], [0], [1], [0, 0, 1, 1], [], []>} : vector<8x128xf32>, vector<128x512xf32>, vector<8x512xf32> -> vector<8x512xf32>
    %295 = arith.addf %293, %294 : vector<8x512xf32>
    %296 = vector.broadcast %5 : vector<1x512xf32> to vector<8x512xf32>
    %297 = arith.addf %295, %296 : vector<8x512xf32>
    %298 = vector.extract_strided_slice %297 {offsets = [0, 0], sizes = [8, 128], strides = [1, 1]} : vector<8x512xf32> to vector<8x128xf32>
    %299 = arith.negf %298 : vector<8x128xf32>
    %300 = math.exp %299 : vector<8x128xf32>
    %cst_99 = arith.constant 1.000000e+00 : f32
    %301 = vector.broadcast %cst_99 : f32 to vector<8x128xf32>
    %302 = arith.addf %301, %300 : vector<8x128xf32>
    %303 = arith.divf %301, %302 : vector<8x128xf32>
    %304 = vector.extract_strided_slice %297 {offsets = [0, 128], sizes = [8, 128], strides = [1, 1]} : vector<8x512xf32> to vector<8x128xf32>
    %305 = arith.negf %304 : vector<8x128xf32>
    %306 = math.exp %305 : vector<8x128xf32>
    %cst_100 = arith.constant 1.000000e+00 : f32
    %307 = vector.broadcast %cst_100 : f32 to vector<8x128xf32>
    %308 = arith.addf %307, %306 : vector<8x128xf32>
    %309 = arith.divf %307, %308 : vector<8x128xf32>
    %310 = vector.extract_strided_slice %297 {offsets = [0, 256], sizes = [8, 128], strides = [1, 1]} : vector<8x512xf32> to vector<8x128xf32>
    %311 = math.tanh %310 : vector<8x128xf32>
    %312 = vector.extract_strided_slice %297 {offsets = [0, 384], sizes = [8, 128], strides = [1, 1]} : vector<8x512xf32> to vector<8x128xf32>
    %313 = arith.negf %312 : vector<8x128xf32>
    %314 = math.exp %313 : vector<8x128xf32>
    %cst_101 = arith.constant 1.000000e+00 : f32
    %315 = vector.broadcast %cst_101 : f32 to vector<8x128xf32>
    %316 = arith.addf %315, %314 : vector<8x128xf32>
    %317 = arith.divf %315, %316 : vector<8x128xf32>
    %318 = arith.mulf %309, %283 : vector<8x128xf32>
    %319 = arith.mulf %303, %311 : vector<8x128xf32>
    %320 = arith.addf %318, %319 : vector<8x128xf32>
    %321 = math.tanh %320 : vector<8x128xf32>
    %322 = arith.mulf %317, %321 : vector<8x128xf32>
    %323 = arith.select %290, %320, %283 : vector<8x128xf32>
    %324 = arith.select %290, %322, %284 : vector<8x128xf32>
    %c7_102 = arith.constant 7 : index
    %c0_103 = arith.constant 0 : index
    %c0_104 = arith.constant 0 : index
    %325 = vector.load %arg8[%c7_102, %c0_103, %c0_104] : memref<8x8x128xf32, #tpu.memory_space<vmem>>, vector<1x8x128xf32>
    %326 = vector.shape_cast %325 : vector<1x8x128xf32> to vector<8x128xf32>
    %327 = vector.shape_cast %324 : vector<8x128xf32> to vector<1x8x128xf32>
    tpu.vector_store %arg8[%c7_102, %c0_103, %c0_104], %327 {strides = array<i32>} : memref<8x8x128xf32, #tpu.memory_space<vmem>>, vector<1x8x128xf32>,
    %c0_105 = arith.constant 0 : index
    %c0_106 = arith.constant 0 : index
    %328 = vector.load %arg13[%c0_105, %c0_106] : memref<8x128xf32, #tpu.memory_space<vmem>>, vector<8x128xf32>
    tpu.vector_store %arg13[%c0_105, %c0_106], %324 {strides = array<i32>} : memref<8x128xf32, #tpu.memory_space<vmem>>, vector<8x128xf32>,
    %c0_107 = arith.constant 0 : index
    %c0_108 = arith.constant 0 : index
    %329 = vector.load %arg14[%c0_107, %c0_108] : memref<8x128xf32, #tpu.memory_space<vmem>>, vector<8x128xf32>
    tpu.vector_store %arg14[%c0_107, %c0_108], %323 {strides = array<i32>} : memref<8x128xf32, #tpu.memory_space<vmem>>, vector<8x128xf32>,
    %c1_i32_109 = arith.constant 1 : i32
    %330 = arith.cmpi eq, %arg1, %c1_i32_109 : i32
    %331 = arith.extui %330 : i1 to i32
    %c0_i32_110 = arith.constant 0 : i32
    %332 = arith.cmpi ne, %331, %c0_i32_110 : i32
    scf.if %332 {
      %c0_111 = arith.constant 0 : index
      %c0_112 = arith.constant 0 : index
      %333 = vector.load %arg13[%c0_111, %c0_112] : memref<8x128xf32, #tpu.memory_space<vmem>>, vector<8x128xf32>
      %c0_113 = arith.constant 0 : index
      %c0_114 = arith.constant 0 : index
      %334 = vector.load %arg9[%c0_113, %c0_114] : memref<8x128xf32, #tpu.memory_space<vmem>>, vector<8x128xf32>
      tpu.vector_store %arg9[%c0_113, %c0_114], %333 {strides = array<i32>} : memref<8x128xf32, #tpu.memory_space<vmem>>, vector<8x128xf32>,
      %c0_115 = arith.constant 0 : index
      %c0_116 = arith.constant 0 : index
      %335 = vector.load %arg14[%c0_115, %c0_116] : memref<8x128xf32, #tpu.memory_space<vmem>>, vector<8x128xf32>
      %c0_117 = arith.constant 0 : index
      %c0_118 = arith.constant 0 : index
      %336 = vector.load %arg10[%c0_117, %c0_118] : memref<8x128xf32, #tpu.memory_space<vmem>>, vector<8x128xf32>
      tpu.vector_store %arg10[%c0_117, %c0_118], %335 {strides = array<i32>} : memref<8x128xf32, #tpu.memory_space<vmem>>, vector<8x128xf32>,
    } else {
    }
    return
  }
  func.func @transform_0(%arg0: i32, %arg1: i32) -> (i32, i32, i32) {
    %c0_i32 = arith.constant 0 : i32
    %c0_i32_0 = arith.constant 0 : i32
    return %arg1, %arg0, %c0_i32 : i32, i32, i32
  }
  func.func @transform_1(%arg0: i32, %arg1: i32) -> (i32, i32) {
    %c0_i32 = arith.constant 0 : i32
    %c0_i32_0 = arith.constant 0 : i32
    %c0_i32_1 = arith.constant 0 : i32
    return %c0_i32, %c0_i32_0 : i32, i32
  }
  func.func @transform_2(%arg0: i32, %arg1: i32) -> (i32, i32) {
    %c0_i32 = arith.constant 0 : i32
    %c0_i32_0 = arith.constant 0 : i32
    return %arg0, %c0_i32 : i32, i32
  }
  func.func @transform_3(%arg0: i32, %arg1: i32) -> (i32, i32) {
    %c0_i32 = arith.constant 0 : i32
    %c0_i32_0 = arith.constant 0 : i32
    return %arg0, %c0_i32 : i32, i32
  }
  func.func @transform_6(%arg0: i32, %arg1: i32) -> (i32, i32, i32) {
    %c0_i32 = arith.constant 0 : i32
    %c0_i32_0 = arith.constant 0 : i32
    return %arg1, %arg0, %c0_i32 : i32, i32, i32
  }
  func.func @transform_7(%arg0: i32, %arg1: i32) -> (i32, i32) {
    %c0_i32 = arith.constant 0 : i32
    %c0_i32_0 = arith.constant 0 : i32
    return %arg0, %c0_i32 : i32, i32
  }
  func.func @transform_8(%arg0: i32, %arg1: i32) -> (i32, i32) {
    %c0_i32 = arith.constant 0 : i32
    %c0_i32_0 = arith.constant 0 : i32
    return %arg0, %c0_i32 : i32, i32
  }
}

</mosaic_0001>

<llo_original>
// kernel: tpu_custom_call.1
$region0: #{tpu_custom_call.1}
  #allocation0 [shape = 'u32[]', space=smem, size = 0x4, offset = 0x4, fixed_abs, tag = 'smem constant byte address 0x4 - core index']
  #allocation1 [shape = 'u32[72,128]{1,0:T(1,128)}', space=vmem, size = 0x9000, scoped, tag = 'internal scratch']
  #allocation2 [shape = 'f32[128,512]{1,0:T(8,128)}', space=vmem, size = 0x40000, scoped, tag = 'scratch operand']
  #allocation3 [shape = 'f32[128,512]{1,0:T(8,128)}', space=vmem, size = 0x40000, scoped, tag = 'scratch operand']
  #allocation4 [shape = 'f32[8,128]{1,0:T(8,128)}', space=vmem, size = 0x1000, scoped, tag = 'scratch operand']
  #allocation5 [shape = 'f32[8,128]{1,0:T(8,128)}', space=vmem, size = 0x1000, scoped, tag = 'scratch operand']
  #allocation6 [shape = 's32[2]{0}', space=sflag, size = 0x8, scoped, tag = 'scratch operand']
  #allocation18 [shape = 's32[]', space=sflag, size = 0x4, offset = 0, fixed_abs, tag = 'sflag constant byte address 0x0 - dummy sync flag']
  #allocation19 [shape = 's32[]', space=sflag, size = 0x4, offset = 0, fixed_abs, tag = 'sflag constant byte address 0x0 - dummy sync flag']
  #allocation20 [shape = 'u32[]', space=smem, size = 0x4, offset = 0x44, fixed_abs, tag = 'smem constant byte address 0x44 - assertion arg 0']
  #allocation21 [shape = 'u32[]', space=smem, size = 0x4, offset = 0x48, fixed_abs, tag = 'smem constant byte address 0x48 - assertion arg 1']
  #allocation22 [shape = 's32[]', space=sflag, size = 0x4, offset = 0, fixed_abs, tag = 'sflag constant byte address 0x0 - dummy sync flag']
  #allocation23 [shape = 's32[]', space=sflag, size = 0x4, offset = 0, fixed_abs, tag = 'sflag constant byte address 0x0 - dummy sync flag']
  %s0 = inlined_call_operand.hbm [shape: f32[16,16,128], index: 0, kind: input, shape index: {}]
  %s1 = inlined_call_operand.hbm [shape: f32[1,512], index: 1, kind: input, shape index: {}]
  %s2 = inlined_call_operand.hbm [shape: f32[16,128], index: 2, kind: input, shape index: {}]
  %s3 = inlined_call_operand.hbm [shape: f32[16,128], index: 3, kind: input, shape index: {}]
  %s4 = inlined_call_operand.hbm [shape: f32[128,512], index: 4, kind: input, shape index: {}]
  %s5 = inlined_call_operand.hbm [shape: f32[128,512], index: 5, kind: input, shape index: {}]
  %s6 = inlined_call_operand.hbm [shape: f32[16,16,128], index: 6, kind: output, shape index: {0}]
  %s7 = inlined_call_operand.hbm [shape: f32[16,128], index: 7, kind: output, shape index: {1}]
  %s8 = inlined_call_operand.hbm [shape: f32[16,128], index: 8, kind: output, shape index: {2}]
  %9 = xla_tuple %s6, %s7, %s8
  %s10 = sld [smem:[#allocation0]]
  $region97: #{tpu_custom_call.1} parent=0
    _
  %s12 = ssub.s32 1, %s10
  %s13 = scalar_select 0, %s12, %s10
  $region1: #{tpu_custom_call.1} parent=0
    #allocation7 [shape = 'u8[65536]{0}', space=vmem, size = 0x10000, scoped, tag = 'input window, operand 0']
    #allocation8 [shape = 's32[2]{0}', space=sflag, size = 0x8, scoped, tag = 'scoped memory for tpu_custom_call.1']
    #allocation9 [shape = 's32[2]{0}', space=sflag, size = 0x8, scoped, tag = 'scoped memory for tpu_custom_call.1']
    #allocation10 [shape = 'u8[2048]{0}', space=vmem, size = 0x800, scoped, tag = 'input window, operand 1, single buffered']
    #allocation11 [shape = 's32[1]{0}', space=sflag, size = 0x4, scoped, tag = 'scoped memory for tpu_custom_call.1']
    #allocation12 [shape = 'u8[8192]{0}', space=vmem, size = 0x2000, scoped, tag = 'input window, operand 2']
    #allocation13 [shape = 'u8[8192]{0}', space=vmem, size = 0x2000, scoped, tag = 'input window, operand 3']
    #allocation14 [shape = 'u8[65536]{0}', space=vmem, size = 0x10000, scoped, tag = 'output window, operand 0']
    #allocation15 [shape = 'u8[8192]{0}', space=vmem, size = 0x2000, scoped, tag = 'output window, operand 1']
    #allocation16 [shape = 's32[2]{0}', space=sflag, size = 0x8, scoped, tag = 'scoped memory for tpu_custom_call.1']
    #allocation17 [shape = 'u8[8192]{0}', space=vmem, size = 0x2000, scoped, tag = 'output window, operand 2']
    %14 = vsyncpa [#allocation8], 0
    %s15 = scalar_lea.sflag [#allocation8], 1
    %16 = vsyncpa %s15, 0
    %17 = vsyncpa [#allocation11], 0
    %18 = vsyncpa [#allocation9], 0
    %s19 = scalar_lea.sflag [#allocation9], 1
    %20 = vsyncpa %s19, 0
    %21 = vsyncpa [#allocation16], 0
    %s22 = scalar_lea.sflag [#allocation16], 1
    %23 = vsyncpa %s22, 0
    loop: start=0, step=1, limit=6
    $region2: #{tpu_custom_call.1} parent=1 // loop_pre_header
      _
    $region3: #{tpu_custom_call.1} parent=1 // loop_header
      %s25 = sphi 0, %s29
      %p26 = scmp.ge.s32.totalorder %s25, 6
      %s32 = sphi 0, %s44
      %s33 = sphi 0, %s40
      %s34 = sphi 0, %s32
      %s35 = sphi 0, %s33
      %s36 = sphi 0, %s34
      %s37 = sphi 0, %s35
      %s49 = sphi 0, %s51
      %s52 = sphi 0, %s49
      %s53 = sphi 0, %s52
      %s69 = sphi 0, %s53
      %s73 = sphi 0, %s73
      %s75 = sphi 0, %s73
      %s76 = sphi 0, %s75
      %s90 = sphi 0, %s76
      %s96 = sphi 0, %s98
      %s99 = sphi 0, %s96
      %s100 = sphi 0, %s99
      %s116 = sphi 0, %s100
      %s122 = sphi 0, %s124
      %s125 = sphi 0, %s122
      %s126 = sphi 0, %s125
      %s142 = sphi 0, %s126
      %s150 = sphi 0, %s152
      %s153 = sphi 0, %s150
      %s154 = sphi 0, %s153
      %s170 = sphi 0, %s154
      %s176 = sphi 0, %s178
      %s179 = sphi 0, %s176
      %s180 = sphi 0, %s179
      %s196 = sphi 0, %s180
      %s202 = sphi 0, %s204
      %s205 = sphi 0, %s202
      %s206 = sphi 0, %s205
      %s222 = sphi 0, %s206
    $region4: #{tpu_custom_call.1} parent=1 // loop_header_branch
      %28 = sbr.rel (%p26) target = $region8
    $region5: #{tpu_custom_call.1} parent=1 // loop_body
      %s30 = ssub.s32 %s25, 1
      %s31 = ssub.s32 %s25, 2
      %s38 = sadd.s32 1, %s33
      %p39 = scmp.ge.s32.totalorder %s38, 2
      %s40 = scalar_select %p39, 0, %s38
      %s41 = sadd.s32 1, %s32
      %s42 = scalar_select %p39, %s41, %s32
      %p43 = scmp.ge.s32.totalorder %s42, 2
      %s44 = scalar_select %p43, 0, %s42
      %s45 = ssub.s32 %s33, %s40
      %s46 = ssub.s32 %s32, %s44
      %s47 = sor.u32 %s45, %s46
      %p48 = scmp.eq.s32.totalorder %s47, 0
      %s50 = sadd.s32 %s49, 1
      %s51 = scalar_select %p48, %s49, %s50
      %p54 = pneg %p48
      %p55 = scmp.eq.s32.totalorder %s25, 3
      %p56 = por %p54, %p55
      %p57 = scmp.ne.s32.totalorder %s49, %s52
      %p58 = scmp.eq.s32.totalorder %s25, 0
      %p59 = por %p57, %p58
      %p60 = scmp.ne.s32.totalorder %s49, %s52
      %p61 = scmp.eq.s32.totalorder %s30, 3
      %p62 = por %p60, %p61
      %p63 = scmp.ne.s32.totalorder %s52, %s53
      %p64 = scmp.eq.s32.totalorder %s30, 0
      %p65 = por %p63, %p64
      %p66 = scmp.ne.s32.totalorder %s52, %s53
      %p67 = scmp.eq.s32.totalorder %s31, 3
      %p68 = por %p66, %p67
      %p70 = scmp.ne.s32.totalorder %s53, %s69
      %p71 = scmp.eq.s32.totalorder %s31, 0
      %p72 = por %p70, %p71
      %s74 = sadd.s32 %s73, 1
      %p77 = scmp.eq.s32.totalorder %s25, 3
      %p78 = scmp.ne.s32.totalorder %s73, %s75
      %p79 = scmp.eq.s32.totalorder %s25, 0
      %p80 = por %p78, %p79
      %p81 = scmp.ne.s32.totalorder %s73, %s75
      %p82 = scmp.eq.s32.totalorder %s30, 3
      %p83 = por %p81, %p82
      %p84 = scmp.ne.s32.totalorder %s75, %s76
      %p85 = scmp.eq.s32.totalorder %s30, 0
      %p86 = por %p84, %p85
      %p87 = scmp.ne.s32.totalorder %s75, %s76
      %p88 = scmp.eq.s32.totalorder %s31, 3
      %p89 = por %p87, %p88
      %p91 = scmp.ne.s32.totalorder %s76, %s90
      %p92 = scmp.eq.s32.totalorder %s31, 0
      %p93 = por %p91, %p92
      %s94 = ssub.s32 %s32, %s44
      %p95 = scmp.eq.s32.totalorder %s94, 0
      %s97 = sadd.s32 %s96, 1
      %s98 = scalar_select %p95, %s96, %s97
      %p101 = pneg %p95
      %p102 = scmp.eq.s32.totalorder %s25, 3
      %p103 = por %p101, %p102
      %p104 = scmp.ne.s32.totalorder %s96, %s99
      %p105 = scmp.eq.s32.totalorder %s25, 0
      %p106 = por %p104, %p105
      %p107 = scmp.ne.s32.totalorder %s96, %s99
      %p108 = scmp.eq.s32.totalorder %s30, 3
      %p109 = por %p107, %p108
      %p110 = scmp.ne.s32.totalorder %s99, %s100
      %p111 = scmp.eq.s32.totalorder %s30, 0
      %p112 = por %p110, %p111
      %p113 = scmp.ne.s32.totalorder %s99, %s100
      %p114 = scmp.eq.s32.totalorder %s31, 3
      %p115 = por %p113, %p114
      %p117 = scmp.ne.s32.totalorder %s100, %s116
      %p118 = scmp.eq.s32.totalorder %s31, 0
      %p119 = por %p117, %p118
      %s120 = ssub.s32 %s32, %s44
      %p121 = scmp.eq.s32.totalorder %s120, 0
      %s123 = sadd.s32 %s122, 1
      %s124 = scalar_select %p121, %s122, %s123
      %p127 = pneg %p121
      %p128 = scmp.eq.s32.totalorder %s25, 3
      %p129 = por %p127, %p128
      %p130 = scmp.ne.s32.totalorder %s122, %s125
      %p131 = scmp.eq.s32.totalorder %s25, 0
      %p132 = por %p130, %p131
      %p133 = scmp.ne.s32.totalorder %s122, %s125
      %p134 = scmp.eq.s32.totalorder %s30, 3
      %p135 = por %p133, %p134
      %p136 = scmp.ne.s32.totalorder %s125, %s126
      %p137 = scmp.eq.s32.totalorder %s30, 0
      %p138 = por %p136, %p137
      %p139 = scmp.ne.s32.totalorder %s125, %s126
      %p140 = scmp.eq.s32.totalorder %s31, 3
      %p141 = por %p139, %p140
      %p143 = scmp.ne.s32.totalorder %s126, %s142
      %p144 = scmp.eq.s32.totalorder %s31, 0
      %p145 = por %p143, %p144
      %s146 = ssub.s32 %s33, %s40
      %s147 = ssub.s32 %s32, %s44
      %s148 = sor.u32 %s146, %s147
      %p149 = scmp.eq.s32.totalorder %s148, 0
      %s151 = sadd.s32 %s150, 1
      %s152 = scalar_select %p149, %s150, %s151
      %p155 = pneg %p149
      %p156 = scmp.eq.s32.totalorder %s25, 3
      %p157 = por %p155, %p156
      %p158 = scmp.ne.s32.totalorder %s150, %s153
      %p159 = scmp.eq.s32.totalorder %s25, 0
      %p160 = por %p158, %p159
      %p161 = scmp.ne.s32.totalorder %s150, %s153
      %p162 = scmp.eq.s32.totalorder %s30, 3
      %p163 = por %p161, %p162
      %p164 = scmp.ne.s32.totalorder %s153, %s154
      %p165 = scmp.eq.s32.totalorder %s30, 0
      %p166 = por %p164, %p165
      %p167 = scmp.ne.s32.totalorder %s153, %s154
      %p168 = scmp.eq.s32.totalorder %s31, 3
      %p169 = por %p167, %p168
      %p171 = scmp.ne.s32.totalorder %s154, %s170
      %p172 = scmp.eq.s32.totalorder %s31, 0
      %p173 = por %p171, %p172
      %s174 = ssub.s32 %s32, %s44
      %p175 = scmp.eq.s32.totalorder %s174, 0
      %s177 = sadd.s32 %s176, 1
      %s178 = scalar_select %p175, %s176, %s177
      %p181 = pneg %p175
      %p182 = scmp.eq.s32.totalorder %s25, 3
      %p183 = por %p181, %p182
      %p184 = scmp.ne.s32.totalorder %s176, %s179
      %p185 = scmp.eq.s32.totalorder %s25, 0
      %p186 = por %p184, %p185
      %p187 = scmp.ne.s32.totalorder %s176, %s179
      %p188 = scmp.eq.s32.totalorder %s30, 3
      %p189 = por %p187, %p188
      %p190 = scmp.ne.s32.totalorder %s179, %s180
      %p191 = scmp.eq.s32.totalorder %s30, 0
      %p192 = por %p190, %p191
      %p193 = scmp.ne.s32.totalorder %s179, %s180
      %p194 = scmp.eq.s32.totalorder %s31, 3
      %p195 = por %p193, %p194
      %p197 = scmp.ne.s32.totalorder %s180, %s196
      %p198 = scmp.eq.s32.totalorder %s31, 0
      %p199 = por %p197, %p198
      %s200 = ssub.s32 %s32, %s44
      %p201 = scmp.eq.s32.totalorder %s200, 0
      %s203 = sadd.s32 %s202, 1
      %s204 = scalar_select %p201, %s202, %s203
      %p207 = pneg %p201
      %p208 = scmp.eq.s32.totalorder %s25, 3
      %p209 = por %p207, %p208
      %p210 = scmp.ne.s32.totalorder %s202, %s205
      %p211 = scmp.eq.s32.totalorder %s25, 0
      %p212 = por %p210, %p211
      %p213 = scmp.ne.s32.totalorder %s202, %s205
      %p214 = scmp.eq.s32.totalorder %s30, 3
      %p215 = por %p213, %p214
      %p216 = scmp.ne.s32.totalorder %s205, %s206
      %p217 = scmp.eq.s32.totalorder %s30, 0
      %p218 = por %p216, %p217
      %p219 = scmp.ne.s32.totalorder %s205, %s206
      %p220 = scmp.eq.s32.totalorder %s31, 3
      %p221 = por %p219, %p220
      %p223 = scmp.ne.s32.totalorder %s206, %s222
      %p224 = scmp.eq.s32.totalorder %s31, 0
      %p225 = por %p223, %p224
      %p226 = scmp.le.s32.totalorder 1, %s25
      %p227 = scmp.lt.s32.totalorder %s25, 5
      %p228 = pnand %p226, %p227
      %p229 = pneg %p228
      // Predicated region
      $region9: #{tpu_custom_call.1} parent=5 // pred_check
        _
      $region10: #{tpu_custom_call.1} parent=5 // pred_check_branch
        %231 = sbr.rel (%p228) target = $region12
      $region11: #{tpu_custom_call.1} parent=5 // pred_region
        %s232 = ssub.s32 %s25, 1
        // Predicated region
        $region13: #{tpu_custom_call.1} parent=11 // pred_check
          %p233 = pneg %p86
        $region14: #{tpu_custom_call.1} parent=11 // pred_check_branch
          %235 = sbr.rel (%p233) target = $region16
        $region15: #{tpu_custom_call.1} parent=11 // pred_region
          %237 = vsyncadd [#allocation11], 0
          %s239 = sshll.u32 %s1, 4
          %s240 = int_to_ptr.hbm [resolvable:$true] %s239
          %s241 = sshll.u32 [#allocation10], 4
          %s242 = int_to_ptr.vmem [resolvable:$true] %s241
          %244 = dma.hbm_to_vmem [thread:$0]  %s240, 64, %s242, [#allocation11]
        $region16: #{tpu_custom_call.1} parent=11 // pred_fallthru
          _
      $region12: #{tpu_custom_call.1} parent=5 // pred_fallthru
        _
      %p245 = scmp.lt.s32.totalorder %s25, 4
      // Predicated region
      $region17: #{tpu_custom_call.1} parent=5 // pred_check
        %p246 = pneg %p245
      $region18: #{tpu_custom_call.1} parent=5 // pred_check_branch
        %248 = sbr.rel (%p246) target = $region20
      $region19: #{tpu_custom_call.1} parent=5 // pred_region
        // Predicated region
        $region21: #{tpu_custom_call.1} parent=19 // pred_check
          %p249 = pneg %p59
        $region22: #{tpu_custom_call.1} parent=19 // pred_check_branch
          %251 = sbr.rel (%p249) target = $region24
        $region23: #{tpu_custom_call.1} parent=19 // pred_region
          %s252 = sand.u32 %s25, 1
          %s253 = scalar_lea.sflag [#allocation8], %s252
          %s254 = sand.u32 %s49, 1
          %s255 = smul.addr %s254, 64
          %s256 = scalar_lea.vmem [#allocation7], %s255
          %s257 = smul.u32 8, %s33
          %259 = vsyncadd %s253, 0
          %s260 = smul.addr %s257, 2
          %s261 = sadd.s32 %s32, %s260
          %s262 = smul.addr %s261, 8
          %s263 = scalar_lea.hbm %s0, %s262
          %s264 = sshll.u32 %s263, 4
          %s265 = int_to_ptr.hbm [resolvable:$true] %s264
          %s266 = sshll.u32 %s256, 4
          %s267 = int_to_ptr.vmem [resolvable:$true] %s266
          %272 = dma.hbm_to_vmem [thread:$0]  %s265, 1024, %s267, %s253, 256, 128, 8
        $region24: #{tpu_custom_call.1} parent=19 // pred_fallthru
          _
        // Predicated region
        $region25: #{tpu_custom_call.1} parent=19 // pred_check
          %p273 = pneg %p106
        $region26: #{tpu_custom_call.1} parent=19 // pred_check_branch
          %275 = sbr.rel (%p273) target = $region28
        $region27: #{tpu_custom_call.1} parent=19 // pred_region
          %s276 = sand.u32 %s25, 1
          %s277 = scalar_lea.sflag [#allocation8], %s276
          %s278 = sand.u32 %s96, 1
          %s279 = smul.addr %s278, 8
          %s280 = scalar_lea.vmem [#allocation12], %s279
          %282 = vsyncadd %s277, 0
          %s283 = smul.addr %s32, 8
          %s284 = scalar_lea.hbm %s2, %s283
          %s286 = sshll.u32 %s284, 4
          %s287 = int_to_ptr.hbm [resolvable:$true] %s286
          %s288 = sshll.u32 %s280, 4
          %s289 = int_to_ptr.vmem [resolvable:$true] %s288
          %291 = dma.hbm_to_vmem [thread:$0]  %s287, 128, %s289, %s277
        $region28: #{tpu_custom_call.1} parent=19 // pred_fallthru
          _
        // Predicated region
        $region29: #{tpu_custom_call.1} parent=19 // pred_check
          %p292 = pneg %p132
        $region30: #{tpu_custom_call.1} parent=19 // pred_check_branch
          %294 = sbr.rel (%p292) target = $region32
        $region31: #{tpu_custom_call.1} parent=19 // pred_region
          %s295 = sand.u32 %s25, 1
          %s296 = scalar_lea.sflag [#allocation8], %s295
          %s297 = sand.u32 %s122, 1
          %s298 = smul.addr %s297, 8
          %s299 = scalar_lea.vmem [#allocation13], %s298
          %301 = vsyncadd %s296, 0
          %s302 = smul.addr %s32, 8
          %s303 = scalar_lea.hbm %s3, %s302
          %s305 = sshll.u32 %s303, 4
          %s306 = int_to_ptr.hbm [resolvable:$true] %s305
          %s307 = sshll.u32 %s299, 4
          %s308 = int_to_ptr.vmem [resolvable:$true] %s307
          %310 = dma.hbm_to_vmem [thread:$0]  %s306, 128, %s308, %s296
        $region32: #{tpu_custom_call.1} parent=19 // pred_fallthru
          _
      $region20: #{tpu_custom_call.1} parent=5 // pred_fallthru
        _
      %p311 = scmp.le.s32.totalorder 1, %s25
      %p312 = scmp.lt.s32.totalorder %s25, 5
      %p313 = pnand %p311, %p312
      %p314 = pneg %p313
      // Predicated region
      $region33: #{tpu_custom_call.1} parent=5 // pred_check
        _
      $region34: #{tpu_custom_call.1} parent=5 // pred_check_branch
        %316 = sbr.rel (%p313) target = $region36
      $region35: #{tpu_custom_call.1} parent=5 // pred_region
        %s317 = ssub.s32 %s25, 1
        %s318 = sand.u32 %s30, 1
        %s319 = scalar_lea.sflag [#allocation8], %s318
        %s320 = sand.u32 %s52, 1
        %s321 = smul.addr %s320, 64
        %s322 = scalar_lea.vmem [#allocation7], %s321
        // Predicated region
        $region37: #{tpu_custom_call.1} parent=35 // pred_check
          %p323 = pneg %p65
        $region38: #{tpu_custom_call.1} parent=35 // pred_check_branch
          %325 = sbr.rel (%p323) target = $region40
        $region39: #{tpu_custom_call.1} parent=35 // pred_region
          %327 = dma.done %s319, 1024
        $region40: #{tpu_custom_call.1} parent=35 // pred_fallthru
          _
        // Predicated region
        $region41: #{tpu_custom_call.1} parent=35 // pred_check
          %p328 = pneg %p86
        $region42: #{tpu_custom_call.1} parent=35 // pred_check_branch
          %330 = sbr.rel (%p328) target = $region44
        $region43: #{tpu_custom_call.1} parent=35 // pred_region
          %332 = dma.done [#allocation11], 64
        $region44: #{tpu_custom_call.1} parent=35 // pred_fallthru
          _
        %s333 = sand.u32 %s30, 1
        %s334 = scalar_lea.sflag [#allocation8], %s333
        %s335 = sand.u32 %s99, 1
        %s336 = smul.addr %s335, 8
        %s337 = scalar_lea.vmem [#allocation12], %s336
        // Predicated region
        $region45: #{tpu_custom_call.1} parent=35 // pred_check
          %p338 = pneg %p112
        $region46: #{tpu_custom_call.1} parent=35 // pred_check_branch
          %340 = sbr.rel (%p338) target = $region48
        $region47: #{tpu_custom_call.1} parent=35 // pred_region
          %342 = dma.done %s334, 128
        $region48: #{tpu_custom_call.1} parent=35 // pred_fallthru
          _
        %s343 = sand.u32 %s30, 1
        %s344 = scalar_lea.sflag [#allocation8], %s343
        %s345 = sand.u32 %s125, 1
        %s346 = smul.addr %s345, 8
        %s347 = scalar_lea.vmem [#allocation13], %s346
        // Predicated region
        $region49: #{tpu_custom_call.1} parent=35 // pred_check
          %p348 = pneg %p138
        $region50: #{tpu_custom_call.1} parent=35 // pred_check_branch
          %350 = sbr.rel (%p348) target = $region52
        $region51: #{tpu_custom_call.1} parent=35 // pred_region
          %352 = dma.done %s344, 128
        $region52: #{tpu_custom_call.1} parent=35 // pred_fallthru
          _
        %s353 = sand.u32 %s30, 1
        %s354 = scalar_lea.sflag [#allocation8], %s353
        %s355 = sand.u32 %s52, 1
        %s356 = smul.addr %s355, 64
        %s357 = scalar_lea.vmem [#allocation7], %s356
        %p358 = pneg %p65
        %p359 = pneg %p62
        %p360 = pneg %p86
        %p361 = pneg %p83
        %s362 = sand.u32 %s30, 1
        %s363 = scalar_lea.sflag [#allocation8], %s362
        %s364 = sand.u32 %s99, 1
        %s365 = smul.addr %s364, 8
        %s366 = scalar_lea.vmem [#allocation12], %s365
        %p367 = pneg %p112
        %p368 = pneg %p109
        %s369 = sand.u32 %s30, 1
        %s370 = scalar_lea.sflag [#allocation8], %s369
        %s371 = sand.u32 %s125, 1
        %s372 = smul.addr %s371, 8
        %s373 = scalar_lea.vmem [#allocation13], %s372
        %p374 = pneg %p138
        %p375 = pneg %p135
        %p376 = pneg %p166
        %p377 = pneg %p163
        %s378 = sand.u32 %s153, 1
        %s379 = scalar_lea.sflag [#allocation9], %s378
        %s380 = sand.u32 %s153, 1
        %s381 = smul.addr %s380, 64
        %s382 = scalar_lea.vmem [#allocation14], %s381
        %p383 = pneg %p192
        %p384 = pneg %p189
        %s385 = sand.u32 %s30, 1
        %s386 = scalar_lea.sflag [#allocation16], %s385
        %s387 = sand.u32 %s179, 1
        %s388 = smul.addr %s387, 8
        %s389 = scalar_lea.vmem [#allocation15], %s388
        %p390 = pneg %p218
        %p391 = pneg %p215
        %s392 = sand.u32 %s30, 1
        %s393 = scalar_lea.sflag [#allocation16], %s392
        %s394 = sand.u32 %s205, 1
        %s395 = smul.addr %s394, 8
        %s396 = scalar_lea.vmem [#allocation17], %s395
        %s397 = smul.u32 8, %s35
        %s398 = smul.u32 8, %s35
        %p399 = scmp.eq.s32.totalorder %s35, 0
        // Predicated region
        $region53: #{tpu_custom_call.1} parent=35 // pred_check
          %p400 = pneg %p399
        $region54: #{tpu_custom_call.1} parent=35 // pred_check_branch
          %402 = sbr.rel (%p400) target = $region56
        $region55: #{tpu_custom_call.1} parent=35 // pred_region
          // Predicated region
          $region57: #{tpu_custom_call.1} parent=55 // pred_check
            _
          $region58: #{tpu_custom_call.1} parent=55 // pred_check_branch
            %404 = sbr.rel target = $region60
          $region59: #{tpu_custom_call.1} parent=55 // pred_region
            %405 = sst [smem:[#allocation20]] [#allocation19]
            %406 = sst [smem:[#allocation21]] [#allocation18]
          $region60: #{tpu_custom_call.1} parent=55 // pred_fallthru
            _
          %408 = shalt.err (0)
          %s410 = sshll.u32 %s4, 4
          %s411 = int_to_ptr.hbm [resolvable:$true] %s410
          %s412 = sshll.u32 [#allocation2], 4
          %s413 = int_to_ptr.vmem [resolvable:$true] %s412
          %415 = dma.hbm_to_vmem [thread:$0]  %s411, 8192, %s413, [#allocation6]
          %s416 = scalar_lea.sflag [#allocation6], 1
          // Predicated region
          $region61: #{tpu_custom_call.1} parent=55 // pred_check
            _
          $region62: #{tpu_custom_call.1} parent=55 // pred_check_branch
            %418 = sbr.rel target = $region64
          $region63: #{tpu_custom_call.1} parent=55 // pred_region
            %419 = sst [smem:[#allocation20]] [#allocation23]
            %420 = sst [smem:[#allocation21]] [#allocation22]
          $region64: #{tpu_custom_call.1} parent=55 // pred_fallthru
            _
          %422 = shalt.err (0)
          %s424 = sshll.u32 %s5, 4
          %s425 = int_to_ptr.hbm [resolvable:$true] %s424
          %s426 = sshll.u32 [#allocation3], 4
          %s427 = int_to_ptr.vmem [resolvable:$true] %s426
          %429 = dma.hbm_to_vmem [thread:$0]  %s425, 8192, %s427, %s416
          %v430 = vld [vmem:[%s337] sm:$0xff]
          %431 = vst [vmem:[#allocation4] sm:$0xff] %v430
          %v432 = vld [vmem:[%s347] sm:$0xff]
          %433 = vst [vmem:[#allocation5] sm:$0xff] %v432
          %s434 = smul.u32 8, 16
          %s435 = smul.u32 %s434, 4
          %s436 = sshll.u32 %s435, 4
          %437 = dma.done [#allocation6], %s436
          %s438 = sshll.u32 %s435, 4
          %439 = dma.done %s416, %s438
        $region56: #{tpu_custom_call.1} parent=35 // pred_fallthru
          _
        %v440 = vld [vmem:[#allocation2] sm:$0xff]
        %v441 = vld [vmem:[#allocation2 + $0x8] sm:$0xff]
        %v442 = vld [vmem:[#allocation2 + $0x10] sm:$0xff]
        %v443 = vld [vmem:[#allocation2 + $0x18] sm:$0xff]
        %v444 = vld [vmem:[#allocation2 + $0x20] sm:$0xff]
        %v445 = vld [vmem:[#allocation2 + $0x28] sm:$0xff]
        %v446 = vld [vmem:[#allocation2 + $0x30] sm:$0xff]
        %v447 = vld [vmem:[#allocation2 + $0x38] sm:$0xff]
        %v448 = vld [vmem:[#allocation2 + $0x40] sm:$0xff]
        %v449 = vld [vmem:[#allocation2 + $0x48] sm:$0xff]
        %v450 = vld [vmem:[#allocation2 + $0x50] sm:$0xff]
        %v451 = vld [vmem:[#allocation2 + $0x58] sm:$0xff]
        %v452 = vld [vmem:[#allocation2 + $0x60] sm:$0xff]
        %v453 = vld [vmem:[#allocation2 + $0x68] sm:$0xff]
        %v454 = vld [vmem:[#allocation2 + $0x70] sm:$0xff]
        %v455 = vld [vmem:[#allocation2 + $0x78] sm:$0xff]
        %v456 = vld [vmem:[#allocation2 + $0x80] sm:$0xff]
        %v457 = vld [vmem:[#allocation2 + $0x88] sm:$0xff]
        %v458 = vld [vmem:[#allocation2 + $0x90] sm:$0xff]
        %v459 = vld [vmem:[#allocation2 + $0x98] sm:$0xff]
        %v460 = vld [vmem:[#allocation2 + $0xa0] sm:$0xff]
        %v461 = vld [vmem:[#allocation2 + $0xa8] sm:$0xff]
        %v462 = vld [vmem:[#allocation2 + $0xb0] sm:$0xff]
        %v463 = vld [vmem:[#allocation2 + $0xb8] sm:$0xff]
        %v464 = vld [vmem:[#allocation2 + $0xc0] sm:$0xff]
        %v465 = vld [vmem:[#allocation2 + $0xc8] sm:$0xff]
        %v466 = vld [vmem:[#allocation2 + $0xd0] sm:$0xff]
        %v467 = vld [vmem:[#allocation2 + $0xd8] sm:$0xff]
        %v468 = vld [vmem:[#allocation2 + $0xe0] sm:$0xff]
        %v469 = vld [vmem:[#allocation2 + $0xe8] sm:$0xff]
        %v470 = vld [vmem:[#allocation2 + $0xf0] sm:$0xff]
        %v471 = vld [vmem:[#allocation2 + $0xf8] sm:$0xff]
        %v472 = vld [vmem:[#allocation2 + $0x100] sm:$0xff]
        %v473 = vld [vmem:[#allocation2 + $0x108] sm:$0xff]
        %v474 = vld [vmem:[#allocation2 + $0x110] sm:$0xff]
        %v475 = vld [vmem:[#allocation2 + $0x118] sm:$0xff]
        %v476 = vld [vmem:[#allocation2 + $0x120] sm:$0xff]
        %v477 = vld [vmem:[#allocation2 + $0x128] sm:$0xff]
        %v478 = vld [vmem:[#allocation2 + $0x130] sm:$0xff]
        %v479 = vld [vmem:[#allocation2 + $0x138] sm:$0xff]
        %v480 = vld [vmem:[#allocation2 + $0x140] sm:$0xff]
        %v481 = vld [vmem:[#allocation2 + $0x148] sm:$0xff]
        %v482 = vld [vmem:[#allocation2 + $0x150] sm:$0xff]
        %v483 = vld [vmem:[#allocation2 + $0x158] sm:$0xff]
        %v484 = vld [vmem:[#allocation2 + $0x160] sm:$0xff]
        %v485 = vld [vmem:[#allocation2 + $0x168] sm:$0xff]
        %v486 = vld [vmem:[#allocation2 + $0x170] sm:$0xff]
        %v487 = vld [vmem:[#allocation2 + $0x178] sm:$0xff]
        %v488 = vld [vmem:[#allocation2 + $0x180] sm:$0xff]
        %v489 = vld [vmem:[#allocation2 + $0x188] sm:$0xff]
        %v490 = vld [vmem:[#allocation2 + $0x190] sm:$0xff]
        %v491 = vld [vmem:[#allocation2 + $0x198] sm:$0xff]
        %v492 = vld [vmem:[#allocation2 + $0x1a0] sm:$0xff]
        %v493 = vld [vmem:[#allocation2 + $0x1a8] sm:$0xff]
        %v494 = vld [vmem:[#allocation2 + $0x1b0] sm:$0xff]
        %v495 = vld [vmem:[#allocation2 + $0x1b8] sm:$0xff]
        %v496 = vld [vmem:[#allocation2 + $0x1c0] sm:$0xff]
        %v497 = vld [vmem:[#allocation2 + $0x1c8] sm:$0xff]
        %v498 = vld [vmem:[#allocation2 + $0x1d0] sm:$0xff]
        %v499 = vld [vmem:[#allocation2 + $0x1d8] sm:$0xff]
        %v500 = vld [vmem:[#allocation2 + $0x1e0] sm:$0xff]
        %v501 = vld [vmem:[#allocation2 + $0x1e8] sm:$0xff]
        %v502 = vld [vmem:[#allocation2 + $0x1f0] sm:$0xff]
        %v503 = vld [vmem:[#allocation2 + $0x1f8] sm:$0xff]
        %v504 = vld [vmem:[#allocation3] sm:$0xff]
        %v505 = vld [vmem:[#allocation3 + $0x8] sm:$0xff]
        %v506 = vld [vmem:[#allocation3 + $0x10] sm:$0xff]
        %v507 = vld [vmem:[#allocation3 + $0x18] sm:$0xff]
        %v508 = vld [vmem:[#allocation3 + $0x20] sm:$0xff]
        %v509 = vld [vmem:[#allocation3 + $0x28] sm:$0xff]
        %v510 = vld [vmem:[#allocation3 + $0x30] sm:$0xff]
        %v511 = vld [vmem:[#allocation3 + $0x38] sm:$0xff]
        %v512 = vld [vmem:[#allocation3 + $0x40] sm:$0xff]
        %v513 = vld [vmem:[#allocation3 + $0x48] sm:$0xff]
        %v514 = vld [vmem:[#allocation3 + $0x50] sm:$0xff]
        %v515 = vld [vmem:[#allocation3 + $0x58] sm:$0xff]
        %v516 = vld [vmem:[#allocation3 + $0x60] sm:$0xff]
        %v517 = vld [vmem:[#allocation3 + $0x68] sm:$0xff]
        %v518 = vld [vmem:[#allocation3 + $0x70] sm:$0xff]
        %v519 = vld [vmem:[#allocation3 + $0x78] sm:$0xff]
        %v520 = vld [vmem:[#allocation3 + $0x80] sm:$0xff]
        %v521 = vld [vmem:[#allocation3 + $0x88] sm:$0xff]
        %v522 = vld [vmem:[#allocation3 + $0x90] sm:$0xff]
        %v523 = vld [vmem:[#allocation3 + $0x98] sm:$0xff]
        %v524 = vld [vmem:[#allocation3 + $0xa0] sm:$0xff]
        %v525 = vld [vmem:[#allocation3 + $0xa8] sm:$0xff]
        %v526 = vld [vmem:[#allocation3 + $0xb0] sm:$0xff]
        %v527 = vld [vmem:[#allocation3 + $0xb8] sm:$0xff]
        %v528 = vld [vmem:[#allocation3 + $0xc0] sm:$0xff]
        %v529 = vld [vmem:[#allocation3 + $0xc8] sm:$0xff]
        %v530 = vld [vmem:[#allocation3 + $0xd0] sm:$0xff]
        %v531 = vld [vmem:[#allocation3 + $0xd8] sm:$0xff]
        %v532 = vld [vmem:[#allocation3 + $0xe0] sm:$0xff]
        %v533 = vld [vmem:[#allocation3 + $0xe8] sm:$0xff]
        %v534 = vld [vmem:[#allocation3 + $0xf0] sm:$0xff]
        %v535 = vld [vmem:[#allocation3 + $0xf8] sm:$0xff]
        %v536 = vld [vmem:[#allocation3 + $0x100] sm:$0xff]
        %v537 = vld [vmem:[#allocation3 + $0x108] sm:$0xff]
        %v538 = vld [vmem:[#allocation3 + $0x110] sm:$0xff]
        %v539 = vld [vmem:[#allocation3 + $0x118] sm:$0xff]
        %v540 = vld [vmem:[#allocation3 + $0x120] sm:$0xff]
        %v541 = vld [vmem:[#allocation3 + $0x128] sm:$0xff]
        %v542 = vld [vmem:[#allocation3 + $0x130] sm:$0xff]
        %v543 = vld [vmem:[#allocation3 + $0x138] sm:$0xff]
        %v544 = vld [vmem:[#allocation3 + $0x140] sm:$0xff]
        %v545 = vld [vmem:[#allocation3 + $0x148] sm:$0xff]
        %v546 = vld [vmem:[#allocation3 + $0x150] sm:$0xff]
        %v547 = vld [vmem:[#allocation3 + $0x158] sm:$0xff]
        %v548 = vld [vmem:[#allocation3 + $0x160] sm:$0xff]
        %v549 = vld [vmem:[#allocation3 + $0x168] sm:$0xff]
        %v550 = vld [vmem:[#allocation3 + $0x170] sm:$0xff]
        %v551 = vld [vmem:[#allocation3 + $0x178] sm:$0xff]
        %v552 = vld [vmem:[#allocation3 + $0x180] sm:$0xff]
        %v553 = vld [vmem:[#allocation3 + $0x188] sm:$0xff]
        %v554 = vld [vmem:[#allocation3 + $0x190] sm:$0xff]
        %v555 = vld [vmem:[#allocation3 + $0x198] sm:$0xff]
        %v556 = vld [vmem:[#allocation3 + $0x1a0] sm:$0xff]
        %v557 = vld [vmem:[#allocation3 + $0x1a8] sm:$0xff]
        %v558 = vld [vmem:[#allocation3 + $0x1b0] sm:$0xff]
        %v559 = vld [vmem:[#allocation3 + $0x1b8] sm:$0xff]
        %v560 = vld [vmem:[#allocation3 + $0x1c0] sm:$0xff]
        %v561 = vld [vmem:[#allocation3 + $0x1c8] sm:$0xff]
        %v562 = vld [vmem:[#allocation3 + $0x1d0] sm:$0xff]
        %v563 = vld [vmem:[#allocation3 + $0x1d8] sm:$0xff]
        %v564 = vld [vmem:[#allocation3 + $0x1e0] sm:$0xff]
        %v565 = vld [vmem:[#allocation3 + $0x1e8] sm:$0xff]
        %v566 = vld [vmem:[#allocation3 + $0x1f0] sm:$0xff]
        %v567 = vld [vmem:[#allocation3 + $0x1f8] sm:$0xff]
        %v568 = vld [vmem:[#allocation10] sm:$0xf]
        %v569 = vld [vmem:[#allocation4] sm:$0xff]
        %v570 = vld [vmem:[#allocation5] sm:$0xff]
        %s571 = smul.u32 %s35, 8
        %p572 = scmp.lt.s32.totalorder %s571, 11
        %v573 = vld [vmem:[%s322] sm:$0xff]
        %574 = vmatpush.msra.mxu0 %v564
        %575 = vmatpush.msra.mxu0 %v560
        %576 = vmatpush.msra.mxu0 %v556
        %577 = vmatpush.msra.mxu0 %v552
        %578 = vmatpush.msra.mxu0 %v548
        %579 = vmatpush.msra.mxu0 %v544
        %580 = vmatpush.msra.mxu0 %v540
        %581 = vmatpush.msra.mxu0 %v536
        %582 = vmatpush.msra.mxu0 %v532
        %583 = vmatpush.msra.mxu0 %v528
        %584 = vmatpush.msra.mxu0 %v524
        %585 = vmatpush.msra.mxu0 %v520
        %586 = vmatpush.msra.mxu0 %v516
        %587 = vmatpush.msra.mxu0 %v512
        %588 = vmatpush.msra.mxu0 %v508
        %589 = vmatpush.msra.mxu0 %v504
        %590 = vmatmul.f32.gmra.mxu0 %v569
        %v591 = vpop.f32.mrf.mxu0
        %v592 = vadd.f32 0.0, %v591
        %593 = vdwg.mxu0
        %594 = vmatpush.msra.mxu0 %v565
        %595 = vmatpush.msra.mxu0 %v561
        %596 = vmatpush.msra.mxu0 %v557
        %597 = vmatpush.msra.mxu0 %v553
        %598 = vmatpush.msra.mxu0 %v549
        %599 = vmatpush.msra.mxu0 %v545
        %600 = vmatpush.msra.mxu0 %v541
        %601 = vmatpush.msra.mxu0 %v537
        %602 = vmatpush.msra.mxu0 %v533
        %603 = vmatpush.msra.mxu0 %v529
        %604 = vmatpush.msra.mxu0 %v525
        %605 = vmatpush.msra.mxu0 %v521
        %606 = vmatpush.msra.mxu0 %v517
        %607 = vmatpush.msra.mxu0 %v513
        %608 = vmatpush.msra.mxu0 %v509
        %609 = vmatpush.msra.mxu0 %v505
        %610 = vmatmul.f32.gmra.mxu0 %v569
        %v611 = vpop.f32.mrf.mxu0
        %v612 = vadd.f32 0.0, %v611
        %613 = vdwg.mxu0
        %614 = vmatpush.msra.mxu0 %v566
        %615 = vmatpush.msra.mxu0 %v562
        %616 = vmatpush.msra.mxu0 %v558
        %617 = vmatpush.msra.mxu0 %v554
        %618 = vmatpush.msra.mxu0 %v550
        %619 = vmatpush.msra.mxu0 %v546
        %620 = vmatpush.msra.mxu0 %v542
        %621 = vmatpush.msra.mxu0 %v538
        %622 = vmatpush.msra.mxu0 %v534
        %623 = vmatpush.msra.mxu0 %v530
        %624 = vmatpush.msra.mxu0 %v526
        %625 = vmatpush.msra.mxu0 %v522
        %626 = vmatpush.msra.mxu0 %v518
        %627 = vmatpush.msra.mxu0 %v514
        %628 = vmatpush.msra.mxu0 %v510
        %629 = vmatpush.msra.mxu0 %v506
        %630 = vmatmul.f32.gmra.mxu0 %v569
        %v631 = vpop.f32.mrf.mxu0
        %v632 = vadd.f32 0.0, %v631
        %633 = vdwg.mxu0
        %634 = vmatpush.msra.mxu0 %v567
        %635 = vmatpush.msra.mxu0 %v563
        %636 = vmatpush.msra.mxu0 %v559
        %637 = vmatpush.msra.mxu0 %v555
        %638 = vmatpush.msra.mxu0 %v551
        %639 = vmatpush.msra.mxu0 %v547
        %640 = vmatpush.msra.mxu0 %v543
        %641 = vmatpush.msra.mxu0 %v539
        %642 = vmatpush.msra.mxu0 %v535
        %643 = vmatpush.msra.mxu0 %v531
        %644 = vmatpush.msra.mxu0 %v527
        %645 = vmatpush.msra.mxu0 %v523
        %646 = vmatpush.msra.mxu0 %v519
        %647 = vmatpush.msra.mxu0 %v515
        %648 = vmatpush.msra.mxu0 %v511
        %649 = vmatpush.msra.mxu0 %v507
        %650 = vmatmul.f32.gmra.mxu0 %v569
        %v651 = vpop.f32.mrf.mxu0
        %v652 = vadd.f32 0.0, %v651
        %653 = vdwg.mxu0
        %654 = vmatpush.msra.mxu0 %v500
        %655 = vmatpush.msra.mxu0 %v496
        %656 = vmatpush.msra.mxu0 %v492
        %657 = vmatpush.msra.mxu0 %v488
        %658 = vmatpush.msra.mxu0 %v484
        %659 = vmatpush.msra.mxu0 %v480
        %660 = vmatpush.msra.mxu0 %v476
        %661 = vmatpush.msra.mxu0 %v472
        %662 = vmatpush.msra.mxu0 %v468
        %663 = vmatpush.msra.mxu0 %v464
        %664 = vmatpush.msra.mxu0 %v460
        %665 = vmatpush.msra.mxu0 %v456
        %666 = vmatpush.msra.mxu0 %v452
        %667 = vmatpush.msra.mxu0 %v448
        %668 = vmatpush.msra.mxu0 %v444
        %669 = vmatpush.msra.mxu0 %v440
        %670 = vmatmul.f32.gmra.mxu0 %v573
        %v671 = vpop.f32.mrf.mxu0
        %v672 = vadd.f32 %v592, %v671
        %673 = vdwg.mxu0
        %674 = vmatpush.msra.mxu0 %v501
        %675 = vmatpush.msra.mxu0 %v497
        %676 = vmatpush.msra.mxu0 %v493
        %677 = vmatpush.msra.mxu0 %v489
        %678 = vmatpush.msra.mxu0 %v485
        %679 = vmatpush.msra.mxu0 %v481
        %680 = vmatpush.msra.mxu0 %v477
        %681 = vmatpush.msra.mxu0 %v473
        %682 = vmatpush.msra.mxu0 %v469
        %683 = vmatpush.msra.mxu0 %v465
        %684 = vmatpush.msra.mxu0 %v461
        %685 = vmatpush.msra.mxu0 %v457
        %686 = vmatpush.msra.mxu0 %v453
        %687 = vmatpush.msra.mxu0 %v449
        %688 = vmatpush.msra.mxu0 %v445
        %689 = vmatpush.msra.mxu0 %v441
        %690 = vmatmul.f32.gmra.mxu0 %v573
        %v691 = vpop.f32.mrf.mxu0
        %v692 = vadd.f32 %v612, %v691
        %693 = vdwg.mxu0
        %694 = vmatpush.msra.mxu0 %v502
        %695 = vmatpush.msra.mxu0 %v498
        %696 = vmatpush.msra.mxu0 %v494
        %697 = vmatpush.msra.mxu0 %v490
        %698 = vmatpush.msra.mxu0 %v486
        %699 = vmatpush.msra.mxu0 %v482
        %700 = vmatpush.msra.mxu0 %v478
        %701 = vmatpush.msra.mxu0 %v474
        %702 = vmatpush.msra.mxu0 %v470
        %703 = vmatpush.msra.mxu0 %v466
        %704 = vmatpush.msra.mxu0 %v462
        %705 = vmatpush.msra.mxu0 %v458
        %706 = vmatpush.msra.mxu0 %v454
        %707 = vmatpush.msra.mxu0 %v450
        %708 = vmatpush.msra.mxu0 %v446
        %709 = vmatpush.msra.mxu0 %v442
        %710 = vmatmul.f32.gmra.mxu0 %v573
        %v711 = vpop.f32.mrf.mxu0
        %v712 = vadd.f32 %v632, %v711
        %713 = vdwg.mxu0
        %714 = vmatpush.msra.mxu0 %v503
        %715 = vmatpush.msra.mxu0 %v499
        %716 = vmatpush.msra.mxu0 %v495
        %717 = vmatpush.msra.mxu0 %v491
        %718 = vmatpush.msra.mxu0 %v487
        %719 = vmatpush.msra.mxu0 %v483
        %720 = vmatpush.msra.mxu0 %v479
        %721 = vmatpush.msra.mxu0 %v475
        %722 = vmatpush.msra.mxu0 %v471
        %723 = vmatpush.msra.mxu0 %v467
        %724 = vmatpush.msra.mxu0 %v463
        %725 = vmatpush.msra.mxu0 %v459
        %726 = vmatpush.msra.mxu0 %v455
        %727 = vmatpush.msra.mxu0 %v451
        %728 = vmatpush.msra.mxu0 %v447
        %729 = vmatpush.msra.mxu0 %v443
        %730 = vmatmul.f32.gmra.mxu0 %v573
        %v731 = vpop.f32.mrf.mxu0
        %v732 = vadd.f32 %v652, %v731
        %733 = vdwg.mxu0
        %v735 = vperm.slane %v568, 0
        %v736 = vperm.slane %v568, 1
        %v737 = vperm.slane %v568, 2
        %v738 = vperm.slane %v568, 3
        %v743 = vadd.f32 %v672, %v735
        %v744 = vadd.f32 %v692, %v736
        %v745 = vadd.f32 %v712, %v737
        %v746 = vadd.f32 %v732, %v738
        %v747 = vxor.u32 %v743, 2147483648
        %v748 = vmul.f32 %v747, 1.442695
        %v749 = vpow.pop %v748
        %v750 = vadd.f32 %v749, 1.0
        %v751 = vrcp.pop %v750
        %v752 = vmul.f32 %v750, %v751
        %v753 = vsub.f32 1.0, %v752
        %v754 = vmul.f32 %v751, %v753
        %v755 = vadd.f32 %v751, %v754
        %vm756 = vweird.f32 %v750
        %vm757 = vweird.f32 %v751
        %vm758 = vmor %vm756, %vm757
        %v759 = vsel %vm758, %v751, %v755
        %v760 = vand.u32 2147483647, %v750
        %vm761 = vcmp.eq.f32.partialorder %v760, 8.507059e+37
        %v762 = vand.u32 %v750, 2147483648
        %v763 = vor.u32 1.1754944e-38, %v762
        %v764 = vsel %vm761, %v763, %v759
        %v765 = vmul.f32 1.0, %v764
        %v766 = vxor.u32 %v744, 2147483648
        %v767 = vmul.f32 %v766, 1.442695
        %v768 = vpow.pop %v767
        %v769 = vadd.f32 %v768, 1.0
        %v770 = vrcp.pop %v769
        %v771 = vmul.f32 %v769, %v770
        %v772 = vsub.f32 1.0, %v771
        %v773 = vmul.f32 %v770, %v772
        %v774 = vadd.f32 %v770, %v773
        %vm775 = vweird.f32 %v769
        %vm776 = vweird.f32 %v770
        %vm777 = vmor %vm775, %vm776
        %v778 = vsel %vm777, %v770, %v774
        %v779 = vand.u32 2147483647, %v769
        %vm780 = vcmp.eq.f32.partialorder %v779, 8.507059e+37
        %v781 = vand.u32 %v769, 2147483648
        %v782 = vor.u32 1.1754944e-38, %v781
        %v783 = vsel %vm780, %v782, %v778
        %v784 = vmul.f32 1.0, %v783
        %v785 = vtanh.pop %v745
        %v786 = vxor.u32 %v746, 2147483648
        %v787 = vmul.f32 %v786, 1.442695
        %v788 = vpow.pop %v787
        %v789 = vadd.f32 %v788, 1.0
        %v790 = vrcp.pop %v789
        %v791 = vmul.f32 %v789, %v790
        %v792 = vsub.f32 1.0, %v791
        %v793 = vmul.f32 %v790, %v792
        %v794 = vadd.f32 %v790, %v793
        %vm795 = vweird.f32 %v789
        %vm796 = vweird.f32 %v790
        %vm797 = vmor %vm795, %vm796
        %v798 = vsel %vm797, %v790, %v794
        %v799 = vand.u32 2147483647, %v789
        %vm800 = vcmp.eq.f32.partialorder %v799, 8.507059e+37
        %v801 = vand.u32 %v789, 2147483648
        %v802 = vor.u32 1.1754944e-38, %v801
        %v803 = vsel %vm800, %v802, %v798
        %v804 = vmul.f32 1.0, %v803
        %v805 = vmul.f32 %v784, %v570
        %v806 = vmul.f32 %v765, %v785
        %v807 = vadd.f32 %v805, %v806
        %v808 = vtanh.pop %v807
        %v809 = vmul.f32 %v804, %v808
        %s810 = scalar_select %p572, 1, 0
        %v811 = vstv %s810
        %vm812 = vcmp.eq.s32.totalorder %v811, 1
        %v813 = vsel %vm812, %v807, %v570
        %v814 = vsel %vm812, %v809, %v569
        %815 = vst [vmem:[%s382] sm:$0xff] %v814
        %s816 = sadd.s32 %s571, 1
        %p817 = scmp.lt.s32.totalorder %s816, 11
        %s818 = scalar_lea.vmem %s322, 8 [#allocation7]
        %v819 = vld [vmem:[%s818] sm:$0xff]
        %820 = vmatpush.msra.mxu0 %v564
        %821 = vmatpush.msra.mxu0 %v560
        %822 = vmatpush.msra.mxu0 %v556
        %823 = vmatpush.msra.mxu0 %v552
        %824 = vmatpush.msra.mxu0 %v548
        %825 = vmatpush.msra.mxu0 %v544
        %826 = vmatpush.msra.mxu0 %v540
        %827 = vmatpush.msra.mxu0 %v536
        %828 = vmatpush.msra.mxu0 %v532
        %829 = vmatpush.msra.mxu0 %v528
        %830 = vmatpush.msra.mxu0 %v524
        %831 = vmatpush.msra.mxu0 %v520
        %832 = vmatpush.msra.mxu0 %v516
        %833 = vmatpush.msra.mxu0 %v512
        %834 = vmatpush.msra.mxu0 %v508
        %835 = vmatpush.msra.mxu0 %v504
        %836 = vmatmul.f32.gmra.mxu0 %v814
        %v837 = vpop.f32.mrf.mxu0
        %v838 = vadd.f32 0.0, %v837
        %839 = vdwg.mxu0
        %840 = vmatpush.msra.mxu0 %v565
        %841 = vmatpush.msra.mxu0 %v561
        %842 = vmatpush.msra.mxu0 %v557
        %843 = vmatpush.msra.mxu0 %v553
        %844 = vmatpush.msra.mxu0 %v549
        %845 = vmatpush.msra.mxu0 %v545
        %846 = vmatpush.msra.mxu0 %v541
        %847 = vmatpush.msra.mxu0 %v537
        %848 = vmatpush.msra.mxu0 %v533
        %849 = vmatpush.msra.mxu0 %v529
        %850 = vmatpush.msra.mxu0 %v525
        %851 = vmatpush.msra.mxu0 %v521
        %852 = vmatpush.msra.mxu0 %v517
        %853 = vmatpush.msra.mxu0 %v513
        %854 = vmatpush.msra.mxu0 %v509
        %855 = vmatpush.msra.mxu0 %v505
        %856 = vmatmul.f32.gmra.mxu0 %v814
        %v857 = vpop.f32.mrf.mxu0
        %v858 = vadd.f32 0.0, %v857
        %859 = vdwg.mxu0
        %860 = vmatpush.msra.mxu0 %v566
        %861 = vmatpush.msra.mxu0 %v562
        %862 = vmatpush.msra.mxu0 %v558
        %863 = vmatpush.msra.mxu0 %v554
        %864 = vmatpush.msra.mxu0 %v550
        %865 = vmatpush.msra.mxu0 %v546
        %866 = vmatpush.msra.mxu0 %v542
        %867 = vmatpush.msra.mxu0 %v538
        %868 = vmatpush.msra.mxu0 %v534
        %869 = vmatpush.msra.mxu0 %v530
        %870 = vmatpush.msra.mxu0 %v526
        %871 = vmatpush.msra.mxu0 %v522
        %872 = vmatpush.msra.mxu0 %v518
        %873 = vmatpush.msra.mxu0 %v514
        %874 = vmatpush.msra.mxu0 %v510
        %875 = vmatpush.msra.mxu0 %v506
        %876 = vmatmul.f32.gmra.mxu0 %v814
        %v877 = vpop.f32.mrf.mxu0
        %v878 = vadd.f32 0.0, %v877
        %879 = vdwg.mxu0
        %880 = vmatpush.msra.mxu0 %v567
        %881 = vmatpush.msra.mxu0 %v563
        %882 = vmatpush.msra.mxu0 %v559
        %883 = vmatpush.msra.mxu0 %v555
        %884 = vmatpush.msra.mxu0 %v551
        %885 = vmatpush.msra.mxu0 %v547
        %886 = vmatpush.msra.mxu0 %v543
        %887 = vmatpush.msra.mxu0 %v539
        %888 = vmatpush.msra.mxu0 %v535
        %889 = vmatpush.msra.mxu0 %v531
        %890 = vmatpush.msra.mxu0 %v527
        %891 = vmatpush.msra.mxu0 %v523
        %892 = vmatpush.msra.mxu0 %v519
        %893 = vmatpush.msra.mxu0 %v515
        %894 = vmatpush.msra.mxu0 %v511
        %895 = vmatpush.msra.mxu0 %v507
        %896 = vmatmul.f32.gmra.mxu0 %v814
        %v897 = vpop.f32.mrf.mxu0
        %v898 = vadd.f32 0.0, %v897
        %899 = vdwg.mxu0
        %900 = vmatpush.msra.mxu0 %v500
        %901 = vmatpush.msra.mxu0 %v496
        %902 = vmatpush.msra.mxu0 %v492
        %903 = vmatpush.msra.mxu0 %v488
        %904 = vmatpush.msra.mxu0 %v484
        %905 = vmatpush.msra.mxu0 %v480
        %906 = vmatpush.msra.mxu0 %v476
        %907 = vmatpush.msra.mxu0 %v472
        %908 = vmatpush.msra.mxu0 %v468
        %909 = vmatpush.msra.mxu0 %v464
        %910 = vmatpush.msra.mxu0 %v460
        %911 = vmatpush.msra.mxu0 %v456
        %912 = vmatpush.msra.mxu0 %v452
        %913 = vmatpush.msra.mxu0 %v448
        %914 = vmatpush.msra.mxu0 %v444
        %915 = vmatpush.msra.mxu0 %v440
        %916 = vmatmul.f32.gmra.mxu0 %v819
        %v917 = vpop.f32.mrf.mxu0
        %v918 = vadd.f32 %v838, %v917
        %919 = vdwg.mxu0
        %920 = vmatpush.msra.mxu0 %v501
        %921 = vmatpush.msra.mxu0 %v497
        %922 = vmatpush.msra.mxu0 %v493
        %923 = vmatpush.msra.mxu0 %v489
        %924 = vmatpush.msra.mxu0 %v485
        %925 = vmatpush.msra.mxu0 %v481
        %926 = vmatpush.msra.mxu0 %v477
        %927 = vmatpush.msra.mxu0 %v473
        %928 = vmatpush.msra.mxu0 %v469
        %929 = vmatpush.msra.mxu0 %v465
        %930 = vmatpush.msra.mxu0 %v461
        %931 = vmatpush.msra.mxu0 %v457
        %932 = vmatpush.msra.mxu0 %v453
        %933 = vmatpush.msra.mxu0 %v449
        %934 = vmatpush.msra.mxu0 %v445
        %935 = vmatpush.msra.mxu0 %v441
        %936 = vmatmul.f32.gmra.mxu0 %v819
        %v937 = vpop.f32.mrf.mxu0
        %v938 = vadd.f32 %v858, %v937
        %939 = vdwg.mxu0
        %940 = vmatpush.msra.mxu0 %v502
        %941 = vmatpush.msra.mxu0 %v498
        %942 = vmatpush.msra.mxu0 %v494
        %943 = vmatpush.msra.mxu0 %v490
        %944 = vmatpush.msra.mxu0 %v486
        %945 = vmatpush.msra.mxu0 %v482
        %946 = vmatpush.msra.mxu0 %v478
        %947 = vmatpush.msra.mxu0 %v474
        %948 = vmatpush.msra.mxu0 %v470
        %949 = vmatpush.msra.mxu0 %v466
        %950 = vmatpush.msra.mxu0 %v462
        %951 = vmatpush.msra.mxu0 %v458
        %952 = vmatpush.msra.mxu0 %v454
        %953 = vmatpush.msra.mxu0 %v450
        %954 = vmatpush.msra.mxu0 %v446
        %955 = vmatpush.msra.mxu0 %v442
        %956 = vmatmul.f32.gmra.mxu0 %v819
        %v957 = vpop.f32.mrf.mxu0
        %v958 = vadd.f32 %v878, %v957
        %959 = vdwg.mxu0
        %960 = vmatpush.msra.mxu0 %v503
        %961 = vmatpush.msra.mxu0 %v499
        %962 = vmatpush.msra.mxu0 %v495
        %963 = vmatpush.msra.mxu0 %v491
        %964 = vmatpush.msra.mxu0 %v487
        %965 = vmatpush.msra.mxu0 %v483
        %966 = vmatpush.msra.mxu0 %v479
        %967 = vmatpush.msra.mxu0 %v475
        %968 = vmatpush.msra.mxu0 %v471
        %969 = vmatpush.msra.mxu0 %v467
        %970 = vmatpush.msra.mxu0 %v463
        %971 = vmatpush.msra.mxu0 %v459
        %972 = vmatpush.msra.mxu0 %v455
        %973 = vmatpush.msra.mxu0 %v451
        %974 = vmatpush.msra.mxu0 %v447
        %975 = vmatpush.msra.mxu0 %v443
        %976 = vmatmul.f32.gmra.mxu0 %v819
        %v977 = vpop.f32.mrf.mxu0
        %v978 = vadd.f32 %v898, %v977
        %979 = vdwg.mxu0
        %v980 = vadd.f32 %v918, %v735
        %v981 = vadd.f32 %v938, %v736
        %v982 = vadd.f32 %v958, %v737
        %v983 = vadd.f32 %v978, %v738
        %v984 = vxor.u32 %v980, 2147483648
        %v985 = vmul.f32 %v984, 1.442695
        %v986 = vpow.pop %v985
        %v987 = vadd.f32 %v986, 1.0
        %v988 = vrcp.pop %v987
        %v989 = vmul.f32 %v987, %v988
        %v990 = vsub.f32 1.0, %v989
        %v991 = vmul.f32 %v988, %v990
        %v992 = vadd.f32 %v988, %v991
        %vm993 = vweird.f32 %v987
        %vm994 = vweird.f32 %v988
        %vm995 = vmor %vm993, %vm994
        %v996 = vsel %vm995, %v988, %v992
        %v997 = vand.u32 2147483647, %v987
        %vm998 = vcmp.eq.f32.partialorder %v997, 8.507059e+37
        %v999 = vand.u32 %v987, 2147483648
        %v1000 = vor.u32 1.1754944e-38, %v999
        %v1001 = vsel %vm998, %v1000, %v996
        %v1002 = vmul.f32 1.0, %v1001
        %v1003 = vxor.u32 %v981, 2147483648
        %v1004 = vmul.f32 %v1003, 1.442695
        %v1005 = vpow.pop %v1004
        %v1006 = vadd.f32 %v1005, 1.0
        %v1007 = vrcp.pop %v1006
        %v1008 = vmul.f32 %v1006, %v1007
        %v1009 = vsub.f32 1.0, %v1008
        %v1010 = vmul.f32 %v1007, %v1009
        %v1011 = vadd.f32 %v1007, %v1010
        %vm1012 = vweird.f32 %v1006
        %vm1013 = vweird.f32 %v1007
        %vm1014 = vmor %vm1012, %vm1013
        %v1015 = vsel %vm1014, %v1007, %v1011
        %v1016 = vand.u32 2147483647, %v1006
        %vm1017 = vcmp.eq.f32.partialorder %v1016, 8.507059e+37
        %v1018 = vand.u32 %v1006, 2147483648
        %v1019 = vor.u32 1.1754944e-38, %v1018
        %v1020 = vsel %vm1017, %v1019, %v1015
        %v1021 = vmul.f32 1.0, %v1020
        %v1022 = vtanh.pop %v982
        %v1023 = vxor.u32 %v983, 2147483648
        %v1024 = vmul.f32 %v1023, 1.442695
        %v1025 = vpow.pop %v1024
        %v1026 = vadd.f32 %v1025, 1.0
        %v1027 = vrcp.pop %v1026
        %v1028 = vmul.f32 %v1026, %v1027
        %v1029 = vsub.f32 1.0, %v1028
        %v1030 = vmul.f32 %v1027, %v1029
        %v1031 = vadd.f32 %v1027, %v1030
        %vm1032 = vweird.f32 %v1026
        %vm1033 = vweird.f32 %v1027
        %vm1034 = vmor %vm1032, %vm1033
        %v1035 = vsel %vm1034, %v1027, %v1031
        %v1036 = vand.u32 2147483647, %v1026
        %vm1037 = vcmp.eq.f32.partialorder %v1036, 8.507059e+37
        %v1038 = vand.u32 %v1026, 2147483648
        %v1039 = vor.u32 1.1754944e-38, %v1038
        %v1040 = vsel %vm1037, %v1039, %v1035
        %v1041 = vmul.f32 1.0, %v1040
        %v1042 = vmul.f32 %v1021, %v813
        %v1043 = vmul.f32 %v1002, %v1022
        %v1044 = vadd.f32 %v1042, %v1043
        %v1045 = vtanh.pop %v1044
        %v1046 = vmul.f32 %v1041, %v1045
        %s1047 = scalar_select %p817, 1, 0
        %v1048 = vstv %s1047
        %vm1049 = vcmp.eq.s32.totalorder %v1048, 1
        %v1050 = vsel %vm1049, %v1044, %v813
        %v1051 = vsel %vm1049, %v1046, %v814
        %s1052 = scalar_lea.vmem %s382, 8 [#allocation14]
        %1053 = vst [vmem:[%s1052] sm:$0xff] %v1051
        %s1054 = sadd.s32 %s571, 2
        %p1055 = scmp.lt.s32.totalorder %s1054, 11
        %s1056 = scalar_lea.vmem %s322, 16 [#allocation7]
        %v1057 = vld [vmem:[%s1056] sm:$0xff]
        %1058 = vmatpush.msra.mxu0 %v564
        %1059 = vmatpush.msra.mxu0 %v560
        %1060 = vmatpush.msra.mxu0 %v556
        %1061 = vmatpush.msra.mxu0 %v552
        %1062 = vmatpush.msra.mxu0 %v548
        %1063 = vmatpush.msra.mxu0 %v544
        %1064 = vmatpush.msra.mxu0 %v540
        %1065 = vmatpush.msra.mxu0 %v536
        %1066 = vmatpush.msra.mxu0 %v532
        %1067 = vmatpush.msra.mxu0 %v528
        %1068 = vmatpush.msra.mxu0 %v524
        %1069 = vmatpush.msra.mxu0 %v520
        %1070 = vmatpush.msra.mxu0 %v516
        %1071 = vmatpush.msra.mxu0 %v512
        %1072 = vmatpush.msra.mxu0 %v508
        %1073 = vmatpush.msra.mxu0 %v504
        %1074 = vmatmul.f32.gmra.mxu0 %v1051
        %v1075 = vpop.f32.mrf.mxu0
        %v1076 = vadd.f32 0.0, %v1075
        %1077 = vdwg.mxu0
        %1078 = vmatpush.msra.mxu0 %v565
        %1079 = vmatpush.msra.mxu0 %v561
        %1080 = vmatpush.msra.mxu0 %v557
        %1081 = vmatpush.msra.mxu0 %v553
        %1082 = vmatpush.msra.mxu0 %v549
        %1083 = vmatpush.msra.mxu0 %v545
        %1084 = vmatpush.msra.mxu0 %v541
        %1085 = vmatpush.msra.mxu0 %v537
        %1086 = vmatpush.msra.mxu0 %v533
        %1087 = vmatpush.msra.mxu0 %v529
        %1088 = vmatpush.msra.mxu0 %v525
        %1089 = vmatpush.msra.mxu0 %v521
        %1090 = vmatpush.msra.mxu0 %v517
        %1091 = vmatpush.msra.mxu0 %v513
        %1092 = vmatpush.msra.mxu0 %v509
        %1093 = vmatpush.msra.mxu0 %v505
        %1094 = vmatmul.f32.gmra.mxu0 %v1051
        %v1095 = vpop.f32.mrf.mxu0
        %v1096 = vadd.f32 0.0, %v1095
        %1097 = vdwg.mxu0
        %1098 = vmatpush.msra.mxu0 %v566
        %1099 = vmatpush.msra.mxu0 %v562
        %1100 = vmatpush.msra.mxu0 %v558
        %1101 = vmatpush.msra.mxu0 %v554
        %1102 = vmatpush.msra.mxu0 %v550
        %1103 = vmatpush.msra.mxu0 %v546
        %1104 = vmatpush.msra.mxu0 %v542
        %1105 = vmatpush.msra.mxu0 %v538
        %1106 = vmatpush.msra.mxu0 %v534
        %1107 = vmatpush.msra.mxu0 %v530
        %1108 = vmatpush.msra.mxu0 %v526
        %1109 = vmatpush.msra.mxu0 %v522
        %1110 = vmatpush.msra.mxu0 %v518
        %1111 = vmatpush.msra.mxu0 %v514
        %1112 = vmatpush.msra.mxu0 %v510
        %1113 = vmatpush.msra.mxu0 %v506
        %1114 = vmatmul.f32.gmra.mxu0 %v1051
        %v1115 = vpop.f32.mrf.mxu0
        %v1116 = vadd.f32 0.0, %v1115
        %1117 = vdwg.mxu0
        %1118 = vmatpush.msra.mxu0 %v567
        %1119 = vmatpush.msra.mxu0 %v563
        %1120 = vmatpush.msra.mxu0 %v559
        %1121 = vmatpush.msra.mxu0 %v555
        %1122 = vmatpush.msra.mxu0 %v551
        %1123 = vmatpush.msra.mxu0 %v547
        %1124 = vmatpush.msra.mxu0 %v543
        %1125 = vmatpush.msra.mxu0 %v539
        %1126 = vmatpush.msra.mxu0 %v535
        %1127 = vmatpush.msra.mxu0 %v531
        %1128 = vmatpush.msra.mxu0 %v527
        %1129 = vmatpush.msra.mxu0 %v523
        %1130 = vmatpush.msra.mxu0 %v519
        %1131 = vmatpush.msra.mxu0 %v515
        %1132 = vmatpush.msra.mxu0 %v511
        %1133 = vmatpush.msra.mxu0 %v507
        %1134 = vmatmul.f32.gmra.mxu0 %v1051
        %v1135 = vpop.f32.mrf.mxu0
        %v1136 = vadd.f32 0.0, %v1135
        %1137 = vdwg.mxu0
        %1138 = vmatpush.msra.mxu0 %v500
        %1139 = vmatpush.msra.mxu0 %v496
        %1140 = vmatpush.msra.mxu0 %v492
        %1141 = vmatpush.msra.mxu0 %v488
        %1142 = vmatpush.msra.mxu0 %v484
        %1143 = vmatpush.msra.mxu0 %v480
        %1144 = vmatpush.msra.mxu0 %v476
        %1145 = vmatpush.msra.mxu0 %v472
        %1146 = vmatpush.msra.mxu0 %v468
        %1147 = vmatpush.msra.mxu0 %v464
        %1148 = vmatpush.msra.mxu0 %v460
        %1149 = vmatpush.msra.mxu0 %v456
        %1150 = vmatpush.msra.mxu0 %v452
        %1151 = vmatpush.msra.mxu0 %v448
        %1152 = vmatpush.msra.mxu0 %v444
        %1153 = vmatpush.msra.mxu0 %v440
        %1154 = vmatmul.f32.gmra.mxu0 %v1057
        %v1155 = vpop.f32.mrf.mxu0
        %v1156 = vadd.f32 %v1076, %v1155
        %1157 = vdwg.mxu0
        %1158 = vmatpush.msra.mxu0 %v501
        %1159 = vmatpush.msra.mxu0 %v497
        %1160 = vmatpush.msra.mxu0 %v493
        %1161 = vmatpush.msra.mxu0 %v489
        %1162 = vmatpush.msra.mxu0 %v485
        %1163 = vmatpush.msra.mxu0 %v481
        %1164 = vmatpush.msra.mxu0 %v477
        %1165 = vmatpush.msra.mxu0 %v473
        %1166 = vmatpush.msra.mxu0 %v469
        %1167 = vmatpush.msra.mxu0 %v465
        %1168 = vmatpush.msra.mxu0 %v461
        %1169 = vmatpush.msra.mxu0 %v457
        %1170 = vmatpush.msra.mxu0 %v453
        %1171 = vmatpush.msra.mxu0 %v449
        %1172 = vmatpush.msra.mxu0 %v445
        %1173 = vmatpush.msra.mxu0 %v441
        %1174 = vmatmul.f32.gmra.mxu0 %v1057
        %v1175 = vpop.f32.mrf.mxu0
        %v1176 = vadd.f32 %v1096, %v1175
        %1177 = vdwg.mxu0
        %1178 = vmatpush.msra.mxu0 %v502
        %1179 = vmatpush.msra.mxu0 %v498
        %1180 = vmatpush.msra.mxu0 %v494
        %1181 = vmatpush.msra.mxu0 %v490
        %1182 = vmatpush.msra.mxu0 %v486
        %1183 = vmatpush.msra.mxu0 %v482
        %1184 = vmatpush.msra.mxu0 %v478
        %1185 = vmatpush.msra.mxu0 %v474
        %1186 = vmatpush.msra.mxu0 %v470
        %1187 = vmatpush.msra.mxu0 %v466
        %1188 = vmatpush.msra.mxu0 %v462
        %1189 = vmatpush.msra.mxu0 %v458
        %1190 = vmatpush.msra.mxu0 %v454
        %1191 = vmatpush.msra.mxu0 %v450
        %1192 = vmatpush.msra.mxu0 %v446
        %1193 = vmatpush.msra.mxu0 %v442
        %1194 = vmatmul.f32.gmra.mxu0 %v1057
        %v1195 = vpop.f32.mrf.mxu0
        %v1196 = vadd.f32 %v1116, %v1195
        %1197 = vdwg.mxu0
        %1198 = vmatpush.msra.mxu0 %v503
        %1199 = vmatpush.msra.mxu0 %v499
        %1200 = vmatpush.msra.mxu0 %v495
        %1201 = vmatpush.msra.mxu0 %v491
        %1202 = vmatpush.msra.mxu0 %v487
        %1203 = vmatpush.msra.mxu0 %v483
        %1204 = vmatpush.msra.mxu0 %v479
        %1205 = vmatpush.msra.mxu0 %v475
        %1206 = vmatpush.msra.mxu0 %v471
        %1207 = vmatpush.msra.mxu0 %v467
        %1208 = vmatpush.msra.mxu0 %v463
        %1209 = vmatpush.msra.mxu0 %v459
        %1210 = vmatpush.msra.mxu0 %v455
        %1211 = vmatpush.msra.mxu0 %v451
        %1212 = vmatpush.msra.mxu0 %v447
        %1213 = vmatpush.msra.mxu0 %v443
        %1214 = vmatmul.f32.gmra.mxu0 %v1057
        %v1215 = vpop.f32.mrf.mxu0
        %v1216 = vadd.f32 %v1136, %v1215
        %1217 = vdwg.mxu0
        %v1218 = vadd.f32 %v1156, %v735
        %v1219 = vadd.f32 %v1176, %v736
        %v1220 = vadd.f32 %v1196, %v737
        %v1221 = vadd.f32 %v1216, %v738
        %v1222 = vxor.u32 %v1218, 2147483648
        %v1223 = vmul.f32 %v1222, 1.442695
        %v1224 = vpow.pop %v1223
        %v1225 = vadd.f32 %v1224, 1.0
        %v1226 = vrcp.pop %v1225
        %v1227 = vmul.f32 %v1225, %v1226
        %v1228 = vsub.f32 1.0, %v1227
        %v1229 = vmul.f32 %v1226, %v1228
        %v1230 = vadd.f32 %v1226, %v1229
        %vm1231 = vweird.f32 %v1225
        %vm1232 = vweird.f32 %v1226
        %vm1233 = vmor %vm1231, %vm1232
        %v1234 = vsel %vm1233, %v1226, %v1230
        %v1235 = vand.u32 2147483647, %v1225
        %vm1236 = vcmp.eq.f32.partialorder %v1235, 8.507059e+37
        %v1237 = vand.u32 %v1225, 2147483648
        %v1238 = vor.u32 1.1754944e-38, %v1237
        %v1239 = vsel %vm1236, %v1238, %v1234
        %v1240 = vmul.f32 1.0, %v1239
        %v1241 = vxor.u32 %v1219, 2147483648
        %v1242 = vmul.f32 %v1241, 1.442695
        %v1243 = vpow.pop %v1242
        %v1244 = vadd.f32 %v1243, 1.0
        %v1245 = vrcp.pop %v1244
        %v1246 = vmul.f32 %v1244, %v1245
        %v1247 = vsub.f32 1.0, %v1246
        %v1248 = vmul.f32 %v1245, %v1247
        %v1249 = vadd.f32 %v1245, %v1248
        %vm1250 = vweird.f32 %v1244
        %vm1251 = vweird.f32 %v1245
        %vm1252 = vmor %vm1250, %vm1251
        %v1253 = vsel %vm1252, %v1245, %v1249
        %v1254 = vand.u32 2147483647, %v1244
        %vm1255 = vcmp.eq.f32.partialorder %v1254, 8.507059e+37
        %v1256 = vand.u32 %v1244, 2147483648
        %v1257 = vor.u32 1.1754944e-38, %v1256
        %v1258 = vsel %vm1255, %v1257, %v1253
        %v1259 = vmul.f32 1.0, %v1258
        %v1260 = vtanh.pop %v1220
        %v1261 = vxor.u32 %v1221, 2147483648
        %v1262 = vmul.f32 %v1261, 1.442695
        %v1263 = vpow.pop %v1262
        %v1264 = vadd.f32 %v1263, 1.0
        %v1265 = vrcp.pop %v1264
        %v1266 = vmul.f32 %v1264, %v1265
        %v1267 = vsub.f32 1.0, %v1266
        %v1268 = vmul.f32 %v1265, %v1267
        %v1269 = vadd.f32 %v1265, %v1268
        %vm1270 = vweird.f32 %v1264
        %vm1271 = vweird.f32 %v1265
        %vm1272 = vmor %vm1270, %vm1271
        %v1273 = vsel %vm1272, %v1265, %v1269
        %v1274 = vand.u32 2147483647, %v1264
        %vm1275 = vcmp.eq.f32.partialorder %v1274, 8.507059e+37
        %v1276 = vand.u32 %v1264, 2147483648
        %v1277 = vor.u32 1.1754944e-38, %v1276
        %v1278 = vsel %vm1275, %v1277, %v1273
        %v1279 = vmul.f32 1.0, %v1278
        %v1280 = vmul.f32 %v1259, %v1050
        %v1281 = vmul.f32 %v1240, %v1260
        %v1282 = vadd.f32 %v1280, %v1281
        %v1283 = vtanh.pop %v1282
        %v1284 = vmul.f32 %v1279, %v1283
        %s1285 = scalar_select %p1055, 1, 0
        %v1286 = vstv %s1285
        %vm1287 = vcmp.eq.s32.totalorder %v1286, 1
        %v1288 = vsel %vm1287, %v1282, %v1050
        %v1289 = vsel %vm1287, %v1284, %v1051
        %s1290 = scalar_lea.vmem %s382, 16 [#allocation14]
        %1291 = vst [vmem:[%s1290] sm:$0xff] %v1289
        %s1292 = sadd.s32 %s571, 3
        %p1293 = scmp.lt.s32.totalorder %s1292, 11
        %s1294 = scalar_lea.vmem %s322, 24 [#allocation7]
        %v1295 = vld [vmem:[%s1294] sm:$0xff]
        %1296 = vmatpush.msra.mxu0 %v564
        %1297 = vmatpush.msra.mxu0 %v560
        %1298 = vmatpush.msra.mxu0 %v556
        %1299 = vmatpush.msra.mxu0 %v552
        %1300 = vmatpush.msra.mxu0 %v548
        %1301 = vmatpush.msra.mxu0 %v544
        %1302 = vmatpush.msra.mxu0 %v540
        %1303 = vmatpush.msra.mxu0 %v536
        %1304 = vmatpush.msra.mxu0 %v532
        %1305 = vmatpush.msra.mxu0 %v528
        %1306 = vmatpush.msra.mxu0 %v524
        %1307 = vmatpush.msra.mxu0 %v520
        %1308 = vmatpush.msra.mxu0 %v516
        %1309 = vmatpush.msra.mxu0 %v512
        %1310 = vmatpush.msra.mxu0 %v508
        %1311 = vmatpush.msra.mxu0 %v504
        %1312 = vmatmul.f32.gmra.mxu0 %v1289
        %v1313 = vpop.f32.mrf.mxu0
        %v1314 = vadd.f32 0.0, %v1313
        %1315 = vdwg.mxu0
        %1316 = vmatpush.msra.mxu0 %v565
        %1317 = vmatpush.msra.mxu0 %v561
        %1318 = vmatpush.msra.mxu0 %v557
        %1319 = vmatpush.msra.mxu0 %v553
        %1320 = vmatpush.msra.mxu0 %v549
        %1321 = vmatpush.msra.mxu0 %v545
        %1322 = vmatpush.msra.mxu0 %v541
        %1323 = vmatpush.msra.mxu0 %v537
        %1324 = vmatpush.msra.mxu0 %v533
        %1325 = vmatpush.msra.mxu0 %v529
        %1326 = vmatpush.msra.mxu0 %v525
        %1327 = vmatpush.msra.mxu0 %v521
        %1328 = vmatpush.msra.mxu0 %v517
        %1329 = vmatpush.msra.mxu0 %v513
        %1330 = vmatpush.msra.mxu0 %v509
        %1331 = vmatpush.msra.mxu0 %v505
        %1332 = vmatmul.f32.gmra.mxu0 %v1289
        %v1333 = vpop.f32.mrf.mxu0
        %v1334 = vadd.f32 0.0, %v1333
        %1335 = vdwg.mxu0
        %1336 = vmatpush.msra.mxu0 %v566
        %1337 = vmatpush.msra.mxu0 %v562
        %1338 = vmatpush.msra.mxu0 %v558
        %1339 = vmatpush.msra.mxu0 %v554
        %1340 = vmatpush.msra.mxu0 %v550
        %1341 = vmatpush.msra.mxu0 %v546
        %1342 = vmatpush.msra.mxu0 %v542
        %1343 = vmatpush.msra.mxu0 %v538
        %1344 = vmatpush.msra.mxu0 %v534
        %1345 = vmatpush.msra.mxu0 %v530
        %1346 = vmatpush.msra.mxu0 %v526
        %1347 = vmatpush.msra.mxu0 %v522
        %1348 = vmatpush.msra.mxu0 %v518
        %1349 = vmatpush.msra.mxu0 %v514
        %1350 = vmatpush.msra.mxu0 %v510
        %1351 = vmatpush.msra.mxu0 %v506
        %1352 = vmatmul.f32.gmra.mxu0 %v1289
        %v1353 = vpop.f32.mrf.mxu0
        %v1354 = vadd.f32 0.0, %v1353
        %1355 = vdwg.mxu0
        %1356 = vmatpush.msra.mxu0 %v567
        %1357 = vmatpush.msra.mxu0 %v563
        %1358 = vmatpush.msra.mxu0 %v559
        %1359 = vmatpush.msra.mxu0 %v555
        %1360 = vmatpush.msra.mxu0 %v551
        %1361 = vmatpush.msra.mxu0 %v547
        %1362 = vmatpush.msra.mxu0 %v543
        %1363 = vmatpush.msra.mxu0 %v539
        %1364 = vmatpush.msra.mxu0 %v535
        %1365 = vmatpush.msra.mxu0 %v531
        %1366 = vmatpush.msra.mxu0 %v527
        %1367 = vmatpush.msra.mxu0 %v523
        %1368 = vmatpush.msra.mxu0 %v519
        %1369 = vmatpush.msra.mxu0 %v515
        %1370 = vmatpush.msra.mxu0 %v511
        %1371 = vmatpush.msra.mxu0 %v507
        %1372 = vmatmul.f32.gmra.mxu0 %v1289
        %v1373 = vpop.f32.mrf.mxu0
        %v1374 = vadd.f32 0.0, %v1373
        %1375 = vdwg.mxu0
        %1376 = vmatpush.msra.mxu0 %v500
        %1377 = vmatpush.msra.mxu0 %v496
        %1378 = vmatpush.msra.mxu0 %v492
        %1379 = vmatpush.msra.mxu0 %v488
        %1380 = vmatpush.msra.mxu0 %v484
        %1381 = vmatpush.msra.mxu0 %v480
        %1382 = vmatpush.msra.mxu0 %v476
        %1383 = vmatpush.msra.mxu0 %v472
        %1384 = vmatpush.msra.mxu0 %v468
        %1385 = vmatpush.msra.mxu0 %v464
        %1386 = vmatpush.msra.mxu0 %v460
        %1387 = vmatpush.msra.mxu0 %v456
        %1388 = vmatpush.msra.mxu0 %v452
        %1389 = vmatpush.msra.mxu0 %v448
        %1390 = vmatpush.msra.mxu0 %v444
        %1391 = vmatpush.msra.mxu0 %v440
        %1392 = vmatmul.f32.gmra.mxu0 %v1295
        %v1393 = vpop.f32.mrf.mxu0
        %v1394 = vadd.f32 %v1314, %v1393
        %1395 = vdwg.mxu0
        %1396 = vmatpush.msra.mxu0 %v501
        %1397 = vmatpush.msra.mxu0 %v497
        %1398 = vmatpush.msra.mxu0 %v493
        %1399 = vmatpush.msra.mxu0 %v489
        %1400 = vmatpush.msra.mxu0 %v485
        %1401 = vmatpush.msra.mxu0 %v481
        %1402 = vmatpush.msra.mxu0 %v477
        %1403 = vmatpush.msra.mxu0 %v473
        %1404 = vmatpush.msra.mxu0 %v469
        %1405 = vmatpush.msra.mxu0 %v465
        %1406 = vmatpush.msra.mxu0 %v461
        %1407 = vmatpush.msra.mxu0 %v457
        %1408 = vmatpush.msra.mxu0 %v453
        %1409 = vmatpush.msra.mxu0 %v449
        %1410 = vmatpush.msra.mxu0 %v445
        %1411 = vmatpush.msra.mxu0 %v441
        %1412 = vmatmul.f32.gmra.mxu0 %v1295
        %v1413 = vpop.f32.mrf.mxu0
        %v1414 = vadd.f32 %v1334, %v1413
        %1415 = vdwg.mxu0
        %1416 = vmatpush.msra.mxu0 %v502
        %1417 = vmatpush.msra.mxu0 %v498
        %1418 = vmatpush.msra.mxu0 %v494
        %1419 = vmatpush.msra.mxu0 %v490
        %1420 = vmatpush.msra.mxu0 %v486
        %1421 = vmatpush.msra.mxu0 %v482
        %1422 = vmatpush.msra.mxu0 %v478
        %1423 = vmatpush.msra.mxu0 %v474
        %1424 = vmatpush.msra.mxu0 %v470
        %1425 = vmatpush.msra.mxu0 %v466
        %1426 = vmatpush.msra.mxu0 %v462
        %1427 = vmatpush.msra.mxu0 %v458
        %1428 = vmatpush.msra.mxu0 %v454
        %1429 = vmatpush.msra.mxu0 %v450
        %1430 = vmatpush.msra.mxu0 %v446
        %1431 = vmatpush.msra.mxu0 %v442
        %1432 = vmatmul.f32.gmra.mxu0 %v1295
        %v1433 = vpop.f32.mrf.mxu0
        %v1434 = vadd.f32 %v1354, %v1433
        %1435 = vdwg.mxu0
        %1436 = vmatpush.msra.mxu0 %v503
        %1437 = vmatpush.msra.mxu0 %v499
        %1438 = vmatpush.msra.mxu0 %v495
        %1439 = vmatpush.msra.mxu0 %v491
        %1440 = vmatpush.msra.mxu0 %v487
        %1441 = vmatpush.msra.mxu0 %v483
        %1442 = vmatpush.msra.mxu0 %v479
        %1443 = vmatpush.msra.mxu0 %v475
        %1444 = vmatpush.msra.mxu0 %v471
        %1445 = vmatpush.msra.mxu0 %v467
        %1446 = vmatpush.msra.mxu0 %v463
        %1447 = vmatpush.msra.mxu0 %v459
        %1448 = vmatpush.msra.mxu0 %v455
        %1449 = vmatpush.msra.mxu0 %v451
        %1450 = vmatpush.msra.mxu0 %v447
        %1451 = vmatpush.msra.mxu0 %v443
        %1452 = vmatmul.f32.gmra.mxu0 %v1295
        %v1453 = vpop.f32.mrf.mxu0
        %v1454 = vadd.f32 %v1374, %v1453
        %1455 = vdwg.mxu0
        %v1456 = vadd.f32 %v1394, %v735
        %v1457 = vadd.f32 %v1414, %v736
        %v1458 = vadd.f32 %v1434, %v737
        %v1459 = vadd.f32 %v1454, %v738
        %v1460 = vxor.u32 %v1456, 2147483648
        %v1461 = vmul.f32 %v1460, 1.442695
        %v1462 = vpow.pop %v1461
        %v1463 = vadd.f32 %v1462, 1.0
        %v1464 = vrcp.pop %v1463
        %v1465 = vmul.f32 %v1463, %v1464
        %v1466 = vsub.f32 1.0, %v1465
        %v1467 = vmul.f32 %v1464, %v1466
        %v1468 = vadd.f32 %v1464, %v1467
        %vm1469 = vweird.f32 %v1463
        %vm1470 = vweird.f32 %v1464
        %vm1471 = vmor %vm1469, %vm1470
        %v1472 = vsel %vm1471, %v1464, %v1468
        %v1473 = vand.u32 2147483647, %v1463
        %vm1474 = vcmp.eq.f32.partialorder %v1473, 8.507059e+37
        %v1475 = vand.u32 %v1463, 2147483648
        %v1476 = vor.u32 1.1754944e-38, %v1475
        %v1477 = vsel %vm1474, %v1476, %v1472
        %v1478 = vmul.f32 1.0, %v1477
        %v1479 = vxor.u32 %v1457, 2147483648
        %v1480 = vmul.f32 %v1479, 1.442695
        %v1481 = vpow.pop %v1480
        %v1482 = vadd.f32 %v1481, 1.0
        %v1483 = vrcp.pop %v1482
        %v1484 = vmul.f32 %v1482, %v1483
        %v1485 = vsub.f32 1.0, %v1484
        %v1486 = vmul.f32 %v1483, %v1485
        %v1487 = vadd.f32 %v1483, %v1486
        %vm1488 = vweird.f32 %v1482
        %vm1489 = vweird.f32 %v1483
        %vm1490 = vmor %vm1488, %vm1489
        %v1491 = vsel %vm1490, %v1483, %v1487
        %v1492 = vand.u32 2147483647, %v1482
        %vm1493 = vcmp.eq.f32.partialorder %v1492, 8.507059e+37
        %v1494 = vand.u32 %v1482, 2147483648
        %v1495 = vor.u32 1.1754944e-38, %v1494
        %v1496 = vsel %vm1493, %v1495, %v1491
        %v1497 = vmul.f32 1.0, %v1496
        %v1498 = vtanh.pop %v1458
        %v1499 = vxor.u32 %v1459, 2147483648
        %v1500 = vmul.f32 %v1499, 1.442695
        %v1501 = vpow.pop %v1500
        %v1502 = vadd.f32 %v1501, 1.0
        %v1503 = vrcp.pop %v1502
        %v1504 = vmul.f32 %v1502, %v1503
        %v1505 = vsub.f32 1.0, %v1504
        %v1506 = vmul.f32 %v1503, %v1505
        %v1507 = vadd.f32 %v1503, %v1506
        %vm1508 = vweird.f32 %v1502
        %vm1509 = vweird.f32 %v1503
        %vm1510 = vmor %vm1508, %vm1509
        %v1511 = vsel %vm1510, %v1503, %v1507
        %v1512 = vand.u32 2147483647, %v1502
        %vm1513 = vcmp.eq.f32.partialorder %v1512, 8.507059e+37
        %v1514 = vand.u32 %v1502, 2147483648
        %v1515 = vor.u32 1.1754944e-38, %v1514
        %v1516 = vsel %vm1513, %v1515, %v1511
        %v1517 = vmul.f32 1.0, %v1516
        %v1518 = vmul.f32 %v1497, %v1288
        %v1519 = vmul.f32 %v1478, %v1498
        %v1520 = vadd.f32 %v1518, %v1519
        %v1521 = vtanh.pop %v1520
        %v1522 = vmul.f32 %v1517, %v1521
        %s1523 = scalar_select %p1293, 1, 0
        %v1524 = vstv %s1523
        %vm1525 = vcmp.eq.s32.totalorder %v1524, 1
        %v1526 = vsel %vm1525, %v1520, %v1288
        %v1527 = vsel %vm1525, %v1522, %v1289
        %s1528 = scalar_lea.vmem %s382, 24 [#allocation14]
        %1529 = vst [vmem:[%s1528] sm:$0xff] %v1527
        %s1530 = sadd.s32 %s571, 4
        %p1531 = scmp.lt.s32.totalorder %s1530, 11
        %s1532 = scalar_lea.vmem %s322, 32 [#allocation7]
        %v1533 = vld [vmem:[%s1532] sm:$0xff]
        %1534 = vmatpush.msra.mxu0 %v564
        %1535 = vmatpush.msra.mxu0 %v560
        %1536 = vmatpush.msra.mxu0 %v556
        %1537 = vmatpush.msra.mxu0 %v552
        %1538 = vmatpush.msra.mxu0 %v548
        %1539 = vmatpush.msra.mxu0 %v544
        %1540 = vmatpush.msra.mxu0 %v540
        %1541 = vmatpush.msra.mxu0 %v536
        %1542 = vmatpush.msra.mxu0 %v532
        %1543 = vmatpush.msra.mxu0 %v528
        %1544 = vmatpush.msra.mxu0 %v524
        %1545 = vmatpush.msra.mxu0 %v520
        %1546 = vmatpush.msra.mxu0 %v516
        %1547 = vmatpush.msra.mxu0 %v512
        %1548 = vmatpush.msra.mxu0 %v508
        %1549 = vmatpush.msra.mxu0 %v504
        %1550 = vmatmul.f32.gmra.mxu0 %v1527
        %v1551 = vpop.f32.mrf.mxu0
        %v1552 = vadd.f32 0.0, %v1551
        %1553 = vdwg.mxu0
        %1554 = vmatpush.msra.mxu0 %v565
        %1555 = vmatpush.msra.mxu0 %v561
        %1556 = vmatpush.msra.mxu0 %v557
        %1557 = vmatpush.msra.mxu0 %v553
        %1558 = vmatpush.msra.mxu0 %v549
        %1559 = vmatpush.msra.mxu0 %v545
        %1560 = vmatpush.msra.mxu0 %v541
        %1561 = vmatpush.msra.mxu0 %v537
        %1562 = vmatpush.msra.mxu0 %v533
        %1563 = vmatpush.msra.mxu0 %v529
        %1564 = vmatpush.msra.mxu0 %v525
        %1565 = vmatpush.msra.mxu0 %v521
        %1566 = vmatpush.msra.mxu0 %v517
        %1567 = vmatpush.msra.mxu0 %v513
        %1568 = vmatpush.msra.mxu0 %v509
        %1569 = vmatpush.msra.mxu0 %v505
        %1570 = vmatmul.f32.gmra.mxu0 %v1527
        %v1571 = vpop.f32.mrf.mxu0
        %v1572 = vadd.f32 0.0, %v1571
        %1573 = vdwg.mxu0
        %1574 = vmatpush.msra.mxu0 %v566
        %1575 = vmatpush.msra.mxu0 %v562
        %1576 = vmatpush.msra.mxu0 %v558
        %1577 = vmatpush.msra.mxu0 %v554
        %1578 = vmatpush.msra.mxu0 %v550
        %1579 = vmatpush.msra.mxu0 %v546
        %1580 = vmatpush.msra.mxu0 %v542
        %1581 = vmatpush.msra.mxu0 %v538
        %1582 = vmatpush.msra.mxu0 %v534
        %1583 = vmatpush.msra.mxu0 %v530
        %1584 = vmatpush.msra.mxu0 %v526
        %1585 = vmatpush.msra.mxu0 %v522
        %1586 = vmatpush.msra.mxu0 %v518
        %1587 = vmatpush.msra.mxu0 %v514
        %1588 = vmatpush.msra.mxu0 %v510
        %1589 = vmatpush.msra.mxu0 %v506
        %1590 = vmatmul.f32.gmra.mxu0 %v1527
        %v1591 = vpop.f32.mrf.mxu0
        %v1592 = vadd.f32 0.0, %v1591
        %1593 = vdwg.mxu0
        %1594 = vmatpush.msra.mxu0 %v567
        %1595 = vmatpush.msra.mxu0 %v563
        %1596 = vmatpush.msra.mxu0 %v559
        %1597 = vmatpush.msra.mxu0 %v555
        %1598 = vmatpush.msra.mxu0 %v551
        %1599 = vmatpush.msra.mxu0 %v547
        %1600 = vmatpush.msra.mxu0 %v543
        %1601 = vmatpush.msra.mxu0 %v539
        %1602 = vmatpush.msra.mxu0 %v535
        %1603 = vmatpush.msra.mxu0 %v531
        %1604 = vmatpush.msra.mxu0 %v527
        %1605 = vmatpush.msra.mxu0 %v523
        %1606 = vmatpush.msra.mxu0 %v519
        %1607 = vmatpush.msra.mxu0 %v515
        %1608 = vmatpush.msra.mxu0 %v511
        %1609 = vmatpush.msra.mxu0 %v507
        %1610 = vmatmul.f32.gmra.mxu0 %v1527
        %v1611 = vpop.f32.mrf.mxu0
        %v1612 = vadd.f32 0.0, %v1611
        %1613 = vdwg.mxu0
        %1614 = vmatpush.msra.mxu0 %v500
        %1615 = vmatpush.msra.mxu0 %v496
        %1616 = vmatpush.msra.mxu0 %v492
        %1617 = vmatpush.msra.mxu0 %v488
        %1618 = vmatpush.msra.mxu0 %v484
        %1619 = vmatpush.msra.mxu0 %v480
        %1620 = vmatpush.msra.mxu0 %v476
        %1621 = vmatpush.msra.mxu0 %v472
        %1622 = vmatpush.msra.mxu0 %v468
        %1623 = vmatpush.msra.mxu0 %v464
        %1624 = vmatpush.msra.mxu0 %v460
        %1625 = vmatpush.msra.mxu0 %v456
        %1626 = vmatpush.msra.mxu0 %v452
        %1627 = vmatpush.msra.mxu0 %v448
        %1628 = vmatpush.msra.mxu0 %v444
        %1629 = vmatpush.msra.mxu0 %v440
        %1630 = vmatmul.f32.gmra.mxu0 %v1533
        %v1631 = vpop.f32.mrf.mxu0
        %v1632 = vadd.f32 %v1552, %v1631
        %1633 = vdwg.mxu0
        %1634 = vmatpush.msra.mxu0 %v501
        %1635 = vmatpush.msra.mxu0 %v497
        %1636 = vmatpush.msra.mxu0 %v493
        %1637 = vmatpush.msra.mxu0 %v489
        %1638 = vmatpush.msra.mxu0 %v485
        %1639 = vmatpush.msra.mxu0 %v481
        %1640 = vmatpush.msra.mxu0 %v477
        %1641 = vmatpush.msra.mxu0 %v473
        %1642 = vmatpush.msra.mxu0 %v469
        %1643 = vmatpush.msra.mxu0 %v465
        %1644 = vmatpush.msra.mxu0 %v461
        %1645 = vmatpush.msra.mxu0 %v457
        %1646 = vmatpush.msra.mxu0 %v453
        %1647 = vmatpush.msra.mxu0 %v449
        %1648 = vmatpush.msra.mxu0 %v445
        %1649 = vmatpush.msra.mxu0 %v441
        %1650 = vmatmul.f32.gmra.mxu0 %v1533
        %v1651 = vpop.f32.mrf.mxu0
        %v1652 = vadd.f32 %v1572, %v1651
        %1653 = vdwg.mxu0
        %1654 = vmatpush.msra.mxu0 %v502
        %1655 = vmatpush.msra.mxu0 %v498
        %1656 = vmatpush.msra.mxu0 %v494
        %1657 = vmatpush.msra.mxu0 %v490
        %1658 = vmatpush.msra.mxu0 %v486
        %1659 = vmatpush.msra.mxu0 %v482
        %1660 = vmatpush.msra.mxu0 %v478
        %1661 = vmatpush.msra.mxu0 %v474
        %1662 = vmatpush.msra.mxu0 %v470
        %1663 = vmatpush.msra.mxu0 %v466
        %1664 = vmatpush.msra.mxu0 %v462
        %1665 = vmatpush.msra.mxu0 %v458
        %1666 = vmatpush.msra.mxu0 %v454
        %1667 = vmatpush.msra.mxu0 %v450
        %1668 = vmatpush.msra.mxu0 %v446
        %1669 = vmatpush.msra.mxu0 %v442
        %1670 = vmatmul.f32.gmra.mxu0 %v1533
        %v1671 = vpop.f32.mrf.mxu0
        %v1672 = vadd.f32 %v1592, %v1671
        %1673 = vdwg.mxu0
        %1674 = vmatpush.msra.mxu0 %v503
        %1675 = vmatpush.msra.mxu0 %v499
        %1676 = vmatpush.msra.mxu0 %v495
        %1677 = vmatpush.msra.mxu0 %v491
        %1678 = vmatpush.msra.mxu0 %v487
        %1679 = vmatpush.msra.mxu0 %v483
        %1680 = vmatpush.msra.mxu0 %v479
        %1681 = vmatpush.msra.mxu0 %v475
        %1682 = vmatpush.msra.mxu0 %v471
        %1683 = vmatpush.msra.mxu0 %v467
        %1684 = vmatpush.msra.mxu0 %v463
        %1685 = vmatpush.msra.mxu0 %v459
        %1686 = vmatpush.msra.mxu0 %v455
        %1687 = vmatpush.msra.mxu0 %v451
        %1688 = vmatpush.msra.mxu0 %v447
        %1689 = vmatpush.msra.mxu0 %v443
        %1690 = vmatmul.f32.gmra.mxu0 %v1533
        %v1691 = vpop.f32.mrf.mxu0
        %v1692 = vadd.f32 %v1612, %v1691
        %1693 = vdwg.mxu0
        %v1694 = vadd.f32 %v1632, %v735
        %v1695 = vadd.f32 %v1652, %v736
        %v1696 = vadd.f32 %v1672, %v737
        %v1697 = vadd.f32 %v1692, %v738
        %v1698 = vxor.u32 %v1694, 2147483648
        %v1699 = vmul.f32 %v1698, 1.442695
        %v1700 = vpow.pop %v1699
        %v1701 = vadd.f32 %v1700, 1.0
        %v1702 = vrcp.pop %v1701
        %v1703 = vmul.f32 %v1701, %v1702
        %v1704 = vsub.f32 1.0, %v1703
        %v1705 = vmul.f32 %v1702, %v1704
        %v1706 = vadd.f32 %v1702, %v1705
        %vm1707 = vweird.f32 %v1701
        %vm1708 = vweird.f32 %v1702
        %vm1709 = vmor %vm1707, %vm1708
        %v1710 = vsel %vm1709, %v1702, %v1706
        %v1711 = vand.u32 2147483647, %v1701
        %vm1712 = vcmp.eq.f32.partialorder %v1711, 8.507059e+37
        %v1713 = vand.u32 %v1701, 2147483648
        %v1714 = vor.u32 1.1754944e-38, %v1713
        %v1715 = vsel %vm1712, %v1714, %v1710
        %v1716 = vmul.f32 1.0, %v1715
        %v1717 = vxor.u32 %v1695, 2147483648
        %v1718 = vmul.f32 %v1717, 1.442695
        %v1719 = vpow.pop %v1718
        %v1720 = vadd.f32 %v1719, 1.0
        %v1721 = vrcp.pop %v1720
        %v1722 = vmul.f32 %v1720, %v1721
        %v1723 = vsub.f32 1.0, %v1722
        %v1724 = vmul.f32 %v1721, %v1723
        %v1725 = vadd.f32 %v1721, %v1724
        %vm1726 = vweird.f32 %v1720
        %vm1727 = vweird.f32 %v1721
        %vm1728 = vmor %vm1726, %vm1727
        %v1729 = vsel %vm1728, %v1721, %v1725
        %v1730 = vand.u32 2147483647, %v1720
        %vm1731 = vcmp.eq.f32.partialorder %v1730, 8.507059e+37
        %v1732 = vand.u32 %v1720, 2147483648
        %v1733 = vor.u32 1.1754944e-38, %v1732
        %v1734 = vsel %vm1731, %v1733, %v1729
        %v1735 = vmul.f32 1.0, %v1734
        %v1736 = vtanh.pop %v1696
        %v1737 = vxor.u32 %v1697, 2147483648
        %v1738 = vmul.f32 %v1737, 1.442695
        %v1739 = vpow.pop %v1738
        %v1740 = vadd.f32 %v1739, 1.0
        %v1741 = vrcp.pop %v1740
        %v1742 = vmul.f32 %v1740, %v1741
        %v1743 = vsub.f32 1.0, %v1742
        %v1744 = vmul.f32 %v1741, %v1743
        %v1745 = vadd.f32 %v1741, %v1744
        %vm1746 = vweird.f32 %v1740
        %vm1747 = vweird.f32 %v1741
        %vm1748 = vmor %vm1746, %vm1747
        %v1749 = vsel %vm1748, %v1741, %v1745
        %v1750 = vand.u32 2147483647, %v1740
        %vm1751 = vcmp.eq.f32.partialorder %v1750, 8.507059e+37
        %v1752 = vand.u32 %v1740, 2147483648
        %v1753 = vor.u32 1.1754944e-38, %v1752
        %v1754 = vsel %vm1751, %v1753, %v1749
        %v1755 = vmul.f32 1.0, %v1754
        %v1756 = vmul.f32 %v1735, %v1526
        %v1757 = vmul.f32 %v1716, %v1736
        %v1758 = vadd.f32 %v1756, %v1757
        %v1759 = vtanh.pop %v1758
        %v1760 = vmul.f32 %v1755, %v1759
        %s1761 = scalar_select %p1531, 1, 0
        %v1762 = vstv %s1761
        %vm1763 = vcmp.eq.s32.totalorder %v1762, 1
        %v1764 = vsel %vm1763, %v1758, %v1526
        %v1765 = vsel %vm1763, %v1760, %v1527
        %s1766 = scalar_lea.vmem %s382, 32 [#allocation14]
        %1767 = vst [vmem:[%s1766] sm:$0xff] %v1765
        %s1768 = sadd.s32 %s571, 5
        %p1769 = scmp.lt.s32.totalorder %s1768, 11
        %s1770 = scalar_lea.vmem %s322, 40 [#allocation7]
        %v1771 = vld [vmem:[%s1770] sm:$0xff]
        %1772 = vmatpush.msra.mxu0 %v564
        %1773 = vmatpush.msra.mxu0 %v560
        %1774 = vmatpush.msra.mxu0 %v556
        %1775 = vmatpush.msra.mxu0 %v552
        %1776 = vmatpush.msra.mxu0 %v548
        %1777 = vmatpush.msra.mxu0 %v544
        %1778 = vmatpush.msra.mxu0 %v540
        %1779 = vmatpush.msra.mxu0 %v536
        %1780 = vmatpush.msra.mxu0 %v532
        %1781 = vmatpush.msra.mxu0 %v528
        %1782 = vmatpush.msra.mxu0 %v524
        %1783 = vmatpush.msra.mxu0 %v520
        %1784 = vmatpush.msra.mxu0 %v516
        %1785 = vmatpush.msra.mxu0 %v512
        %1786 = vmatpush.msra.mxu0 %v508
        %1787 = vmatpush.msra.mxu0 %v504
        %1788 = vmatmul.f32.gmra.mxu0 %v1765
        %v1789 = vpop.f32.mrf.mxu0
        %v1790 = vadd.f32 0.0, %v1789
        %1791 = vdwg.mxu0
        %1792 = vmatpush.msra.mxu0 %v565
        %1793 = vmatpush.msra.mxu0 %v561
        %1794 = vmatpush.msra.mxu0 %v557
        %1795 = vmatpush.msra.mxu0 %v553
        %1796 = vmatpush.msra.mxu0 %v549
        %1797 = vmatpush.msra.mxu0 %v545
        %1798 = vmatpush.msra.mxu0 %v541
        %1799 = vmatpush.msra.mxu0 %v537
        %1800 = vmatpush.msra.mxu0 %v533
        %1801 = vmatpush.msra.mxu0 %v529
        %1802 = vmatpush.msra.mxu0 %v525
        %1803 = vmatpush.msra.mxu0 %v521
        %1804 = vmatpush.msra.mxu0 %v517
        %1805 = vmatpush.msra.mxu0 %v513
        %1806 = vmatpush.msra.mxu0 %v509
        %1807 = vmatpush.msra.mxu0 %v505
        %1808 = vmatmul.f32.gmra.mxu0 %v1765
        %v1809 = vpop.f32.mrf.mxu0
        %v1810 = vadd.f32 0.0, %v1809
        %1811 = vdwg.mxu0
        %1812 = vmatpush.msra.mxu0 %v566
        %1813 = vmatpush.msra.mxu0 %v562
        %1814 = vmatpush.msra.mxu0 %v558
        %1815 = vmatpush.msra.mxu0 %v554
        %1816 = vmatpush.msra.mxu0 %v550
        %1817 = vmatpush.msra.mxu0 %v546
        %1818 = vmatpush.msra.mxu0 %v542
        %1819 = vmatpush.msra.mxu0 %v538
        %1820 = vmatpush.msra.mxu0 %v534
        %1821 = vmatpush.msra.mxu0 %v530
        %1822 = vmatpush.msra.mxu0 %v526
        %1823 = vmatpush.msra.mxu0 %v522
        %1824 = vmatpush.msra.mxu0 %v518
        %1825 = vmatpush.msra.mxu0 %v514
        %1826 = vmatpush.msra.mxu0 %v510
        %1827 = vmatpush.msra.mxu0 %v506
        %1828 = vmatmul.f32.gmra.mxu0 %v1765
        %v1829 = vpop.f32.mrf.mxu0
        %v1830 = vadd.f32 0.0, %v1829
        %1831 = vdwg.mxu0
        %1832 = vmatpush.msra.mxu0 %v567
        %1833 = vmatpush.msra.mxu0 %v563
        %1834 = vmatpush.msra.mxu0 %v559
        %1835 = vmatpush.msra.mxu0 %v555
        %1836 = vmatpush.msra.mxu0 %v551
        %1837 = vmatpush.msra.mxu0 %v547
        %1838 = vmatpush.msra.mxu0 %v543
        %1839 = vmatpush.msra.mxu0 %v539
        %1840 = vmatpush.msra.mxu0 %v535
        %1841 = vmatpush.msra.mxu0 %v531
        %1842 = vmatpush.msra.mxu0 %v527
        %1843 = vmatpush.msra.mxu0 %v523
        %1844 = vmatpush.msra.mxu0 %v519
        %1845 = vmatpush.msra.mxu0 %v515
        %1846 = vmatpush.msra.mxu0 %v511
        %1847 = vmatpush.msra.mxu0 %v507
        %1848 = vmatmul.f32.gmra.mxu0 %v1765
        %v1849 = vpop.f32.mrf.mxu0
        %v1850 = vadd.f32 0.0, %v1849
        %1851 = vdwg.mxu0
        %1852 = vmatpush.msra.mxu0 %v500
        %1853 = vmatpush.msra.mxu0 %v496
        %1854 = vmatpush.msra.mxu0 %v492
        %1855 = vmatpush.msra.mxu0 %v488
        %1856 = vmatpush.msra.mxu0 %v484
        %1857 = vmatpush.msra.mxu0 %v480
        %1858 = vmatpush.msra.mxu0 %v476
        %1859 = vmatpush.msra.mxu0 %v472
        %1860 = vmatpush.msra.mxu0 %v468
        %1861 = vmatpush.msra.mxu0 %v464
        %1862 = vmatpush.msra.mxu0 %v460
        %1863 = vmatpush.msra.mxu0 %v456
        %1864 = vmatpush.msra.mxu0 %v452
        %1865 = vmatpush.msra.mxu0 %v448
        %1866 = vmatpush.msra.mxu0 %v444
        %1867 = vmatpush.msra.mxu0 %v440
        %1868 = vmatmul.f32.gmra.mxu0 %v1771
        %v1869 = vpop.f32.mrf.mxu0
        %v1870 = vadd.f32 %v1790, %v1869
        %1871 = vdwg.mxu0
        %1872 = vmatpush.msra.mxu0 %v501
        %1873 = vmatpush.msra.mxu0 %v497
        %1874 = vmatpush.msra.mxu0 %v493
        %1875 = vmatpush.msra.mxu0 %v489
        %1876 = vmatpush.msra.mxu0 %v485
        %1877 = vmatpush.msra.mxu0 %v481
        %1878 = vmatpush.msra.mxu0 %v477
        %1879 = vmatpush.msra.mxu0 %v473
        %1880 = vmatpush.msra.mxu0 %v469
        %1881 = vmatpush.msra.mxu0 %v465
        %1882 = vmatpush.msra.mxu0 %v461
        %1883 = vmatpush.msra.mxu0 %v457
        %1884 = vmatpush.msra.mxu0 %v453
        %1885 = vmatpush.msra.mxu0 %v449
        %1886 = vmatpush.msra.mxu0 %v445
        %1887 = vmatpush.msra.mxu0 %v441
        %1888 = vmatmul.f32.gmra.mxu0 %v1771
        %v1889 = vpop.f32.mrf.mxu0
        %v1890 = vadd.f32 %v1810, %v1889
        %1891 = vdwg.mxu0
        %1892 = vmatpush.msra.mxu0 %v502
        %1893 = vmatpush.msra.mxu0 %v498
        %1894 = vmatpush.msra.mxu0 %v494
        %1895 = vmatpush.msra.mxu0 %v490
        %1896 = vmatpush.msra.mxu0 %v486
        %1897 = vmatpush.msra.mxu0 %v482
        %1898 = vmatpush.msra.mxu0 %v478
        %1899 = vmatpush.msra.mxu0 %v474
        %1900 = vmatpush.msra.mxu0 %v470
        %1901 = vmatpush.msra.mxu0 %v466
        %1902 = vmatpush.msra.mxu0 %v462
        %1903 = vmatpush.msra.mxu0 %v458
        %1904 = vmatpush.msra.mxu0 %v454
        %1905 = vmatpush.msra.mxu0 %v450
        %1906 = vmatpush.msra.mxu0 %v446
        %1907 = vmatpush.msra.mxu0 %v442
        %1908 = vmatmul.f32.gmra.mxu0 %v1771
        %v1909 = vpop.f32.mrf.mxu0
        %v1910 = vadd.f32 %v1830, %v1909
        %1911 = vdwg.mxu0
        %1912 = vmatpush.msra.mxu0 %v503
        %1913 = vmatpush.msra.mxu0 %v499
        %1914 = vmatpush.msra.mxu0 %v495
        %1915 = vmatpush.msra.mxu0 %v491
        %1916 = vmatpush.msra.mxu0 %v487
        %1917 = vmatpush.msra.mxu0 %v483
        %1918 = vmatpush.msra.mxu0 %v479
        %1919 = vmatpush.msra.mxu0 %v475
        %1920 = vmatpush.msra.mxu0 %v471
        %1921 = vmatpush.msra.mxu0 %v467
        %1922 = vmatpush.msra.mxu0 %v463
        %1923 = vmatpush.msra.mxu0 %v459
        %1924 = vmatpush.msra.mxu0 %v455
        %1925 = vmatpush.msra.mxu0 %v451
        %1926 = vmatpush.msra.mxu0 %v447
        %1927 = vmatpush.msra.mxu0 %v443
        %1928 = vmatmul.f32.gmra.mxu0 %v1771
        %v1929 = vpop.f32.mrf.mxu0
        %v1930 = vadd.f32 %v1850, %v1929
        %1931 = vdwg.mxu0
        %v1932 = vadd.f32 %v1870, %v735
        %v1933 = vadd.f32 %v1890, %v736
        %v1934 = vadd.f32 %v1910, %v737
        %v1935 = vadd.f32 %v1930, %v738
        %v1936 = vxor.u32 %v1932, 2147483648
        %v1937 = vmul.f32 %v1936, 1.442695
        %v1938 = vpow.pop %v1937
        %v1939 = vadd.f32 %v1938, 1.0
        %v1940 = vrcp.pop %v1939
        %v1941 = vmul.f32 %v1939, %v1940
        %v1942 = vsub.f32 1.0, %v1941
        %v1943 = vmul.f32 %v1940, %v1942
        %v1944 = vadd.f32 %v1940, %v1943
        %vm1945 = vweird.f32 %v1939
        %vm1946 = vweird.f32 %v1940
        %vm1947 = vmor %vm1945, %vm1946
        %v1948 = vsel %vm1947, %v1940, %v1944
        %v1949 = vand.u32 2147483647, %v1939
        %vm1950 = vcmp.eq.f32.partialorder %v1949, 8.507059e+37
        %v1951 = vand.u32 %v1939, 2147483648
        %v1952 = vor.u32 1.1754944e-38, %v1951
        %v1953 = vsel %vm1950, %v1952, %v1948
        %v1954 = vmul.f32 1.0, %v1953
        %v1955 = vxor.u32 %v1933, 2147483648
        %v1956 = vmul.f32 %v1955, 1.442695
        %v1957 = vpow.pop %v1956
        %v1958 = vadd.f32 %v1957, 1.0
        %v1959 = vrcp.pop %v1958
        %v1960 = vmul.f32 %v1958, %v1959
        %v1961 = vsub.f32 1.0, %v1960
        %v1962 = vmul.f32 %v1959, %v1961
        %v1963 = vadd.f32 %v1959, %v1962
        %vm1964 = vweird.f32 %v1958
        %vm1965 = vweird.f32 %v1959
        %vm1966 = vmor %vm1964, %vm1965
        %v1967 = vsel %vm1966, %v1959, %v1963
        %v1968 = vand.u32 2147483647, %v1958
        %vm1969 = vcmp.eq.f32.partialorder %v1968, 8.507059e+37
        %v1970 = vand.u32 %v1958, 2147483648
        %v1971 = vor.u32 1.1754944e-38, %v1970
        %v1972 = vsel %vm1969, %v1971, %v1967
        %v1973 = vmul.f32 1.0, %v1972
        %v1974 = vtanh.pop %v1934
        %v1975 = vxor.u32 %v1935, 2147483648
        %v1976 = vmul.f32 %v1975, 1.442695
        %v1977 = vpow.pop %v1976
        %v1978 = vadd.f32 %v1977, 1.0
        %v1979 = vrcp.pop %v1978
        %v1980 = vmul.f32 %v1978, %v1979
        %v1981 = vsub.f32 1.0, %v1980
        %v1982 = vmul.f32 %v1979, %v1981
        %v1983 = vadd.f32 %v1979, %v1982
        %vm1984 = vweird.f32 %v1978
        %vm1985 = vweird.f32 %v1979
        %vm1986 = vmor %vm1984, %vm1985
        %v1987 = vsel %vm1986, %v1979, %v1983
        %v1988 = vand.u32 2147483647, %v1978
        %vm1989 = vcmp.eq.f32.partialorder %v1988, 8.507059e+37
        %v1990 = vand.u32 %v1978, 2147483648
        %v1991 = vor.u32 1.1754944e-38, %v1990
        %v1992 = vsel %vm1989, %v1991, %v1987
        %v1993 = vmul.f32 1.0, %v1992
        %v1994 = vmul.f32 %v1973, %v1764
        %v1995 = vmul.f32 %v1954, %v1974
        %v1996 = vadd.f32 %v1994, %v1995
        %v1997 = vtanh.pop %v1996
        %v1998 = vmul.f32 %v1993, %v1997
        %s1999 = scalar_select %p1769, 1, 0
        %v2000 = vstv %s1999
        %vm2001 = vcmp.eq.s32.totalorder %v2000, 1
        %v2002 = vsel %vm2001, %v1996, %v1764
        %v2003 = vsel %vm2001, %v1998, %v1765
        %s2004 = scalar_lea.vmem %s382, 40 [#allocation14]
        %2005 = vst [vmem:[%s2004] sm:$0xff] %v2003
        %s2006 = sadd.s32 %s571, 6
        %p2007 = scmp.lt.s32.totalorder %s2006, 11
        %s2008 = scalar_lea.vmem %s322, 48 [#allocation7]
        %v2009 = vld [vmem:[%s2008] sm:$0xff]
        %2010 = vmatpush.msra.mxu0 %v564
        %2011 = vmatpush.msra.mxu0 %v560
        %2012 = vmatpush.msra.mxu0 %v556
        %2013 = vmatpush.msra.mxu0 %v552
        %2014 = vmatpush.msra.mxu0 %v548
        %2015 = vmatpush.msra.mxu0 %v544
        %2016 = vmatpush.msra.mxu0 %v540
        %2017 = vmatpush.msra.mxu0 %v536
        %2018 = vmatpush.msra.mxu0 %v532
        %2019 = vmatpush.msra.mxu0 %v528
        %2020 = vmatpush.msra.mxu0 %v524
        %2021 = vmatpush.msra.mxu0 %v520
        %2022 = vmatpush.msra.mxu0 %v516
        %2023 = vmatpush.msra.mxu0 %v512
        %2024 = vmatpush.msra.mxu0 %v508
        %2025 = vmatpush.msra.mxu0 %v504
        %2026 = vmatmul.f32.gmra.mxu0 %v2003
        %v2027 = vpop.f32.mrf.mxu0
        %v2028 = vadd.f32 0.0, %v2027
        %2029 = vdwg.mxu0
        %2030 = vmatpush.msra.mxu0 %v565
        %2031 = vmatpush.msra.mxu0 %v561
        %2032 = vmatpush.msra.mxu0 %v557
        %2033 = vmatpush.msra.mxu0 %v553
        %2034 = vmatpush.msra.mxu0 %v549
        %2035 = vmatpush.msra.mxu0 %v545
        %2036 = vmatpush.msra.mxu0 %v541
        %2037 = vmatpush.msra.mxu0 %v537
        %2038 = vmatpush.msra.mxu0 %v533
        %2039 = vmatpush.msra.mxu0 %v529
        %2040 = vmatpush.msra.mxu0 %v525
        %2041 = vmatpush.msra.mxu0 %v521
        %2042 = vmatpush.msra.mxu0 %v517
        %2043 = vmatpush.msra.mxu0 %v513
        %2044 = vmatpush.msra.mxu0 %v509
        %2045 = vmatpush.msra.mxu0 %v505
        %2046 = vmatmul.f32.gmra.mxu0 %v2003
        %v2047 = vpop.f32.mrf.mxu0
        %v2048 = vadd.f32 0.0, %v2047
        %2049 = vdwg.mxu0
        %2050 = vmatpush.msra.mxu0 %v566
        %2051 = vmatpush.msra.mxu0 %v562
        %2052 = vmatpush.msra.mxu0 %v558
        %2053 = vmatpush.msra.mxu0 %v554
        %2054 = vmatpush.msra.mxu0 %v550
        %2055 = vmatpush.msra.mxu0 %v546
        %2056 = vmatpush.msra.mxu0 %v542
        %2057 = vmatpush.msra.mxu0 %v538
        %2058 = vmatpush.msra.mxu0 %v534
        %2059 = vmatpush.msra.mxu0 %v530
        %2060 = vmatpush.msra.mxu0 %v526
        %2061 = vmatpush.msra.mxu0 %v522
        %2062 = vmatpush.msra.mxu0 %v518
        %2063 = vmatpush.msra.mxu0 %v514
        %2064 = vmatpush.msra.mxu0 %v510
        %2065 = vmatpush.msra.mxu0 %v506
        %2066 = vmatmul.f32.gmra.mxu0 %v2003
        %v2067 = vpop.f32.mrf.mxu0
        %v2068 = vadd.f32 0.0, %v2067
        %2069 = vdwg.mxu0
        %2070 = vmatpush.msra.mxu0 %v567
        %2071 = vmatpush.msra.mxu0 %v563
        %2072 = vmatpush.msra.mxu0 %v559
        %2073 = vmatpush.msra.mxu0 %v555
        %2074 = vmatpush.msra.mxu0 %v551
        %2075 = vmatpush.msra.mxu0 %v547
        %2076 = vmatpush.msra.mxu0 %v543
        %2077 = vmatpush.msra.mxu0 %v539
        %2078 = vmatpush.msra.mxu0 %v535
        %2079 = vmatpush.msra.mxu0 %v531
        %2080 = vmatpush.msra.mxu0 %v527
        %2081 = vmatpush.msra.mxu0 %v523
        %2082 = vmatpush.msra.mxu0 %v519
        %2083 = vmatpush.msra.mxu0 %v515
        %2084 = vmatpush.msra.mxu0 %v511
        %2085 = vmatpush.msra.mxu0 %v507
        %2086 = vmatmul.f32.gmra.mxu0 %v2003
        %v2087 = vpop.f32.mrf.mxu0
        %v2088 = vadd.f32 0.0, %v2087
        %2089 = vdwg.mxu0
        %2090 = vmatpush.msra.mxu0 %v500
        %2091 = vmatpush.msra.mxu0 %v496
        %2092 = vmatpush.msra.mxu0 %v492
        %2093 = vmatpush.msra.mxu0 %v488
        %2094 = vmatpush.msra.mxu0 %v484
        %2095 = vmatpush.msra.mxu0 %v480
        %2096 = vmatpush.msra.mxu0 %v476
        %2097 = vmatpush.msra.mxu0 %v472
        %2098 = vmatpush.msra.mxu0 %v468
        %2099 = vmatpush.msra.mxu0 %v464
        %2100 = vmatpush.msra.mxu0 %v460
        %2101 = vmatpush.msra.mxu0 %v456
        %2102 = vmatpush.msra.mxu0 %v452
        %2103 = vmatpush.msra.mxu0 %v448
        %2104 = vmatpush.msra.mxu0 %v444
        %2105 = vmatpush.msra.mxu0 %v440
        %2106 = vmatmul.f32.gmra.mxu0 %v2009
        %v2107 = vpop.f32.mrf.mxu0
        %v2108 = vadd.f32 %v2028, %v2107
        %2109 = vdwg.mxu0
        %2110 = vmatpush.msra.mxu0 %v501
        %2111 = vmatpush.msra.mxu0 %v497
        %2112 = vmatpush.msra.mxu0 %v493
        %2113 = vmatpush.msra.mxu0 %v489
        %2114 = vmatpush.msra.mxu0 %v485
        %2115 = vmatpush.msra.mxu0 %v481
        %2116 = vmatpush.msra.mxu0 %v477
        %2117 = vmatpush.msra.mxu0 %v473
        %2118 = vmatpush.msra.mxu0 %v469
        %2119 = vmatpush.msra.mxu0 %v465
        %2120 = vmatpush.msra.mxu0 %v461
        %2121 = vmatpush.msra.mxu0 %v457
        %2122 = vmatpush.msra.mxu0 %v453
        %2123 = vmatpush.msra.mxu0 %v449
        %2124 = vmatpush.msra.mxu0 %v445
        %2125 = vmatpush.msra.mxu0 %v441
        %2126 = vmatmul.f32.gmra.mxu0 %v2009
        %v2127 = vpop.f32.mrf.mxu0
        %v2128 = vadd.f32 %v2048, %v2127
        %2129 = vdwg.mxu0
        %2130 = vmatpush.msra.mxu0 %v502
        %2131 = vmatpush.msra.mxu0 %v498
        %2132 = vmatpush.msra.mxu0 %v494
        %2133 = vmatpush.msra.mxu0 %v490
        %2134 = vmatpush.msra.mxu0 %v486
        %2135 = vmatpush.msra.mxu0 %v482
        %2136 = vmatpush.msra.mxu0 %v478
        %2137 = vmatpush.msra.mxu0 %v474
        %2138 = vmatpush.msra.mxu0 %v470
        %2139 = vmatpush.msra.mxu0 %v466
        %2140 = vmatpush.msra.mxu0 %v462
        %2141 = vmatpush.msra.mxu0 %v458
        %2142 = vmatpush.msra.mxu0 %v454
        %2143 = vmatpush.msra.mxu0 %v450
        %2144 = vmatpush.msra.mxu0 %v446
        %2145 = vmatpush.msra.mxu0 %v442
        %2146 = vmatmul.f32.gmra.mxu0 %v2009
        %v2147 = vpop.f32.mrf.mxu0
        %v2148 = vadd.f32 %v2068, %v2147
        %2149 = vdwg.mxu0
        %2150 = vmatpush.msra.mxu0 %v503
        %2151 = vmatpush.msra.mxu0 %v499
        %2152 = vmatpush.msra.mxu0 %v495
        %2153 = vmatpush.msra.mxu0 %v491
        %2154 = vmatpush.msra.mxu0 %v487
        %2155 = vmatpush.msra.mxu0 %v483
        %2156 = vmatpush.msra.mxu0 %v479
        %2157 = vmatpush.msra.mxu0 %v475
        %2158 = vmatpush.msra.mxu0 %v471
        %2159 = vmatpush.msra.mxu0 %v467
        %2160 = vmatpush.msra.mxu0 %v463
        %2161 = vmatpush.msra.mxu0 %v459
        %2162 = vmatpush.msra.mxu0 %v455
        %2163 = vmatpush.msra.mxu0 %v451
        %2164 = vmatpush.msra.mxu0 %v447
        %2165 = vmatpush.msra.mxu0 %v443
        %2166 = vmatmul.f32.gmra.mxu0 %v2009
        %v2167 = vpop.f32.mrf.mxu0
        %v2168 = vadd.f32 %v2088, %v2167
        %2169 = vdwg.mxu0
        %v2170 = vadd.f32 %v2108, %v735
        %v2171 = vadd.f32 %v2128, %v736
        %v2172 = vadd.f32 %v2148, %v737
        %v2173 = vadd.f32 %v2168, %v738
        %v2174 = vxor.u32 %v2170, 2147483648
        %v2175 = vmul.f32 %v2174, 1.442695
        %v2176 = vpow.pop %v2175
        %v2177 = vadd.f32 %v2176, 1.0
        %v2178 = vrcp.pop %v2177
        %v2179 = vmul.f32 %v2177, %v2178
        %v2180 = vsub.f32 1.0, %v2179
        %v2181 = vmul.f32 %v2178, %v2180
        %v2182 = vadd.f32 %v2178, %v2181
        %vm2183 = vweird.f32 %v2177
        %vm2184 = vweird.f32 %v2178
        %vm2185 = vmor %vm2183, %vm2184
        %v2186 = vsel %vm2185, %v2178, %v2182
        %v2187 = vand.u32 2147483647, %v2177
        %vm2188 = vcmp.eq.f32.partialorder %v2187, 8.507059e+37
        %v2189 = vand.u32 %v2177, 2147483648
        %v2190 = vor.u32 1.1754944e-38, %v2189
        %v2191 = vsel %vm2188, %v2190, %v2186
        %v2192 = vmul.f32 1.0, %v2191
        %v2193 = vxor.u32 %v2171, 2147483648
        %v2194 = vmul.f32 %v2193, 1.442695
        %v2195 = vpow.pop %v2194
        %v2196 = vadd.f32 %v2195, 1.0
        %v2197 = vrcp.pop %v2196
        %v2198 = vmul.f32 %v2196, %v2197
        %v2199 = vsub.f32 1.0, %v2198
        %v2200 = vmul.f32 %v2197, %v2199
        %v2201 = vadd.f32 %v2197, %v2200
        %vm2202 = vweird.f32 %v2196
        %vm2203 = vweird.f32 %v2197
        %vm2204 = vmor %vm2202, %vm2203
        %v2205 = vsel %vm2204, %v2197, %v2201
        %v2206 = vand.u32 2147483647, %v2196
        %vm2207 = vcmp.eq.f32.partialorder %v2206, 8.507059e+37
        %v2208 = vand.u32 %v2196, 2147483648
        %v2209 = vor.u32 1.1754944e-38, %v2208
        %v2210 = vsel %vm2207, %v2209, %v2205
        %v2211 = vmul.f32 1.0, %v2210
        %v2212 = vtanh.pop %v2172
        %v2213 = vxor.u32 %v2173, 2147483648
        %v2214 = vmul.f32 %v2213, 1.442695
        %v2215 = vpow.pop %v2214
        %v2216 = vadd.f32 %v2215, 1.0
        %v2217 = vrcp.pop %v2216
        %v2218 = vmul.f32 %v2216, %v2217
        %v2219 = vsub.f32 1.0, %v2218
        %v2220 = vmul.f32 %v2217, %v2219
        %v2221 = vadd.f32 %v2217, %v2220
        %vm2222 = vweird.f32 %v2216
        %vm2223 = vweird.f32 %v2217
        %vm2224 = vmor %vm2222, %vm2223
        %v2225 = vsel %vm2224, %v2217, %v2221
        %v2226 = vand.u32 2147483647, %v2216
        %vm2227 = vcmp.eq.f32.partialorder %v2226, 8.507059e+37
        %v2228 = vand.u32 %v2216, 2147483648
        %v2229 = vor.u32 1.1754944e-38, %v2228
        %v2230 = vsel %vm2227, %v2229, %v2225
        %v2231 = vmul.f32 1.0, %v2230
        %v2232 = vmul.f32 %v2211, %v2002
        %v2233 = vmul.f32 %v2192, %v2212
        %v2234 = vadd.f32 %v2232, %v2233
        %v2235 = vtanh.pop %v2234
        %v2236 = vmul.f32 %v2231, %v2235
        %s2237 = scalar_select %p2007, 1, 0
        %v2238 = vstv %s2237
        %vm2239 = vcmp.eq.s32.totalorder %v2238, 1
        %v2240 = vsel %vm2239, %v2234, %v2002
        %v2241 = vsel %vm2239, %v2236, %v2003
        %s2242 = scalar_lea.vmem %s382, 48 [#allocation14]
        %2243 = vst [vmem:[%s2242] sm:$0xff] %v2241
        %s2244 = sadd.s32 %s571, 7
        %p2245 = scmp.lt.s32.totalorder %s2244, 11
        %s2246 = scalar_lea.vmem %s322, 56 [#allocation7]
        %v2247 = vld [vmem:[%s2246] sm:$0xff]
        %2248 = vmatpush.msra.mxu0 %v564
        %2249 = vmatpush.msra.mxu0 %v560
        %2250 = vmatpush.msra.mxu0 %v556
        %2251 = vmatpush.msra.mxu0 %v552
        %2252 = vmatpush.msra.mxu0 %v548
        %2253 = vmatpush.msra.mxu0 %v544
        %2254 = vmatpush.msra.mxu0 %v540
        %2255 = vmatpush.msra.mxu0 %v536
        %2256 = vmatpush.msra.mxu0 %v532
        %2257 = vmatpush.msra.mxu0 %v528
        %2258 = vmatpush.msra.mxu0 %v524
        %2259 = vmatpush.msra.mxu0 %v520
        %2260 = vmatpush.msra.mxu0 %v516
        %2261 = vmatpush.msra.mxu0 %v512
        %2262 = vmatpush.msra.mxu0 %v508
        %2263 = vmatpush.msra.mxu0 %v504
        %2264 = vmatmul.f32.gmra.mxu0 %v2241
        %v2265 = vpop.f32.mrf.mxu0
        %v2266 = vadd.f32 0.0, %v2265
        %2267 = vdwg.mxu0
        %2268 = vmatpush.msra.mxu0 %v565
        %2269 = vmatpush.msra.mxu0 %v561
        %2270 = vmatpush.msra.mxu0 %v557
        %2271 = vmatpush.msra.mxu0 %v553
        %2272 = vmatpush.msra.mxu0 %v549
        %2273 = vmatpush.msra.mxu0 %v545
        %2274 = vmatpush.msra.mxu0 %v541
        %2275 = vmatpush.msra.mxu0 %v537
        %2276 = vmatpush.msra.mxu0 %v533
        %2277 = vmatpush.msra.mxu0 %v529
        %2278 = vmatpush.msra.mxu0 %v525
        %2279 = vmatpush.msra.mxu0 %v521
        %2280 = vmatpush.msra.mxu0 %v517
        %2281 = vmatpush.msra.mxu0 %v513
        %2282 = vmatpush.msra.mxu0 %v509
        %2283 = vmatpush.msra.mxu0 %v505
        %2284 = vmatmul.f32.gmra.mxu0 %v2241
        %v2285 = vpop.f32.mrf.mxu0
        %v2286 = vadd.f32 0.0, %v2285
        %2287 = vdwg.mxu0
        %2288 = vmatpush.msra.mxu0 %v566
        %2289 = vmatpush.msra.mxu0 %v562
        %2290 = vmatpush.msra.mxu0 %v558
        %2291 = vmatpush.msra.mxu0 %v554
        %2292 = vmatpush.msra.mxu0 %v550
        %2293 = vmatpush.msra.mxu0 %v546
        %2294 = vmatpush.msra.mxu0 %v542
        %2295 = vmatpush.msra.mxu0 %v538
        %2296 = vmatpush.msra.mxu0 %v534
        %2297 = vmatpush.msra.mxu0 %v530
        %2298 = vmatpush.msra.mxu0 %v526
        %2299 = vmatpush.msra.mxu0 %v522
        %2300 = vmatpush.msra.mxu0 %v518
        %2301 = vmatpush.msra.mxu0 %v514
        %2302 = vmatpush.msra.mxu0 %v510
        %2303 = vmatpush.msra.mxu0 %v506
        %2304 = vmatmul.f32.gmra.mxu0 %v2241
        %v2305 = vpop.f32.mrf.mxu0
        %v2306 = vadd.f32 0.0, %v2305
        %2307 = vdwg.mxu0
        %2308 = vmatpush.msra.mxu0 %v567
        %2309 = vmatpush.msra.mxu0 %v563
        %2310 = vmatpush.msra.mxu0 %v559
        %2311 = vmatpush.msra.mxu0 %v555
        %2312 = vmatpush.msra.mxu0 %v551
        %2313 = vmatpush.msra.mxu0 %v547
        %2314 = vmatpush.msra.mxu0 %v543
        %2315 = vmatpush.msra.mxu0 %v539
        %2316 = vmatpush.msra.mxu0 %v535
        %2317 = vmatpush.msra.mxu0 %v531
        %2318 = vmatpush.msra.mxu0 %v527
        %2319 = vmatpush.msra.mxu0 %v523
        %2320 = vmatpush.msra.mxu0 %v519
        %2321 = vmatpush.msra.mxu0 %v515
        %2322 = vmatpush.msra.mxu0 %v511
        %2323 = vmatpush.msra.mxu0 %v507
        %2324 = vmatmul.f32.gmra.mxu0 %v2241
        %v2325 = vpop.f32.mrf.mxu0
        %v2326 = vadd.f32 0.0, %v2325
        %2327 = vdwg.mxu0
        %2328 = vmatpush.msra.mxu0 %v500
        %2329 = vmatpush.msra.mxu0 %v496
        %2330 = vmatpush.msra.mxu0 %v492
        %2331 = vmatpush.msra.mxu0 %v488
        %2332 = vmatpush.msra.mxu0 %v484
        %2333 = vmatpush.msra.mxu0 %v480
        %2334 = vmatpush.msra.mxu0 %v476
        %2335 = vmatpush.msra.mxu0 %v472
        %2336 = vmatpush.msra.mxu0 %v468
        %2337 = vmatpush.msra.mxu0 %v464
        %2338 = vmatpush.msra.mxu0 %v460
        %2339 = vmatpush.msra.mxu0 %v456
        %2340 = vmatpush.msra.mxu0 %v452
        %2341 = vmatpush.msra.mxu0 %v448
        %2342 = vmatpush.msra.mxu0 %v444
        %2343 = vmatpush.msra.mxu0 %v440
        %2344 = vmatmul.f32.gmra.mxu0 %v2247
        %v2345 = vpop.f32.mrf.mxu0
        %v2346 = vadd.f32 %v2266, %v2345
        %2347 = vdwg.mxu0
        %2348 = vmatpush.msra.mxu0 %v501
        %2349 = vmatpush.msra.mxu0 %v497
        %2350 = vmatpush.msra.mxu0 %v493
        %2351 = vmatpush.msra.mxu0 %v489
        %2352 = vmatpush.msra.mxu0 %v485
        %2353 = vmatpush.msra.mxu0 %v481
        %2354 = vmatpush.msra.mxu0 %v477
        %2355 = vmatpush.msra.mxu0 %v473
        %2356 = vmatpush.msra.mxu0 %v469
        %2357 = vmatpush.msra.mxu0 %v465
        %2358 = vmatpush.msra.mxu0 %v461
        %2359 = vmatpush.msra.mxu0 %v457
        %2360 = vmatpush.msra.mxu0 %v453
        %2361 = vmatpush.msra.mxu0 %v449
        %2362 = vmatpush.msra.mxu0 %v445
        %2363 = vmatpush.msra.mxu0 %v441
        %2364 = vmatmul.f32.gmra.mxu0 %v2247
        %v2365 = vpop.f32.mrf.mxu0
        %v2366 = vadd.f32 %v2286, %v2365
        %2367 = vdwg.mxu0
        %2368 = vmatpush.msra.mxu0 %v502
        %2369 = vmatpush.msra.mxu0 %v498
        %2370 = vmatpush.msra.mxu0 %v494
        %2371 = vmatpush.msra.mxu0 %v490
        %2372 = vmatpush.msra.mxu0 %v486
        %2373 = vmatpush.msra.mxu0 %v482
        %2374 = vmatpush.msra.mxu0 %v478
        %2375 = vmatpush.msra.mxu0 %v474
        %2376 = vmatpush.msra.mxu0 %v470
        %2377 = vmatpush.msra.mxu0 %v466
        %2378 = vmatpush.msra.mxu0 %v462
        %2379 = vmatpush.msra.mxu0 %v458
        %2380 = vmatpush.msra.mxu0 %v454
        %2381 = vmatpush.msra.mxu0 %v450
        %2382 = vmatpush.msra.mxu0 %v446
        %2383 = vmatpush.msra.mxu0 %v442
        %2384 = vmatmul.f32.gmra.mxu0 %v2247
        %v2385 = vpop.f32.mrf.mxu0
        %v2386 = vadd.f32 %v2306, %v2385
        %2387 = vdwg.mxu0
        %2388 = vmatpush.msra.mxu0 %v503
        %2389 = vmatpush.msra.mxu0 %v499
        %2390 = vmatpush.msra.mxu0 %v495
        %2391 = vmatpush.msra.mxu0 %v491
        %2392 = vmatpush.msra.mxu0 %v487
        %2393 = vmatpush.msra.mxu0 %v483
        %2394 = vmatpush.msra.mxu0 %v479
        %2395 = vmatpush.msra.mxu0 %v475
        %2396 = vmatpush.msra.mxu0 %v471
        %2397 = vmatpush.msra.mxu0 %v467
        %2398 = vmatpush.msra.mxu0 %v463
        %2399 = vmatpush.msra.mxu0 %v459
        %2400 = vmatpush.msra.mxu0 %v455
        %2401 = vmatpush.msra.mxu0 %v451
        %2402 = vmatpush.msra.mxu0 %v447
        %2403 = vmatpush.msra.mxu0 %v443
        %2404 = vmatmul.f32.gmra.mxu0 %v2247
        %v2405 = vpop.f32.mrf.mxu0
        %v2406 = vadd.f32 %v2326, %v2405
        %2407 = vdwg.mxu0
        %v2408 = vadd.f32 %v2346, %v735
        %v2409 = vadd.f32 %v2366, %v736
        %v2410 = vadd.f32 %v2386, %v737
        %v2411 = vadd.f32 %v2406, %v738
        %v2412 = vxor.u32 %v2408, 2147483648
        %v2413 = vmul.f32 %v2412, 1.442695
        %v2414 = vpow.pop %v2413
        %v2415 = vadd.f32 %v2414, 1.0
        %v2416 = vrcp.pop %v2415
        %v2417 = vmul.f32 %v2415, %v2416
        %v2418 = vsub.f32 1.0, %v2417
        %v2419 = vmul.f32 %v2416, %v2418
        %v2420 = vadd.f32 %v2416, %v2419
        %vm2421 = vweird.f32 %v2415
        %vm2422 = vweird.f32 %v2416
        %vm2423 = vmor %vm2421, %vm2422
        %v2424 = vsel %vm2423, %v2416, %v2420
        %v2425 = vand.u32 2147483647, %v2415
        %vm2426 = vcmp.eq.f32.partialorder %v2425, 8.507059e+37
        %v2427 = vand.u32 %v2415, 2147483648
        %v2428 = vor.u32 1.1754944e-38, %v2427
        %v2429 = vsel %vm2426, %v2428, %v2424
        %v2430 = vmul.f32 1.0, %v2429
        %v2431 = vxor.u32 %v2409, 2147483648
        %v2432 = vmul.f32 %v2431, 1.442695
        %v2433 = vpow.pop %v2432
        %v2434 = vadd.f32 %v2433, 1.0
        %v2435 = vrcp.pop %v2434
        %v2436 = vmul.f32 %v2434, %v2435
        %v2437 = vsub.f32 1.0, %v2436
        %v2438 = vmul.f32 %v2435, %v2437
        %v2439 = vadd.f32 %v2435, %v2438
        %vm2440 = vweird.f32 %v2434
        %vm2441 = vweird.f32 %v2435
        %vm2442 = vmor %vm2440, %vm2441
        %v2443 = vsel %vm2442, %v2435, %v2439
        %v2444 = vand.u32 2147483647, %v2434
        %vm2445 = vcmp.eq.f32.partialorder %v2444, 8.507059e+37
        %v2446 = vand.u32 %v2434, 2147483648
        %v2447 = vor.u32 1.1754944e-38, %v2446
        %v2448 = vsel %vm2445, %v2447, %v2443
        %v2449 = vmul.f32 1.0, %v2448
        %v2450 = vtanh.pop %v2410
        %v2451 = vxor.u32 %v2411, 2147483648
        %v2452 = vmul.f32 %v2451, 1.442695
        %v2453 = vpow.pop %v2452
        %v2454 = vadd.f32 %v2453, 1.0
        %v2455 = vrcp.pop %v2454
        %v2456 = vmul.f32 %v2454, %v2455
        %v2457 = vsub.f32 1.0, %v2456
        %v2458 = vmul.f32 %v2455, %v2457
        %v2459 = vadd.f32 %v2455, %v2458
        %vm2460 = vweird.f32 %v2454
        %vm2461 = vweird.f32 %v2455
        %vm2462 = vmor %vm2460, %vm2461
        %v2463 = vsel %vm2462, %v2455, %v2459
        %v2464 = vand.u32 2147483647, %v2454
        %vm2465 = vcmp.eq.f32.partialorder %v2464, 8.507059e+37
        %v2466 = vand.u32 %v2454, 2147483648
        %v2467 = vor.u32 1.1754944e-38, %v2466
        %v2468 = vsel %vm2465, %v2467, %v2463
        %v2469 = vmul.f32 1.0, %v2468
        %v2470 = vmul.f32 %v2449, %v2240
        %v2471 = vmul.f32 %v2430, %v2450
        %v2472 = vadd.f32 %v2470, %v2471
        %v2473 = vtanh.pop %v2472
        %v2474 = vmul.f32 %v2469, %v2473
        %s2475 = scalar_select %p2245, 1, 0
        %v2476 = vstv %s2475
        %vm2477 = vcmp.eq.s32.totalorder %v2476, 1
        %v2478 = vsel %vm2477, %v2472, %v2240
        %v2479 = vsel %vm2477, %v2474, %v2241
        %s2480 = scalar_lea.vmem %s382, 56 [#allocation14]
        %2481 = vst [vmem:[%s2480] sm:$0xff] %v2479
        %2482 = vst [vmem:[#allocation4] sm:$0xff] %v2479
        %2483 = vst [vmem:[#allocation5] sm:$0xff] %v2478
        %p2484 = scmp.eq.s32.totalorder %s35, 1
        // Predicated region
        $region65: #{tpu_custom_call.1} parent=35 // pred_check
          %p2485 = pneg %p2484
        $region66: #{tpu_custom_call.1} parent=35 // pred_check_branch
          %2487 = sbr.rel (%p2485) target = $region68
        $region67: #{tpu_custom_call.1} parent=35 // pred_region
          %v2488 = vld [vmem:[#allocation4] sm:$0xff]
          %2489 = vst [vmem:[%s389] sm:$0xff] %v2488
          %v2490 = vld [vmem:[#allocation5] sm:$0xff]
          %2491 = vst [vmem:[%s396] sm:$0xff] %v2490
        $region68: #{tpu_custom_call.1} parent=35 // pred_fallthru
          _
        %s2492 = sand.u32 %s153, 1
        %s2493 = scalar_lea.sflag [#allocation9], %s2492
        %s2494 = sand.u32 %s153, 1
        %s2495 = smul.addr %s2494, 64
        %s2496 = scalar_lea.vmem [#allocation14], %s2495
        %s2497 = sand.u32 %s30, 1
        %s2498 = scalar_lea.sflag [#allocation16], %s2497
        %s2499 = sand.u32 %s179, 1
        %s2500 = smul.addr %s2499, 8
        %s2501 = scalar_lea.vmem [#allocation15], %s2500
        %s2502 = sand.u32 %s30, 1
        %s2503 = scalar_lea.sflag [#allocation16], %s2502
        %s2504 = sand.u32 %s205, 1
        %s2505 = smul.addr %s2504, 8
        %s2506 = scalar_lea.vmem [#allocation17], %s2505
        // Predicated region
        $region69: #{tpu_custom_call.1} parent=35 // pred_check
          %p2507 = pneg %p163
        $region70: #{tpu_custom_call.1} parent=35 // pred_check_branch
          %2509 = sbr.rel (%p2507) target = $region72
        $region71: #{tpu_custom_call.1} parent=35 // pred_region
          %s2510 = smul.u32 8, %s35
          %2512 = vsyncadd %s2493, 0
          %s2513 = smul.addr %s2510, 2
          %s2514 = sadd.s32 %s34, %s2513
          %s2515 = smul.addr %s2514, 8
          %s2516 = scalar_lea.hbm %s6, %s2515
          %s2517 = sshll.u32 %s2496, 4
          %s2518 = int_to_ptr.vmem [resolvable:$true] %s2517
          %s2519 = sshll.u32 %s2516, 4
          %s2520 = int_to_ptr.hbm [resolvable:$true] %s2519
          %2525 = dma.vmem_to_hbm [thread:$0]  %s2518, 1024, %s2520, %s2493, 128, 256, 8
        $region72: #{tpu_custom_call.1} parent=35 // pred_fallthru
          _
        // Predicated region
        $region73: #{tpu_custom_call.1} parent=35 // pred_check
          %p2526 = pneg %p189
        $region74: #{tpu_custom_call.1} parent=35 // pred_check_branch
          %2528 = sbr.rel (%p2526) target = $region76
        $region75: #{tpu_custom_call.1} parent=35 // pred_region
          %2530 = vsyncadd %s2498, 0
          %s2531 = smul.addr %s34, 8
          %s2532 = scalar_lea.hbm %s7, %s2531
          %s2534 = sshll.u32 %s2501, 4
          %s2535 = int_to_ptr.vmem [resolvable:$true] %s2534
          %s2536 = sshll.u32 %s2532, 4
          %s2537 = int_to_ptr.hbm [resolvable:$true] %s2536
          %2539 = dma.vmem_to_hbm [thread:$0]  %s2535, 128, %s2537, %s2498
        $region76: #{tpu_custom_call.1} parent=35 // pred_fallthru
          _
        // Predicated region
        $region77: #{tpu_custom_call.1} parent=35 // pred_check
          %p2540 = pneg %p215
        $region78: #{tpu_custom_call.1} parent=35 // pred_check_branch
          %2542 = sbr.rel (%p2540) target = $region80
        $region79: #{tpu_custom_call.1} parent=35 // pred_region
          %2544 = vsyncadd %s2503, 0
          %s2545 = smul.addr %s34, 8
          %s2546 = scalar_lea.hbm %s8, %s2545
          %s2548 = sshll.u32 %s2506, 4
          %s2549 = int_to_ptr.vmem [resolvable:$true] %s2548
          %s2550 = sshll.u32 %s2546, 4
          %s2551 = int_to_ptr.hbm [resolvable:$true] %s2550
          %2553 = dma.vmem_to_hbm [thread:$0]  %s2549, 128, %s2551, %s2503
        $region80: #{tpu_custom_call.1} parent=35 // pred_fallthru
          _
      $region36: #{tpu_custom_call.1} parent=5 // pred_fallthru
        _
      %p2554 = scmp.le.s32.totalorder 2, %s25
      // Predicated region
      $region81: #{tpu_custom_call.1} parent=5 // pred_check
        %p2555 = pneg %p2554
      $region82: #{tpu_custom_call.1} parent=5 // pred_check_branch
        %2557 = sbr.rel (%p2555) target = $region84
      $region83: #{tpu_custom_call.1} parent=5 // pred_region
        %s2558 = ssub.s32 %s25, 2
        // Predicated region
        $region85: #{tpu_custom_call.1} parent=83 // pred_check
          %p2559 = pneg %p169
        $region86: #{tpu_custom_call.1} parent=83 // pred_check_branch
          %2561 = sbr.rel (%p2559) target = $region88
        $region87: #{tpu_custom_call.1} parent=83 // pred_region
          %s2562 = sand.u32 %s154, 1
          %s2563 = scalar_lea.sflag [#allocation9], %s2562
          %s2564 = sand.u32 %s154, 1
          %s2565 = smul.addr %s2564, 64
          %s2566 = scalar_lea.vmem [#allocation14], %s2565
          %2568 = dma.done %s2563, 1024
        $region88: #{tpu_custom_call.1} parent=83 // pred_fallthru
          _
        // Predicated region
        $region89: #{tpu_custom_call.1} parent=83 // pred_check
          %p2569 = pneg %p195
        $region90: #{tpu_custom_call.1} parent=83 // pred_check_branch
          %2571 = sbr.rel (%p2569) target = $region92
        $region91: #{tpu_custom_call.1} parent=83 // pred_region
          %s2572 = sand.u32 %s31, 1
          %s2573 = scalar_lea.sflag [#allocation16], %s2572
          %s2574 = sand.u32 %s180, 1
          %s2575 = smul.addr %s2574, 8
          %s2576 = scalar_lea.vmem [#allocation15], %s2575
          %2578 = dma.done %s2573, 128
        $region92: #{tpu_custom_call.1} parent=83 // pred_fallthru
          _
        // Predicated region
        $region93: #{tpu_custom_call.1} parent=83 // pred_check
          %p2579 = pneg %p221
        $region94: #{tpu_custom_call.1} parent=83 // pred_check_branch
          %2581 = sbr.rel (%p2579) target = $region96
        $region95: #{tpu_custom_call.1} parent=83 // pred_region
          %s2582 = sand.u32 %s31, 1
          %s2583 = scalar_lea.sflag [#allocation16], %s2582
          %s2584 = sand.u32 %s206, 1
          %s2585 = smul.addr %s2584, 8
          %s2586 = scalar_lea.vmem [#allocation17], %s2585
          %2588 = dma.done %s2583, 128
        $region96: #{tpu_custom_call.1} parent=83 // pred_fallthru
          _
      $region84: #{tpu_custom_call.1} parent=5 // pred_fallthru
        _
    $region6: #{tpu_custom_call.1} parent=1 // loop_footer
      %s29 = sadd.s32 1, %s25
    $region7: #{tpu_custom_call.1} parent=1 // loop_footer_branch
      %24 = sbr.rel target = $region3
    $region8: #{tpu_custom_call.1} parent=1 // loop_exit
      _
    %2589 = vsyncpa [#allocation8], 1
    %s2590 = scalar_lea.sflag [#allocation8], 1
    %2591 = vsyncpa %s2590, 1
    %2592 = vsyncpa [#allocation11], 1
    %2593 = vsyncpa [#allocation9], 1
    %s2594 = scalar_lea.sflag [#allocation9], 1
    %2595 = vsyncpa %s2594, 1
    %2596 = vsyncpa [#allocation16], 1
    %s2597 = scalar_lea.sflag [#allocation16], 1
    %2598 = vsyncpa %s2597, 1
  %2599 = vsyncmov [#allocation6]
  %s2600 = vpop.sfrf %2599
  %p2601 = scmp.eq.s32.totalorder %s2600, 0
  %p2602 = pneg %p2601
  %2604 = shalt.err (%p2602)
  %s2605 = scalar_lea.sflag [#allocation6], 1
  %2606 = vsyncmov %s2605
  %s2607 = vpop.sfrf %2606
  %p2608 = scmp.eq.s32.totalorder %s2607, 0
  %p2609 = pneg %p2608
  %2611 = shalt.err (%p2609)

</llo_original>
